<compile_context>
chip_gen: v7x
topology: tpu7x:2x2x1
jax: 0.10.0
libtpu: 0.0.40
codegen_flags: <defaults>
</compile_context>

<pallas_src>
import math
import functools

import jax
import jax.numpy as jnp
from jax import lax
from jax.experimental import pallas as pl
from jax.experimental.pallas import tpu as pltpu


def _gru_kernel(
    x_ref,       # (Tt*Bb, D)  time-major input chunk for this batch block (f32)
    wx_ref,      # (D, 3H)     fused x2h weight, gate order (r | z | n), f32
    wh_ref,      # (H, 3H)     fused h2h weight, bf16 (recurrence critical path)
    bx_ref,      # (1, 3H)     x2h bias + (r/z parts of h2h bias) folded in
    bhn_ref,     # (1, H)      n-part of the h2h bias (multiplied by reset gate)
    wfc_ref,     # (H, Op)     final Linear weight, output padded to 128 lanes
    bfc_ref,     # (1, Op)
    out_ref,     # (Bb, Op)
    gx_scratch,  # (Tt*Bb, 3H) hoisted input projection for this chunk
    h_scratch,   # (Bb, H)     recurrent hidden state (persists across chunks)
    *,
    chunk,       # Tt
    batch_blk,   # Bb
    hidden,      # H
):
    c = pl.program_id(1)  # time-chunk axis (innermost, "arbitrary")

    @pl.when(c == 0)
    def _():
        h_scratch[...] = jnp.zeros_like(h_scratch)  # h0 = zeros per batch block

    # Hoisted input projection (independent of h -> off the serial critical
    # path): one MXU-shaped matmul for the whole chunk, x-side bias folded in.
    gx_scratch[...] = (
        jnp.dot(x_ref[...], wx_ref[...], preferred_element_type=jnp.float32)
        + bx_ref[...]
    )

    H = hidden
    # Hoist the (1,H)->(Bb,H) broadcast out of the unrolled loop (no CSE of
    # broadcast_in_dim, so it would otherwise be re-emitted every step).
    bhn_b = jnp.broadcast_to(bhn_ref[...], (batch_blk, H))
    wh = wh_ref[...]  # bf16 weight, loaded once for all timesteps

    # TODO(synk): a further win would keep Wh resident in the MXU weight
    # registers across steps (pltpu.matmul_push_rhs / matmul_acc_lhs /
    # matmul_pop); kept on jnp.dot here for portability across the v5e/v6e/v7x
    # MXU tile shapes — bf16 operands already cut the per-step weight pushes.
    def step(t, h):
        row = pl.multiple_of(t * batch_blk, batch_blk)
        gx = gx_scratch[pl.ds(row, batch_blk), :]                    # (Bb, 3H)
        # bf16 operands + f32 accumulation: fewer MXU passes on the critical path.
        gh = jnp.dot(h.astype(jnp.bfloat16), wh,
                     preferred_element_type=jnp.float32)             # (Bb, 3H)
        r = jax.nn.sigmoid(gx[:, :H] + gh[:, :H])
        z = jax.nn.sigmoid(gx[:, H:2 * H] + gh[:, H:2 * H])
        n = jnp.tanh(gx[:, 2 * H:] + r * (gh[:, 2 * H:] + bhn_b))
        return n + z * (h - n)

    h = lax.fori_loop(0, chunk, step, h_scratch[...], unroll=True)
    h_scratch[...] = h

    # Final linear head on the last hidden state (lane-dense padded output).
    @pl.when(c == pl.num_programs(1) - 1)
    def _():
        out_ref[...] = (
            jnp.dot(h, wfc_ref[...], preferred_element_type=jnp.float32)
            + bfc_ref[...]
        ).astype(out_ref.dtype)


def gru_model_forward(x_btd, params, *, time_chunk=None, batch_blocks=1):
    """x_btd: (batch, seq, input_dim) float32. Returns (batch, output_dim)."""
    B, T, D = x_btd.shape
    H3 = params["wx"].shape[1]
    H = H3 // 3
    O = params["wfc"].shape[1]
    O_pad = ((O + 127) // 128) * 128  # lane-dense output width

    if time_chunk is None:
        # Whole sequence per grid step: at these shapes x-chunk + gx scratch are
        # far below the scoped VMEM budget on v5e/v6e/v7x and extra grid steps
        # only add overhead with no overlap benefit. When scaling T/B/H, size
        # the chunk so gx (Tt*Bb*3H*4B) + 2x the x block fits scoped VMEM
        # (v7x has half the VMEM of v5e/v6e -> roughly half the chunk).
        time_chunk = T
    assert T % time_chunk == 0, "time_chunk must divide the sequence length"
    n_chunks = T // time_chunk

    assert B % batch_blocks == 0, "batch_blocks must divide the batch"
    B_blk = B // batch_blocks
    assert batch_blocks == 1 or B_blk % 8 == 0, "batch block must be sublane-aligned"

    # Reorder once in XLA to (batch_blocks, T*B_blk, D), time-major within each
    # block, so every (batch-block, time-chunk) is a contiguous row slab and the
    # per-step gx slice inside the kernel is contiguous.
    x3 = (
        x_btd.reshape(batch_blocks, B_blk, T, D)
        .transpose(0, 2, 1, 3)
        .reshape(batch_blocks, T * B_blk, D)
    )

    # Fold the r/z parts of the h2h bias into the hoisted projection bias; the
    # n-part must stay separate (it is multiplied by the reset gate).
    bh = params["bh"]
    bx_fold = params["bx"] + bh.at[:, 2 * H:].set(0.0)
    bhn = bh[:, 2 * H:]

    # bf16 recurrence weight (f32 accumulation in-kernel).
    wh_bf16 = params["wh"].astype(jnp.bfloat16)

    # Pad the FC head so the kernel's output store is lane-dense (128 wide).
    wfc_p = jnp.zeros((H, O_pad), jnp.float32).at[:, :O].set(params["wfc"])
    bfc_p = jnp.zeros((1, O_pad), jnp.float32).at[:, :O].set(params["bfc"])

    full = lambda shape: pl.BlockSpec(shape, lambda b, c: tuple(0 for _ in shape))

    kernel = functools.partial(
        _gru_kernel, chunk=time_chunk, batch_blk=B_blk, hidden=H
    )

    out3 = pl.pallas_call(
        kernel,
        out_shape=jax.ShapeDtypeStruct((batch_blocks, B_blk, O_pad), jnp.float32),
        grid_spec=pltpu.PrefetchScalarGridSpec(
            num_scalar_prefetch=0,
            grid=(batch_blocks, n_chunks),  # (parallel batch blocks, sequential time)
            in_specs=[
                pl.BlockSpec((None, time_chunk * B_blk, D), lambda b, c: (b, c, 0)),
                full((D, H3)),      # wx
                full((H, H3)),      # wh (bf16)
                full((1, H3)),      # bx (folded)
                full((1, H)),       # bhn
                full((H, O_pad)),   # wfc (padded)
                full((1, O_pad)),   # bfc (padded)
            ],
            out_specs=pl.BlockSpec((None, B_blk, O_pad), lambda b, c: (b, 0, 0)),
            scratch_shapes=[
                pltpu.VMEM((time_chunk * B_blk, H3), jnp.float32),  # gx chunk
                pltpu.VMEM((B_blk, H), jnp.float32),                # hidden state
            ],
        ),
        compiler_params=pltpu.CompilerParams(
            # Batch blocks are independent -> "parallel" (sharded across the
            # two TensorCores on v7x); the time recurrence is sequential.
            dimension_semantics=("parallel", "arbitrary"),
        ),
    )(x3, params["wx"], wh_bf16, bx_fold, bhn, wfc_p, bfc_p)

    return out3.reshape(B, O_pad)[:, :O]


def init_params(key, input_dim, hidden_dim, output_dim):
    """Mirrors GRUCell.reset_parameters (uniform(-std, std), std = 1/sqrt(H)).
    Weights stored as (in, out) with the three gates fused along the output
    axis in (r, z, n) order (same order as torch's chunk(3, 1))."""
    D, H, O = input_dim, hidden_dim, output_dim
    std = 1.0 / math.sqrt(H)
    ks = jax.random.split(key, 6)
    u = lambda k, shape, s: jax.random.uniform(k, shape, jnp.float32, -s, s)
    return {
        "wx": u(ks[0], (D, 3 * H), std),
        "wh": u(ks[1], (H, 3 * H), std),
        "bx": u(ks[2], (1, 3 * H), std),
        "bh": u(ks[3], (1, 3 * H), std),
        "wfc": u(ks[4], (H, O), std),
        "bfc": u(ks[5], (1, O), std),
    }


def reference_forward(x_btd, p):
    """Pure-JAX f32 reference matching the PyTorch GRUModel forward."""
    B, T, D = x_btd.shape
    H = p["wh"].shape[0]
    h = jnp.zeros((B, H), jnp.float32)
    for t in range(T):
        xt = x_btd[:, t, :]
        gx = xt @ p["wx"] + p["bx"]
        gh = h @ p["wh"] + p["bh"]
        r = jax.nn.sigmoid(gx[:, :H] + gh[:, :H])
        z = jax.nn.sigmoid(gx[:, H:2 * H] + gh[:, H:2 * H])
        n = jnp.tanh(gx[:, 2 * H:] + r * gh[:, 2 * H:])
        h = n + z * (h - n)
    return h @ p["wfc"] + p["bfc"]


if __name__ == "__main__":
    # Shapes consistent with the module spec: x is (batch, seq, input_dim),
    # input_dim=28, hidden_dim=128, output_dim=10.
    input_dim, hidden_dim, output_dim = 28, 128, 10

    key = jax.random.PRNGKey(0)
    kp, kx1, kx2 = jax.random.split(key, 3)
    params = init_params(kp, input_dim, hidden_dim, output_dim)

    # Config 1: default path (whole sequence in one grid step, one batch block).
    B1, T1 = 8, 28
    x1 = jax.random.normal(kx1, (B1, T1, input_dim), jnp.float32)
    out1 = jax.block_until_ready(gru_model_forward(x1, params))
    ref1 = jax.block_until_ready(reference_forward(x1, params))
    assert out1.shape == (B1, output_dim)
    err1 = float(jnp.max(jnp.abs(out1 - ref1)))
    # bf16 recurrence matmul (f32 accumulation) vs f32 reference -> 1e-2 tol.
    assert jnp.allclose(out1, ref1, rtol=1e-2, atol=1e-2), err1

    # Config 2: exercises the multi-chunk (n_chunks > 1) and batch-block
    # (megacore "parallel" axis) paths flagged by the correctness review.
    B2, T2 = 16, 28
    x2 = jax.random.normal(kx2, (B2, T2, input_dim), jnp.float32)
    out2 = jax.block_until_ready(
        gru_model_forward(x2, params, time_chunk=14, batch_blocks=2)
    )
    ref2 = jax.block_until_ready(reference_forward(x2, params))
    assert out2.shape == (B2, output_dim)
    err2 = float(jnp.max(jnp.abs(out2 - ref2)))
    assert jnp.allclose(out2, ref2, rtol=1e-2, atol=1e-2), err2

    print("KERNEL_OK")
</pallas_src>

<mosaic_0001>
module attributes {stable_mosaic.version = 11 : i64} {
  func.func @_gru_kernel(%arg0: i32, %arg1: i32, %arg2: memref<1x224x28xf32, #tpu.memory_space<vmem>>, %arg3: memref<28x384xf32, #tpu.memory_space<vmem>>, %arg4: memref<128x384xbf16, #tpu.memory_space<vmem>>, %arg5: memref<1x384xf32, #tpu.memory_space<vmem>>, %arg6: memref<1x128xf32, #tpu.memory_space<vmem>>, %arg7: memref<128x128xf32, #tpu.memory_space<vmem>>, %arg8: memref<1x128xf32, #tpu.memory_space<vmem>>, %arg9: memref<1x8x128xf32, #tpu.memory_space<vmem>>, %arg10: memref<224x384xf32, #tpu.memory_space<vmem>>, %arg11: memref<8x128xf32, #tpu.memory_space<vmem>>) attributes {dimension_semantics = [#tpu.dimension_semantics<parallel>, #tpu.dimension_semantics<arbitrary>], iteration_bounds = array<i64: 1, 1>, scalar_prefetch = 0 : i64, scratch_operands = 2 : i64, tpu.core_type = #tpu.core_type<tc>, window_params = [{transform_indices = @transform_0, window_bounds = array<i64: 1, 224, 28>}, {pipeline_mode = #tpu.pipeline_mode<synchronous>, transform_indices = @transform_1, window_bounds = array<i64: 28, 384>}, {pipeline_mode = #tpu.pipeline_mode<synchronous>, transform_indices = @transform_2, window_bounds = array<i64: 128, 384>}, {pipeline_mode = #tpu.pipeline_mode<synchronous>, transform_indices = @transform_3, window_bounds = array<i64: 1, 384>}, {pipeline_mode = #tpu.pipeline_mode<synchronous>, transform_indices = @transform_4, window_bounds = array<i64: 1, 128>}, {pipeline_mode = #tpu.pipeline_mode<synchronous>, transform_indices = @transform_5, window_bounds = array<i64: 128, 128>}, {pipeline_mode = #tpu.pipeline_mode<synchronous>, transform_indices = @transform_6, window_bounds = array<i64: 1, 128>}, {transform_indices = @transform_7, window_bounds = array<i64: 1, 8, 128>}]} {
    %c0_i32 = arith.constant 0 : i32
    %0 = arith.cmpi eq, %arg1, %c0_i32 : i32
    %1 = arith.extui %0 : i1 to i32
    %c0_i32_0 = arith.constant 0 : i32
    %2 = arith.cmpi ne, %1, %c0_i32_0 : i32
    scf.if %2 {
      %cst_160 = arith.constant 0.000000e+00 : f32
      %888 = vector.broadcast %cst_160 : f32 to vector<8x128xf32>
      %c0_161 = arith.constant 0 : index
      %c0_162 = arith.constant 0 : index
      %889 = vector.load %arg11[%c0_161, %c0_162] : memref<8x128xf32, #tpu.memory_space<vmem>>, vector<8x128xf32>
      tpu.vector_store %arg11[%c0_161, %c0_162], %888 {strides = array<i32>} : memref<8x128xf32, #tpu.memory_space<vmem>>, vector<8x128xf32>,
    } else {
    }
    %c0 = arith.constant 0 : index
    %c0_1 = arith.constant 0 : index
    %c0_2 = arith.constant 0 : index
    %3 = vector.load %arg2[%c0, %c0_1, %c0_2] : memref<1x224x28xf32, #tpu.memory_space<vmem>>, vector<1x224x28xf32>
    %4 = vector.shape_cast %3 : vector<1x224x28xf32> to vector<224x28xf32>
    %c0_3 = arith.constant 0 : index
    %c0_4 = arith.constant 0 : index
    %5 = vector.load %arg3[%c0_3, %c0_4] : memref<28x384xf32, #tpu.memory_space<vmem>>, vector<28x384xf32>
    %cst = arith.constant dense<0.000000e+00> : vector<224x384xf32>
    %6 = tpu.matmul %4, %5, %cst {dimension_numbers = #tpu.dot_dimension_numbers<[1], [0], [0], [1], [0, 0, 1, 1], [], []>} : vector<224x28xf32>, vector<28x384xf32>, vector<224x384xf32> -> vector<224x384xf32>
    %c0_5 = arith.constant 0 : index
    %c0_6 = arith.constant 0 : index
    %7 = vector.load %arg5[%c0_5, %c0_6] : memref<1x384xf32, #tpu.memory_space<vmem>>, vector<1x384xf32>
    %8 = vector.broadcast %7 : vector<1x384xf32> to vector<224x384xf32>
    %9 = arith.addf %6, %8 : vector<224x384xf32>
    %c0_7 = arith.constant 0 : index
    %c0_8 = arith.constant 0 : index
    %10 = vector.load %arg10[%c0_7, %c0_8] : memref<224x384xf32, #tpu.memory_space<vmem>>, vector<224x384xf32>
    tpu.vector_store %arg10[%c0_7, %c0_8], %9 {strides = array<i32>} : memref<224x384xf32, #tpu.memory_space<vmem>>, vector<224x384xf32>,
    %c0_9 = arith.constant 0 : index
    %c0_10 = arith.constant 0 : index
    %11 = vector.load %arg6[%c0_9, %c0_10] : memref<1x128xf32, #tpu.memory_space<vmem>>, vector<1x128xf32>
    %12 = vector.shape_cast %11 : vector<1x128xf32> to vector<1x128xf32>
    %13 = vector.broadcast %12 : vector<1x128xf32> to vector<8x128xf32>
    %c0_11 = arith.constant 0 : index
    %c0_12 = arith.constant 0 : index
    %14 = vector.load %arg4[%c0_11, %c0_12] : memref<128x384xbf16, #tpu.memory_space<vmem>>, vector<128x384xbf16>
    %c0_13 = arith.constant 0 : index
    %c0_14 = arith.constant 0 : index
    %15 = vector.load %arg11[%c0_13, %c0_14] : memref<8x128xf32, #tpu.memory_space<vmem>>, vector<8x128xf32>
    %c0_i32_15 = arith.constant 0 : i32
    %c8_i32 = arith.constant 8 : i32
    %16 = arith.muli %c0_i32_15, %c8_i32 : i32
    %17 = tpu.assume_multiple %16, 8 : i32
    %18 = arith.index_cast %17 : i32 to index
    %c0_16 = arith.constant 0 : index
    %19 = vector.load %arg10[%18, %c0_16] : memref<224x384xf32, #tpu.memory_space<vmem>>, vector<8x384xf32>
    %20 = arith.truncf %15 : vector<8x128xf32> to vector<8x128xbf16>
    %cst_17 = arith.constant dense<0.000000e+00> : vector<8x384xf32>
    %21 = tpu.matmul %20, %14, %cst_17 {dimension_numbers = #tpu.dot_dimension_numbers<[1], [0], [0], [1], [0, 0, 1, 1], [], []>} : vector<8x128xbf16>, vector<128x384xbf16>, vector<8x384xf32> -> vector<8x384xf32>
    %22 = vector.extract_strided_slice %19 {offsets = [0, 0], sizes = [8, 128], strides = [1, 1]} : vector<8x384xf32> to vector<8x128xf32>
    %23 = vector.extract_strided_slice %21 {offsets = [0, 0], sizes = [8, 128], strides = [1, 1]} : vector<8x384xf32> to vector<8x128xf32>
    %24 = arith.addf %22, %23 : vector<8x128xf32>
    %25 = arith.negf %24 : vector<8x128xf32>
    %26 = math.exp %25 : vector<8x128xf32>
    %cst_18 = arith.constant 1.000000e+00 : f32
    %27 = vector.broadcast %cst_18 : f32 to vector<8x128xf32>
    %28 = arith.addf %27, %26 : vector<8x128xf32>
    %29 = arith.divf %27, %28 : vector<8x128xf32>
    %30 = vector.extract_strided_slice %19 {offsets = [0, 128], sizes = [8, 128], strides = [1, 1]} : vector<8x384xf32> to vector<8x128xf32>
    %31 = vector.extract_strided_slice %21 {offsets = [0, 128], sizes = [8, 128], strides = [1, 1]} : vector<8x384xf32> to vector<8x128xf32>
    %32 = arith.addf %30, %31 : vector<8x128xf32>
    %33 = arith.negf %32 : vector<8x128xf32>
    %34 = math.exp %33 : vector<8x128xf32>
    %cst_19 = arith.constant 1.000000e+00 : f32
    %35 = vector.broadcast %cst_19 : f32 to vector<8x128xf32>
    %36 = arith.addf %35, %34 : vector<8x128xf32>
    %37 = arith.divf %35, %36 : vector<8x128xf32>
    %38 = vector.extract_strided_slice %19 {offsets = [0, 256], sizes = [8, 128], strides = [1, 1]} : vector<8x384xf32> to vector<8x128xf32>
    %39 = vector.extract_strided_slice %21 {offsets = [0, 256], sizes = [8, 128], strides = [1, 1]} : vector<8x384xf32> to vector<8x128xf32>
    %40 = arith.addf %39, %13 : vector<8x128xf32>
    %41 = arith.mulf %29, %40 : vector<8x128xf32>
    %42 = arith.addf %38, %41 : vector<8x128xf32>
    %43 = math.tanh %42 : vector<8x128xf32>
    %44 = arith.subf %15, %43 : vector<8x128xf32>
    %45 = arith.mulf %37, %44 : vector<8x128xf32>
    %46 = arith.addf %43, %45 : vector<8x128xf32>
    %c1_i32 = arith.constant 1 : i32
    %c8_i32_20 = arith.constant 8 : i32
    %47 = arith.muli %c1_i32, %c8_i32_20 : i32
    %48 = tpu.assume_multiple %47, 8 : i32
    %49 = arith.index_cast %48 : i32 to index
    %c0_21 = arith.constant 0 : index
    %50 = vector.load %arg10[%49, %c0_21] : memref<224x384xf32, #tpu.memory_space<vmem>>, vector<8x384xf32>
    %51 = arith.truncf %46 : vector<8x128xf32> to vector<8x128xbf16>
    %cst_22 = arith.constant dense<0.000000e+00> : vector<8x384xf32>
    %52 = tpu.matmul %51, %14, %cst_22 {dimension_numbers = #tpu.dot_dimension_numbers<[1], [0], [0], [1], [0, 0, 1, 1], [], []>} : vector<8x128xbf16>, vector<128x384xbf16>, vector<8x384xf32> -> vector<8x384xf32>
    %53 = vector.extract_strided_slice %50 {offsets = [0, 0], sizes = [8, 128], strides = [1, 1]} : vector<8x384xf32> to vector<8x128xf32>
    %54 = vector.extract_strided_slice %52 {offsets = [0, 0], sizes = [8, 128], strides = [1, 1]} : vector<8x384xf32> to vector<8x128xf32>
    %55 = arith.addf %53, %54 : vector<8x128xf32>
    %56 = arith.negf %55 : vector<8x128xf32>
    %57 = math.exp %56 : vector<8x128xf32>
    %cst_23 = arith.constant 1.000000e+00 : f32
    %58 = vector.broadcast %cst_23 : f32 to vector<8x128xf32>
    %59 = arith.addf %58, %57 : vector<8x128xf32>
    %60 = arith.divf %58, %59 : vector<8x128xf32>
    %61 = vector.extract_strided_slice %50 {offsets = [0, 128], sizes = [8, 128], strides = [1, 1]} : vector<8x384xf32> to vector<8x128xf32>
    %62 = vector.extract_strided_slice %52 {offsets = [0, 128], sizes = [8, 128], strides = [1, 1]} : vector<8x384xf32> to vector<8x128xf32>
    %63 = arith.addf %61, %62 : vector<8x128xf32>
    %64 = arith.negf %63 : vector<8x128xf32>
    %65 = math.exp %64 : vector<8x128xf32>
    %cst_24 = arith.constant 1.000000e+00 : f32
    %66 = vector.broadcast %cst_24 : f32 to vector<8x128xf32>
    %67 = arith.addf %66, %65 : vector<8x128xf32>
    %68 = arith.divf %66, %67 : vector<8x128xf32>
    %69 = vector.extract_strided_slice %50 {offsets = [0, 256], sizes = [8, 128], strides = [1, 1]} : vector<8x384xf32> to vector<8x128xf32>
    %70 = vector.extract_strided_slice %52 {offsets = [0, 256], sizes = [8, 128], strides = [1, 1]} : vector<8x384xf32> to vector<8x128xf32>
    %71 = arith.addf %70, %13 : vector<8x128xf32>
    %72 = arith.mulf %60, %71 : vector<8x128xf32>
    %73 = arith.addf %69, %72 : vector<8x128xf32>
    %74 = math.tanh %73 : vector<8x128xf32>
    %75 = arith.subf %46, %74 : vector<8x128xf32>
    %76 = arith.mulf %68, %75 : vector<8x128xf32>
    %77 = arith.addf %74, %76 : vector<8x128xf32>
    %c2_i32 = arith.constant 2 : i32
    %c8_i32_25 = arith.constant 8 : i32
    %78 = arith.muli %c2_i32, %c8_i32_25 : i32
    %79 = tpu.assume_multiple %78, 8 : i32
    %80 = arith.index_cast %79 : i32 to index
    %c0_26 = arith.constant 0 : index
    %81 = vector.load %arg10[%80, %c0_26] : memref<224x384xf32, #tpu.memory_space<vmem>>, vector<8x384xf32>
    %82 = arith.truncf %77 : vector<8x128xf32> to vector<8x128xbf16>
    %cst_27 = arith.constant dense<0.000000e+00> : vector<8x384xf32>
    %83 = tpu.matmul %82, %14, %cst_27 {dimension_numbers = #tpu.dot_dimension_numbers<[1], [0], [0], [1], [0, 0, 1, 1], [], []>} : vector<8x128xbf16>, vector<128x384xbf16>, vector<8x384xf32> -> vector<8x384xf32>
    %84 = vector.extract_strided_slice %81 {offsets = [0, 0], sizes = [8, 128], strides = [1, 1]} : vector<8x384xf32> to vector<8x128xf32>
    %85 = vector.extract_strided_slice %83 {offsets = [0, 0], sizes = [8, 128], strides = [1, 1]} : vector<8x384xf32> to vector<8x128xf32>
    %86 = arith.addf %84, %85 : vector<8x128xf32>
    %87 = arith.negf %86 : vector<8x128xf32>
    %88 = math.exp %87 : vector<8x128xf32>
    %cst_28 = arith.constant 1.000000e+00 : f32
    %89 = vector.broadcast %cst_28 : f32 to vector<8x128xf32>
    %90 = arith.addf %89, %88 : vector<8x128xf32>
    %91 = arith.divf %89, %90 : vector<8x128xf32>
    %92 = vector.extract_strided_slice %81 {offsets = [0, 128], sizes = [8, 128], strides = [1, 1]} : vector<8x384xf32> to vector<8x128xf32>
    %93 = vector.extract_strided_slice %83 {offsets = [0, 128], sizes = [8, 128], strides = [1, 1]} : vector<8x384xf32> to vector<8x128xf32>
    %94 = arith.addf %92, %93 : vector<8x128xf32>
    %95 = arith.negf %94 : vector<8x128xf32>
    %96 = math.exp %95 : vector<8x128xf32>
    %cst_29 = arith.constant 1.000000e+00 : f32
    %97 = vector.broadcast %cst_29 : f32 to vector<8x128xf32>
    %98 = arith.addf %97, %96 : vector<8x128xf32>
    %99 = arith.divf %97, %98 : vector<8x128xf32>
    %100 = vector.extract_strided_slice %81 {offsets = [0, 256], sizes = [8, 128], strides = [1, 1]} : vector<8x384xf32> to vector<8x128xf32>
    %101 = vector.extract_strided_slice %83 {offsets = [0, 256], sizes = [8, 128], strides = [1, 1]} : vector<8x384xf32> to vector<8x128xf32>
    %102 = arith.addf %101, %13 : vector<8x128xf32>
    %103 = arith.mulf %91, %102 : vector<8x128xf32>
    %104 = arith.addf %100, %103 : vector<8x128xf32>
    %105 = math.tanh %104 : vector<8x128xf32>
    %106 = arith.subf %77, %105 : vector<8x128xf32>
    %107 = arith.mulf %99, %106 : vector<8x128xf32>
    %108 = arith.addf %105, %107 : vector<8x128xf32>
    %c3_i32 = arith.constant 3 : i32
    %c8_i32_30 = arith.constant 8 : i32
    %109 = arith.muli %c3_i32, %c8_i32_30 : i32
    %110 = tpu.assume_multiple %109, 8 : i32
    %111 = arith.index_cast %110 : i32 to index
    %c0_31 = arith.constant 0 : index
    %112 = vector.load %arg10[%111, %c0_31] : memref<224x384xf32, #tpu.memory_space<vmem>>, vector<8x384xf32>
    %113 = arith.truncf %108 : vector<8x128xf32> to vector<8x128xbf16>
    %cst_32 = arith.constant dense<0.000000e+00> : vector<8x384xf32>
    %114 = tpu.matmul %113, %14, %cst_32 {dimension_numbers = #tpu.dot_dimension_numbers<[1], [0], [0], [1], [0, 0, 1, 1], [], []>} : vector<8x128xbf16>, vector<128x384xbf16>, vector<8x384xf32> -> vector<8x384xf32>
    %115 = vector.extract_strided_slice %112 {offsets = [0, 0], sizes = [8, 128], strides = [1, 1]} : vector<8x384xf32> to vector<8x128xf32>
    %116 = vector.extract_strided_slice %114 {offsets = [0, 0], sizes = [8, 128], strides = [1, 1]} : vector<8x384xf32> to vector<8x128xf32>
    %117 = arith.addf %115, %116 : vector<8x128xf32>
    %118 = arith.negf %117 : vector<8x128xf32>
    %119 = math.exp %118 : vector<8x128xf32>
    %cst_33 = arith.constant 1.000000e+00 : f32
    %120 = vector.broadcast %cst_33 : f32 to vector<8x128xf32>
    %121 = arith.addf %120, %119 : vector<8x128xf32>
    %122 = arith.divf %120, %121 : vector<8x128xf32>
    %123 = vector.extract_strided_slice %112 {offsets = [0, 128], sizes = [8, 128], strides = [1, 1]} : vector<8x384xf32> to vector<8x128xf32>
    %124 = vector.extract_strided_slice %114 {offsets = [0, 128], sizes = [8, 128], strides = [1, 1]} : vector<8x384xf32> to vector<8x128xf32>
    %125 = arith.addf %123, %124 : vector<8x128xf32>
    %126 = arith.negf %125 : vector<8x128xf32>
    %127 = math.exp %126 : vector<8x128xf32>
    %cst_34 = arith.constant 1.000000e+00 : f32
    %128 = vector.broadcast %cst_34 : f32 to vector<8x128xf32>
    %129 = arith.addf %128, %127 : vector<8x128xf32>
    %130 = arith.divf %128, %129 : vector<8x128xf32>
    %131 = vector.extract_strided_slice %112 {offsets = [0, 256], sizes = [8, 128], strides = [1, 1]} : vector<8x384xf32> to vector<8x128xf32>
    %132 = vector.extract_strided_slice %114 {offsets = [0, 256], sizes = [8, 128], strides = [1, 1]} : vector<8x384xf32> to vector<8x128xf32>
    %133 = arith.addf %132, %13 : vector<8x128xf32>
    %134 = arith.mulf %122, %133 : vector<8x128xf32>
    %135 = arith.addf %131, %134 : vector<8x128xf32>
    %136 = math.tanh %135 : vector<8x128xf32>
    %137 = arith.subf %108, %136 : vector<8x128xf32>
    %138 = arith.mulf %130, %137 : vector<8x128xf32>
    %139 = arith.addf %136, %138 : vector<8x128xf32>
    %c4_i32 = arith.constant 4 : i32
    %c8_i32_35 = arith.constant 8 : i32
    %140 = arith.muli %c4_i32, %c8_i32_35 : i32
    %141 = tpu.assume_multiple %140, 8 : i32
    %142 = arith.index_cast %141 : i32 to index
    %c0_36 = arith.constant 0 : index
    %143 = vector.load %arg10[%142, %c0_36] : memref<224x384xf32, #tpu.memory_space<vmem>>, vector<8x384xf32>
    %144 = arith.truncf %139 : vector<8x128xf32> to vector<8x128xbf16>
    %cst_37 = arith.constant dense<0.000000e+00> : vector<8x384xf32>
    %145 = tpu.matmul %144, %14, %cst_37 {dimension_numbers = #tpu.dot_dimension_numbers<[1], [0], [0], [1], [0, 0, 1, 1], [], []>} : vector<8x128xbf16>, vector<128x384xbf16>, vector<8x384xf32> -> vector<8x384xf32>
    %146 = vector.extract_strided_slice %143 {offsets = [0, 0], sizes = [8, 128], strides = [1, 1]} : vector<8x384xf32> to vector<8x128xf32>
    %147 = vector.extract_strided_slice %145 {offsets = [0, 0], sizes = [8, 128], strides = [1, 1]} : vector<8x384xf32> to vector<8x128xf32>
    %148 = arith.addf %146, %147 : vector<8x128xf32>
    %149 = arith.negf %148 : vector<8x128xf32>
    %150 = math.exp %149 : vector<8x128xf32>
    %cst_38 = arith.constant 1.000000e+00 : f32
    %151 = vector.broadcast %cst_38 : f32 to vector<8x128xf32>
    %152 = arith.addf %151, %150 : vector<8x128xf32>
    %153 = arith.divf %151, %152 : vector<8x128xf32>
    %154 = vector.extract_strided_slice %143 {offsets = [0, 128], sizes = [8, 128], strides = [1, 1]} : vector<8x384xf32> to vector<8x128xf32>
    %155 = vector.extract_strided_slice %145 {offsets = [0, 128], sizes = [8, 128], strides = [1, 1]} : vector<8x384xf32> to vector<8x128xf32>
    %156 = arith.addf %154, %155 : vector<8x128xf32>
    %157 = arith.negf %156 : vector<8x128xf32>
    %158 = math.exp %157 : vector<8x128xf32>
    %cst_39 = arith.constant 1.000000e+00 : f32
    %159 = vector.broadcast %cst_39 : f32 to vector<8x128xf32>
    %160 = arith.addf %159, %158 : vector<8x128xf32>
    %161 = arith.divf %159, %160 : vector<8x128xf32>
    %162 = vector.extract_strided_slice %143 {offsets = [0, 256], sizes = [8, 128], strides = [1, 1]} : vector<8x384xf32> to vector<8x128xf32>
    %163 = vector.extract_strided_slice %145 {offsets = [0, 256], sizes = [8, 128], strides = [1, 1]} : vector<8x384xf32> to vector<8x128xf32>
    %164 = arith.addf %163, %13 : vector<8x128xf32>
    %165 = arith.mulf %153, %164 : vector<8x128xf32>
    %166 = arith.addf %162, %165 : vector<8x128xf32>
    %167 = math.tanh %166 : vector<8x128xf32>
    %168 = arith.subf %139, %167 : vector<8x128xf32>
    %169 = arith.mulf %161, %168 : vector<8x128xf32>
    %170 = arith.addf %167, %169 : vector<8x128xf32>
    %c5_i32 = arith.constant 5 : i32
    %c8_i32_40 = arith.constant 8 : i32
    %171 = arith.muli %c5_i32, %c8_i32_40 : i32
    %172 = tpu.assume_multiple %171, 8 : i32
    %173 = arith.index_cast %172 : i32 to index
    %c0_41 = arith.constant 0 : index
    %174 = vector.load %arg10[%173, %c0_41] : memref<224x384xf32, #tpu.memory_space<vmem>>, vector<8x384xf32>
    %175 = arith.truncf %170 : vector<8x128xf32> to vector<8x128xbf16>
    %cst_42 = arith.constant dense<0.000000e+00> : vector<8x384xf32>
    %176 = tpu.matmul %175, %14, %cst_42 {dimension_numbers = #tpu.dot_dimension_numbers<[1], [0], [0], [1], [0, 0, 1, 1], [], []>} : vector<8x128xbf16>, vector<128x384xbf16>, vector<8x384xf32> -> vector<8x384xf32>
    %177 = vector.extract_strided_slice %174 {offsets = [0, 0], sizes = [8, 128], strides = [1, 1]} : vector<8x384xf32> to vector<8x128xf32>
    %178 = vector.extract_strided_slice %176 {offsets = [0, 0], sizes = [8, 128], strides = [1, 1]} : vector<8x384xf32> to vector<8x128xf32>
    %179 = arith.addf %177, %178 : vector<8x128xf32>
    %180 = arith.negf %179 : vector<8x128xf32>
    %181 = math.exp %180 : vector<8x128xf32>
    %cst_43 = arith.constant 1.000000e+00 : f32
    %182 = vector.broadcast %cst_43 : f32 to vector<8x128xf32>
    %183 = arith.addf %182, %181 : vector<8x128xf32>
    %184 = arith.divf %182, %183 : vector<8x128xf32>
    %185 = vector.extract_strided_slice %174 {offsets = [0, 128], sizes = [8, 128], strides = [1, 1]} : vector<8x384xf32> to vector<8x128xf32>
    %186 = vector.extract_strided_slice %176 {offsets = [0, 128], sizes = [8, 128], strides = [1, 1]} : vector<8x384xf32> to vector<8x128xf32>
    %187 = arith.addf %185, %186 : vector<8x128xf32>
    %188 = arith.negf %187 : vector<8x128xf32>
    %189 = math.exp %188 : vector<8x128xf32>
    %cst_44 = arith.constant 1.000000e+00 : f32
    %190 = vector.broadcast %cst_44 : f32 to vector<8x128xf32>
    %191 = arith.addf %190, %189 : vector<8x128xf32>
    %192 = arith.divf %190, %191 : vector<8x128xf32>
    %193 = vector.extract_strided_slice %174 {offsets = [0, 256], sizes = [8, 128], strides = [1, 1]} : vector<8x384xf32> to vector<8x128xf32>
    %194 = vector.extract_strided_slice %176 {offsets = [0, 256], sizes = [8, 128], strides = [1, 1]} : vector<8x384xf32> to vector<8x128xf32>
    %195 = arith.addf %194, %13 : vector<8x128xf32>
    %196 = arith.mulf %184, %195 : vector<8x128xf32>
    %197 = arith.addf %193, %196 : vector<8x128xf32>
    %198 = math.tanh %197 : vector<8x128xf32>
    %199 = arith.subf %170, %198 : vector<8x128xf32>
    %200 = arith.mulf %192, %199 : vector<8x128xf32>
    %201 = arith.addf %198, %200 : vector<8x128xf32>
    %c6_i32 = arith.constant 6 : i32
    %c8_i32_45 = arith.constant 8 : i32
    %202 = arith.muli %c6_i32, %c8_i32_45 : i32
    %203 = tpu.assume_multiple %202, 8 : i32
    %204 = arith.index_cast %203 : i32 to index
    %c0_46 = arith.constant 0 : index
    %205 = vector.load %arg10[%204, %c0_46] : memref<224x384xf32, #tpu.memory_space<vmem>>, vector<8x384xf32>
    %206 = arith.truncf %201 : vector<8x128xf32> to vector<8x128xbf16>
    %cst_47 = arith.constant dense<0.000000e+00> : vector<8x384xf32>
    %207 = tpu.matmul %206, %14, %cst_47 {dimension_numbers = #tpu.dot_dimension_numbers<[1], [0], [0], [1], [0, 0, 1, 1], [], []>} : vector<8x128xbf16>, vector<128x384xbf16>, vector<8x384xf32> -> vector<8x384xf32>
    %208 = vector.extract_strided_slice %205 {offsets = [0, 0], sizes = [8, 128], strides = [1, 1]} : vector<8x384xf32> to vector<8x128xf32>
    %209 = vector.extract_strided_slice %207 {offsets = [0, 0], sizes = [8, 128], strides = [1, 1]} : vector<8x384xf32> to vector<8x128xf32>
    %210 = arith.addf %208, %209 : vector<8x128xf32>
    %211 = arith.negf %210 : vector<8x128xf32>
    %212 = math.exp %211 : vector<8x128xf32>
    %cst_48 = arith.constant 1.000000e+00 : f32
    %213 = vector.broadcast %cst_48 : f32 to vector<8x128xf32>
    %214 = arith.addf %213, %212 : vector<8x128xf32>
    %215 = arith.divf %213, %214 : vector<8x128xf32>
    %216 = vector.extract_strided_slice %205 {offsets = [0, 128], sizes = [8, 128], strides = [1, 1]} : vector<8x384xf32> to vector<8x128xf32>
    %217 = vector.extract_strided_slice %207 {offsets = [0, 128], sizes = [8, 128], strides = [1, 1]} : vector<8x384xf32> to vector<8x128xf32>
    %218 = arith.addf %216, %217 : vector<8x128xf32>
    %219 = arith.negf %218 : vector<8x128xf32>
    %220 = math.exp %219 : vector<8x128xf32>
    %cst_49 = arith.constant 1.000000e+00 : f32
    %221 = vector.broadcast %cst_49 : f32 to vector<8x128xf32>
    %222 = arith.addf %221, %220 : vector<8x128xf32>
    %223 = arith.divf %221, %222 : vector<8x128xf32>
    %224 = vector.extract_strided_slice %205 {offsets = [0, 256], sizes = [8, 128], strides = [1, 1]} : vector<8x384xf32> to vector<8x128xf32>
    %225 = vector.extract_strided_slice %207 {offsets = [0, 256], sizes = [8, 128], strides = [1, 1]} : vector<8x384xf32> to vector<8x128xf32>
    %226 = arith.addf %225, %13 : vector<8x128xf32>
    %227 = arith.mulf %215, %226 : vector<8x128xf32>
    %228 = arith.addf %224, %227 : vector<8x128xf32>
    %229 = math.tanh %228 : vector<8x128xf32>
    %230 = arith.subf %201, %229 : vector<8x128xf32>
    %231 = arith.mulf %223, %230 : vector<8x128xf32>
    %232 = arith.addf %229, %231 : vector<8x128xf32>
    %c7_i32 = arith.constant 7 : i32
    %c8_i32_50 = arith.constant 8 : i32
    %233 = arith.muli %c7_i32, %c8_i32_50 : i32
    %234 = tpu.assume_multiple %233, 8 : i32
    %235 = arith.index_cast %234 : i32 to index
    %c0_51 = arith.constant 0 : index
    %236 = vector.load %arg10[%235, %c0_51] : memref<224x384xf32, #tpu.memory_space<vmem>>, vector<8x384xf32>
    %237 = arith.truncf %232 : vector<8x128xf32> to vector<8x128xbf16>
    %cst_52 = arith.constant dense<0.000000e+00> : vector<8x384xf32>
    %238 = tpu.matmul %237, %14, %cst_52 {dimension_numbers = #tpu.dot_dimension_numbers<[1], [0], [0], [1], [0, 0, 1, 1], [], []>} : vector<8x128xbf16>, vector<128x384xbf16>, vector<8x384xf32> -> vector<8x384xf32>
    %239 = vector.extract_strided_slice %236 {offsets = [0, 0], sizes = [8, 128], strides = [1, 1]} : vector<8x384xf32> to vector<8x128xf32>
    %240 = vector.extract_strided_slice %238 {offsets = [0, 0], sizes = [8, 128], strides = [1, 1]} : vector<8x384xf32> to vector<8x128xf32>
    %241 = arith.addf %239, %240 : vector<8x128xf32>
    %242 = arith.negf %241 : vector<8x128xf32>
    %243 = math.exp %242 : vector<8x128xf32>
    %cst_53 = arith.constant 1.000000e+00 : f32
    %244 = vector.broadcast %cst_53 : f32 to vector<8x128xf32>
    %245 = arith.addf %244, %243 : vector<8x128xf32>
    %246 = arith.divf %244, %245 : vector<8x128xf32>
    %247 = vector.extract_strided_slice %236 {offsets = [0, 128], sizes = [8, 128], strides = [1, 1]} : vector<8x384xf32> to vector<8x128xf32>
    %248 = vector.extract_strided_slice %238 {offsets = [0, 128], sizes = [8, 128], strides = [1, 1]} : vector<8x384xf32> to vector<8x128xf32>
    %249 = arith.addf %247, %248 : vector<8x128xf32>
    %250 = arith.negf %249 : vector<8x128xf32>
    %251 = math.exp %250 : vector<8x128xf32>
    %cst_54 = arith.constant 1.000000e+00 : f32
    %252 = vector.broadcast %cst_54 : f32 to vector<8x128xf32>
    %253 = arith.addf %252, %251 : vector<8x128xf32>
    %254 = arith.divf %252, %253 : vector<8x128xf32>
    %255 = vector.extract_strided_slice %236 {offsets = [0, 256], sizes = [8, 128], strides = [1, 1]} : vector<8x384xf32> to vector<8x128xf32>
    %256 = vector.extract_strided_slice %238 {offsets = [0, 256], sizes = [8, 128], strides = [1, 1]} : vector<8x384xf32> to vector<8x128xf32>
    %257 = arith.addf %256, %13 : vector<8x128xf32>
    %258 = arith.mulf %246, %257 : vector<8x128xf32>
    %259 = arith.addf %255, %258 : vector<8x128xf32>
    %260 = math.tanh %259 : vector<8x128xf32>
    %261 = arith.subf %232, %260 : vector<8x128xf32>
    %262 = arith.mulf %254, %261 : vector<8x128xf32>
    %263 = arith.addf %260, %262 : vector<8x128xf32>
    %c8_i32_55 = arith.constant 8 : i32
    %c8_i32_56 = arith.constant 8 : i32
    %264 = arith.muli %c8_i32_55, %c8_i32_56 : i32
    %265 = tpu.assume_multiple %264, 8 : i32
    %266 = arith.index_cast %265 : i32 to index
    %c0_57 = arith.constant 0 : index
    %267 = vector.load %arg10[%266, %c0_57] : memref<224x384xf32, #tpu.memory_space<vmem>>, vector<8x384xf32>
    %268 = arith.truncf %263 : vector<8x128xf32> to vector<8x128xbf16>
    %cst_58 = arith.constant dense<0.000000e+00> : vector<8x384xf32>
    %269 = tpu.matmul %268, %14, %cst_58 {dimension_numbers = #tpu.dot_dimension_numbers<[1], [0], [0], [1], [0, 0, 1, 1], [], []>} : vector<8x128xbf16>, vector<128x384xbf16>, vector<8x384xf32> -> vector<8x384xf32>
    %270 = vector.extract_strided_slice %267 {offsets = [0, 0], sizes = [8, 128], strides = [1, 1]} : vector<8x384xf32> to vector<8x128xf32>
    %271 = vector.extract_strided_slice %269 {offsets = [0, 0], sizes = [8, 128], strides = [1, 1]} : vector<8x384xf32> to vector<8x128xf32>
    %272 = arith.addf %270, %271 : vector<8x128xf32>
    %273 = arith.negf %272 : vector<8x128xf32>
    %274 = math.exp %273 : vector<8x128xf32>
    %cst_59 = arith.constant 1.000000e+00 : f32
    %275 = vector.broadcast %cst_59 : f32 to vector<8x128xf32>
    %276 = arith.addf %275, %274 : vector<8x128xf32>
    %277 = arith.divf %275, %276 : vector<8x128xf32>
    %278 = vector.extract_strided_slice %267 {offsets = [0, 128], sizes = [8, 128], strides = [1, 1]} : vector<8x384xf32> to vector<8x128xf32>
    %279 = vector.extract_strided_slice %269 {offsets = [0, 128], sizes = [8, 128], strides = [1, 1]} : vector<8x384xf32> to vector<8x128xf32>
    %280 = arith.addf %278, %279 : vector<8x128xf32>
    %281 = arith.negf %280 : vector<8x128xf32>
    %282 = math.exp %281 : vector<8x128xf32>
    %cst_60 = arith.constant 1.000000e+00 : f32
    %283 = vector.broadcast %cst_60 : f32 to vector<8x128xf32>
    %284 = arith.addf %283, %282 : vector<8x128xf32>
    %285 = arith.divf %283, %284 : vector<8x128xf32>
    %286 = vector.extract_strided_slice %267 {offsets = [0, 256], sizes = [8, 128], strides = [1, 1]} : vector<8x384xf32> to vector<8x128xf32>
    %287 = vector.extract_strided_slice %269 {offsets = [0, 256], sizes = [8, 128], strides = [1, 1]} : vector<8x384xf32> to vector<8x128xf32>
    %288 = arith.addf %287, %13 : vector<8x128xf32>
    %289 = arith.mulf %277, %288 : vector<8x128xf32>
    %290 = arith.addf %286, %289 : vector<8x128xf32>
    %291 = math.tanh %290 : vector<8x128xf32>
    %292 = arith.subf %263, %291 : vector<8x128xf32>
    %293 = arith.mulf %285, %292 : vector<8x128xf32>
    %294 = arith.addf %291, %293 : vector<8x128xf32>
    %c9_i32 = arith.constant 9 : i32
    %c8_i32_61 = arith.constant 8 : i32
    %295 = arith.muli %c9_i32, %c8_i32_61 : i32
    %296 = tpu.assume_multiple %295, 8 : i32
    %297 = arith.index_cast %296 : i32 to index
    %c0_62 = arith.constant 0 : index
    %298 = vector.load %arg10[%297, %c0_62] : memref<224x384xf32, #tpu.memory_space<vmem>>, vector<8x384xf32>
    %299 = arith.truncf %294 : vector<8x128xf32> to vector<8x128xbf16>
    %cst_63 = arith.constant dense<0.000000e+00> : vector<8x384xf32>
    %300 = tpu.matmul %299, %14, %cst_63 {dimension_numbers = #tpu.dot_dimension_numbers<[1], [0], [0], [1], [0, 0, 1, 1], [], []>} : vector<8x128xbf16>, vector<128x384xbf16>, vector<8x384xf32> -> vector<8x384xf32>
    %301 = vector.extract_strided_slice %298 {offsets = [0, 0], sizes = [8, 128], strides = [1, 1]} : vector<8x384xf32> to vector<8x128xf32>
    %302 = vector.extract_strided_slice %300 {offsets = [0, 0], sizes = [8, 128], strides = [1, 1]} : vector<8x384xf32> to vector<8x128xf32>
    %303 = arith.addf %301, %302 : vector<8x128xf32>
    %304 = arith.negf %303 : vector<8x128xf32>
    %305 = math.exp %304 : vector<8x128xf32>
    %cst_64 = arith.constant 1.000000e+00 : f32
    %306 = vector.broadcast %cst_64 : f32 to vector<8x128xf32>
    %307 = arith.addf %306, %305 : vector<8x128xf32>
    %308 = arith.divf %306, %307 : vector<8x128xf32>
    %309 = vector.extract_strided_slice %298 {offsets = [0, 128], sizes = [8, 128], strides = [1, 1]} : vector<8x384xf32> to vector<8x128xf32>
    %310 = vector.extract_strided_slice %300 {offsets = [0, 128], sizes = [8, 128], strides = [1, 1]} : vector<8x384xf32> to vector<8x128xf32>
    %311 = arith.addf %309, %310 : vector<8x128xf32>
    %312 = arith.negf %311 : vector<8x128xf32>
    %313 = math.exp %312 : vector<8x128xf32>
    %cst_65 = arith.constant 1.000000e+00 : f32
    %314 = vector.broadcast %cst_65 : f32 to vector<8x128xf32>
    %315 = arith.addf %314, %313 : vector<8x128xf32>
    %316 = arith.divf %314, %315 : vector<8x128xf32>
    %317 = vector.extract_strided_slice %298 {offsets = [0, 256], sizes = [8, 128], strides = [1, 1]} : vector<8x384xf32> to vector<8x128xf32>
    %318 = vector.extract_strided_slice %300 {offsets = [0, 256], sizes = [8, 128], strides = [1, 1]} : vector<8x384xf32> to vector<8x128xf32>
    %319 = arith.addf %318, %13 : vector<8x128xf32>
    %320 = arith.mulf %308, %319 : vector<8x128xf32>
    %321 = arith.addf %317, %320 : vector<8x128xf32>
    %322 = math.tanh %321 : vector<8x128xf32>
    %323 = arith.subf %294, %322 : vector<8x128xf32>
    %324 = arith.mulf %316, %323 : vector<8x128xf32>
    %325 = arith.addf %322, %324 : vector<8x128xf32>
    %c10_i32 = arith.constant 10 : i32
    %c8_i32_66 = arith.constant 8 : i32
    %326 = arith.muli %c10_i32, %c8_i32_66 : i32
    %327 = tpu.assume_multiple %326, 8 : i32
    %328 = arith.index_cast %327 : i32 to index
    %c0_67 = arith.constant 0 : index
    %329 = vector.load %arg10[%328, %c0_67] : memref<224x384xf32, #tpu.memory_space<vmem>>, vector<8x384xf32>
    %330 = arith.truncf %325 : vector<8x128xf32> to vector<8x128xbf16>
    %cst_68 = arith.constant dense<0.000000e+00> : vector<8x384xf32>
    %331 = tpu.matmul %330, %14, %cst_68 {dimension_numbers = #tpu.dot_dimension_numbers<[1], [0], [0], [1], [0, 0, 1, 1], [], []>} : vector<8x128xbf16>, vector<128x384xbf16>, vector<8x384xf32> -> vector<8x384xf32>
    %332 = vector.extract_strided_slice %329 {offsets = [0, 0], sizes = [8, 128], strides = [1, 1]} : vector<8x384xf32> to vector<8x128xf32>
    %333 = vector.extract_strided_slice %331 {offsets = [0, 0], sizes = [8, 128], strides = [1, 1]} : vector<8x384xf32> to vector<8x128xf32>
    %334 = arith.addf %332, %333 : vector<8x128xf32>
    %335 = arith.negf %334 : vector<8x128xf32>
    %336 = math.exp %335 : vector<8x128xf32>
    %cst_69 = arith.constant 1.000000e+00 : f32
    %337 = vector.broadcast %cst_69 : f32 to vector<8x128xf32>
    %338 = arith.addf %337, %336 : vector<8x128xf32>
    %339 = arith.divf %337, %338 : vector<8x128xf32>
    %340 = vector.extract_strided_slice %329 {offsets = [0, 128], sizes = [8, 128], strides = [1, 1]} : vector<8x384xf32> to vector<8x128xf32>
    %341 = vector.extract_strided_slice %331 {offsets = [0, 128], sizes = [8, 128], strides = [1, 1]} : vector<8x384xf32> to vector<8x128xf32>
    %342 = arith.addf %340, %341 : vector<8x128xf32>
    %343 = arith.negf %342 : vector<8x128xf32>
    %344 = math.exp %343 : vector<8x128xf32>
    %cst_70 = arith.constant 1.000000e+00 : f32
    %345 = vector.broadcast %cst_70 : f32 to vector<8x128xf32>
    %346 = arith.addf %345, %344 : vector<8x128xf32>
    %347 = arith.divf %345, %346 : vector<8x128xf32>
    %348 = vector.extract_strided_slice %329 {offsets = [0, 256], sizes = [8, 128], strides = [1, 1]} : vector<8x384xf32> to vector<8x128xf32>
    %349 = vector.extract_strided_slice %331 {offsets = [0, 256], sizes = [8, 128], strides = [1, 1]} : vector<8x384xf32> to vector<8x128xf32>
    %350 = arith.addf %349, %13 : vector<8x128xf32>
    %351 = arith.mulf %339, %350 : vector<8x128xf32>
    %352 = arith.addf %348, %351 : vector<8x128xf32>
    %353 = math.tanh %352 : vector<8x128xf32>
    %354 = arith.subf %325, %353 : vector<8x128xf32>
    %355 = arith.mulf %347, %354 : vector<8x128xf32>
    %356 = arith.addf %353, %355 : vector<8x128xf32>
    %c11_i32 = arith.constant 11 : i32
    %c8_i32_71 = arith.constant 8 : i32
    %357 = arith.muli %c11_i32, %c8_i32_71 : i32
    %358 = tpu.assume_multiple %357, 8 : i32
    %359 = arith.index_cast %358 : i32 to index
    %c0_72 = arith.constant 0 : index
    %360 = vector.load %arg10[%359, %c0_72] : memref<224x384xf32, #tpu.memory_space<vmem>>, vector<8x384xf32>
    %361 = arith.truncf %356 : vector<8x128xf32> to vector<8x128xbf16>
    %cst_73 = arith.constant dense<0.000000e+00> : vector<8x384xf32>
    %362 = tpu.matmul %361, %14, %cst_73 {dimension_numbers = #tpu.dot_dimension_numbers<[1], [0], [0], [1], [0, 0, 1, 1], [], []>} : vector<8x128xbf16>, vector<128x384xbf16>, vector<8x384xf32> -> vector<8x384xf32>
    %363 = vector.extract_strided_slice %360 {offsets = [0, 0], sizes = [8, 128], strides = [1, 1]} : vector<8x384xf32> to vector<8x128xf32>
    %364 = vector.extract_strided_slice %362 {offsets = [0, 0], sizes = [8, 128], strides = [1, 1]} : vector<8x384xf32> to vector<8x128xf32>
    %365 = arith.addf %363, %364 : vector<8x128xf32>
    %366 = arith.negf %365 : vector<8x128xf32>
    %367 = math.exp %366 : vector<8x128xf32>
    %cst_74 = arith.constant 1.000000e+00 : f32
    %368 = vector.broadcast %cst_74 : f32 to vector<8x128xf32>
    %369 = arith.addf %368, %367 : vector<8x128xf32>
    %370 = arith.divf %368, %369 : vector<8x128xf32>
    %371 = vector.extract_strided_slice %360 {offsets = [0, 128], sizes = [8, 128], strides = [1, 1]} : vector<8x384xf32> to vector<8x128xf32>
    %372 = vector.extract_strided_slice %362 {offsets = [0, 128], sizes = [8, 128], strides = [1, 1]} : vector<8x384xf32> to vector<8x128xf32>
    %373 = arith.addf %371, %372 : vector<8x128xf32>
    %374 = arith.negf %373 : vector<8x128xf32>
    %375 = math.exp %374 : vector<8x128xf32>
    %cst_75 = arith.constant 1.000000e+00 : f32
    %376 = vector.broadcast %cst_75 : f32 to vector<8x128xf32>
    %377 = arith.addf %376, %375 : vector<8x128xf32>
    %378 = arith.divf %376, %377 : vector<8x128xf32>
    %379 = vector.extract_strided_slice %360 {offsets = [0, 256], sizes = [8, 128], strides = [1, 1]} : vector<8x384xf32> to vector<8x128xf32>
    %380 = vector.extract_strided_slice %362 {offsets = [0, 256], sizes = [8, 128], strides = [1, 1]} : vector<8x384xf32> to vector<8x128xf32>
    %381 = arith.addf %380, %13 : vector<8x128xf32>
    %382 = arith.mulf %370, %381 : vector<8x128xf32>
    %383 = arith.addf %379, %382 : vector<8x128xf32>
    %384 = math.tanh %383 : vector<8x128xf32>
    %385 = arith.subf %356, %384 : vector<8x128xf32>
    %386 = arith.mulf %378, %385 : vector<8x128xf32>
    %387 = arith.addf %384, %386 : vector<8x128xf32>
    %c12_i32 = arith.constant 12 : i32
    %c8_i32_76 = arith.constant 8 : i32
    %388 = arith.muli %c12_i32, %c8_i32_76 : i32
    %389 = tpu.assume_multiple %388, 8 : i32
    %390 = arith.index_cast %389 : i32 to index
    %c0_77 = arith.constant 0 : index
    %391 = vector.load %arg10[%390, %c0_77] : memref<224x384xf32, #tpu.memory_space<vmem>>, vector<8x384xf32>
    %392 = arith.truncf %387 : vector<8x128xf32> to vector<8x128xbf16>
    %cst_78 = arith.constant dense<0.000000e+00> : vector<8x384xf32>
    %393 = tpu.matmul %392, %14, %cst_78 {dimension_numbers = #tpu.dot_dimension_numbers<[1], [0], [0], [1], [0, 0, 1, 1], [], []>} : vector<8x128xbf16>, vector<128x384xbf16>, vector<8x384xf32> -> vector<8x384xf32>
    %394 = vector.extract_strided_slice %391 {offsets = [0, 0], sizes = [8, 128], strides = [1, 1]} : vector<8x384xf32> to vector<8x128xf32>
    %395 = vector.extract_strided_slice %393 {offsets = [0, 0], sizes = [8, 128], strides = [1, 1]} : vector<8x384xf32> to vector<8x128xf32>
    %396 = arith.addf %394, %395 : vector<8x128xf32>
    %397 = arith.negf %396 : vector<8x128xf32>
    %398 = math.exp %397 : vector<8x128xf32>
    %cst_79 = arith.constant 1.000000e+00 : f32
    %399 = vector.broadcast %cst_79 : f32 to vector<8x128xf32>
    %400 = arith.addf %399, %398 : vector<8x128xf32>
    %401 = arith.divf %399, %400 : vector<8x128xf32>
    %402 = vector.extract_strided_slice %391 {offsets = [0, 128], sizes = [8, 128], strides = [1, 1]} : vector<8x384xf32> to vector<8x128xf32>
    %403 = vector.extract_strided_slice %393 {offsets = [0, 128], sizes = [8, 128], strides = [1, 1]} : vector<8x384xf32> to vector<8x128xf32>
    %404 = arith.addf %402, %403 : vector<8x128xf32>
    %405 = arith.negf %404 : vector<8x128xf32>
    %406 = math.exp %405 : vector<8x128xf32>
    %cst_80 = arith.constant 1.000000e+00 : f32
    %407 = vector.broadcast %cst_80 : f32 to vector<8x128xf32>
    %408 = arith.addf %407, %406 : vector<8x128xf32>
    %409 = arith.divf %407, %408 : vector<8x128xf32>
    %410 = vector.extract_strided_slice %391 {offsets = [0, 256], sizes = [8, 128], strides = [1, 1]} : vector<8x384xf32> to vector<8x128xf32>
    %411 = vector.extract_strided_slice %393 {offsets = [0, 256], sizes = [8, 128], strides = [1, 1]} : vector<8x384xf32> to vector<8x128xf32>
    %412 = arith.addf %411, %13 : vector<8x128xf32>
    %413 = arith.mulf %401, %412 : vector<8x128xf32>
    %414 = arith.addf %410, %413 : vector<8x128xf32>
    %415 = math.tanh %414 : vector<8x128xf32>
    %416 = arith.subf %387, %415 : vector<8x128xf32>
    %417 = arith.mulf %409, %416 : vector<8x128xf32>
    %418 = arith.addf %415, %417 : vector<8x128xf32>
    %c13_i32 = arith.constant 13 : i32
    %c8_i32_81 = arith.constant 8 : i32
    %419 = arith.muli %c13_i32, %c8_i32_81 : i32
    %420 = tpu.assume_multiple %419, 8 : i32
    %421 = arith.index_cast %420 : i32 to index
    %c0_82 = arith.constant 0 : index
    %422 = vector.load %arg10[%421, %c0_82] : memref<224x384xf32, #tpu.memory_space<vmem>>, vector<8x384xf32>
    %423 = arith.truncf %418 : vector<8x128xf32> to vector<8x128xbf16>
    %cst_83 = arith.constant dense<0.000000e+00> : vector<8x384xf32>
    %424 = tpu.matmul %423, %14, %cst_83 {dimension_numbers = #tpu.dot_dimension_numbers<[1], [0], [0], [1], [0, 0, 1, 1], [], []>} : vector<8x128xbf16>, vector<128x384xbf16>, vector<8x384xf32> -> vector<8x384xf32>
    %425 = vector.extract_strided_slice %422 {offsets = [0, 0], sizes = [8, 128], strides = [1, 1]} : vector<8x384xf32> to vector<8x128xf32>
    %426 = vector.extract_strided_slice %424 {offsets = [0, 0], sizes = [8, 128], strides = [1, 1]} : vector<8x384xf32> to vector<8x128xf32>
    %427 = arith.addf %425, %426 : vector<8x128xf32>
    %428 = arith.negf %427 : vector<8x128xf32>
    %429 = math.exp %428 : vector<8x128xf32>
    %cst_84 = arith.constant 1.000000e+00 : f32
    %430 = vector.broadcast %cst_84 : f32 to vector<8x128xf32>
    %431 = arith.addf %430, %429 : vector<8x128xf32>
    %432 = arith.divf %430, %431 : vector<8x128xf32>
    %433 = vector.extract_strided_slice %422 {offsets = [0, 128], sizes = [8, 128], strides = [1, 1]} : vector<8x384xf32> to vector<8x128xf32>
    %434 = vector.extract_strided_slice %424 {offsets = [0, 128], sizes = [8, 128], strides = [1, 1]} : vector<8x384xf32> to vector<8x128xf32>
    %435 = arith.addf %433, %434 : vector<8x128xf32>
    %436 = arith.negf %435 : vector<8x128xf32>
    %437 = math.exp %436 : vector<8x128xf32>
    %cst_85 = arith.constant 1.000000e+00 : f32
    %438 = vector.broadcast %cst_85 : f32 to vector<8x128xf32>
    %439 = arith.addf %438, %437 : vector<8x128xf32>
    %440 = arith.divf %438, %439 : vector<8x128xf32>
    %441 = vector.extract_strided_slice %422 {offsets = [0, 256], sizes = [8, 128], strides = [1, 1]} : vector<8x384xf32> to vector<8x128xf32>
    %442 = vector.extract_strided_slice %424 {offsets = [0, 256], sizes = [8, 128], strides = [1, 1]} : vector<8x384xf32> to vector<8x128xf32>
    %443 = arith.addf %442, %13 : vector<8x128xf32>
    %444 = arith.mulf %432, %443 : vector<8x128xf32>
    %445 = arith.addf %441, %444 : vector<8x128xf32>
    %446 = math.tanh %445 : vector<8x128xf32>
    %447 = arith.subf %418, %446 : vector<8x128xf32>
    %448 = arith.mulf %440, %447 : vector<8x128xf32>
    %449 = arith.addf %446, %448 : vector<8x128xf32>
    %c14_i32 = arith.constant 14 : i32
    %c8_i32_86 = arith.constant 8 : i32
    %450 = arith.muli %c14_i32, %c8_i32_86 : i32
    %451 = tpu.assume_multiple %450, 8 : i32
    %452 = arith.index_cast %451 : i32 to index
    %c0_87 = arith.constant 0 : index
    %453 = vector.load %arg10[%452, %c0_87] : memref<224x384xf32, #tpu.memory_space<vmem>>, vector<8x384xf32>
    %454 = arith.truncf %449 : vector<8x128xf32> to vector<8x128xbf16>
    %cst_88 = arith.constant dense<0.000000e+00> : vector<8x384xf32>
    %455 = tpu.matmul %454, %14, %cst_88 {dimension_numbers = #tpu.dot_dimension_numbers<[1], [0], [0], [1], [0, 0, 1, 1], [], []>} : vector<8x128xbf16>, vector<128x384xbf16>, vector<8x384xf32> -> vector<8x384xf32>
    %456 = vector.extract_strided_slice %453 {offsets = [0, 0], sizes = [8, 128], strides = [1, 1]} : vector<8x384xf32> to vector<8x128xf32>
    %457 = vector.extract_strided_slice %455 {offsets = [0, 0], sizes = [8, 128], strides = [1, 1]} : vector<8x384xf32> to vector<8x128xf32>
    %458 = arith.addf %456, %457 : vector<8x128xf32>
    %459 = arith.negf %458 : vector<8x128xf32>
    %460 = math.exp %459 : vector<8x128xf32>
    %cst_89 = arith.constant 1.000000e+00 : f32
    %461 = vector.broadcast %cst_89 : f32 to vector<8x128xf32>
    %462 = arith.addf %461, %460 : vector<8x128xf32>
    %463 = arith.divf %461, %462 : vector<8x128xf32>
    %464 = vector.extract_strided_slice %453 {offsets = [0, 128], sizes = [8, 128], strides = [1, 1]} : vector<8x384xf32> to vector<8x128xf32>
    %465 = vector.extract_strided_slice %455 {offsets = [0, 128], sizes = [8, 128], strides = [1, 1]} : vector<8x384xf32> to vector<8x128xf32>
    %466 = arith.addf %464, %465 : vector<8x128xf32>
    %467 = arith.negf %466 : vector<8x128xf32>
    %468 = math.exp %467 : vector<8x128xf32>
    %cst_90 = arith.constant 1.000000e+00 : f32
    %469 = vector.broadcast %cst_90 : f32 to vector<8x128xf32>
    %470 = arith.addf %469, %468 : vector<8x128xf32>
    %471 = arith.divf %469, %470 : vector<8x128xf32>
    %472 = vector.extract_strided_slice %453 {offsets = [0, 256], sizes = [8, 128], strides = [1, 1]} : vector<8x384xf32> to vector<8x128xf32>
    %473 = vector.extract_strided_slice %455 {offsets = [0, 256], sizes = [8, 128], strides = [1, 1]} : vector<8x384xf32> to vector<8x128xf32>
    %474 = arith.addf %473, %13 : vector<8x128xf32>
    %475 = arith.mulf %463, %474 : vector<8x128xf32>
    %476 = arith.addf %472, %475 : vector<8x128xf32>
    %477 = math.tanh %476 : vector<8x128xf32>
    %478 = arith.subf %449, %477 : vector<8x128xf32>
    %479 = arith.mulf %471, %478 : vector<8x128xf32>
    %480 = arith.addf %477, %479 : vector<8x128xf32>
    %c15_i32 = arith.constant 15 : i32
    %c8_i32_91 = arith.constant 8 : i32
    %481 = arith.muli %c15_i32, %c8_i32_91 : i32
    %482 = tpu.assume_multiple %481, 8 : i32
    %483 = arith.index_cast %482 : i32 to index
    %c0_92 = arith.constant 0 : index
    %484 = vector.load %arg10[%483, %c0_92] : memref<224x384xf32, #tpu.memory_space<vmem>>, vector<8x384xf32>
    %485 = arith.truncf %480 : vector<8x128xf32> to vector<8x128xbf16>
    %cst_93 = arith.constant dense<0.000000e+00> : vector<8x384xf32>
    %486 = tpu.matmul %485, %14, %cst_93 {dimension_numbers = #tpu.dot_dimension_numbers<[1], [0], [0], [1], [0, 0, 1, 1], [], []>} : vector<8x128xbf16>, vector<128x384xbf16>, vector<8x384xf32> -> vector<8x384xf32>
    %487 = vector.extract_strided_slice %484 {offsets = [0, 0], sizes = [8, 128], strides = [1, 1]} : vector<8x384xf32> to vector<8x128xf32>
    %488 = vector.extract_strided_slice %486 {offsets = [0, 0], sizes = [8, 128], strides = [1, 1]} : vector<8x384xf32> to vector<8x128xf32>
    %489 = arith.addf %487, %488 : vector<8x128xf32>
    %490 = arith.negf %489 : vector<8x128xf32>
    %491 = math.exp %490 : vector<8x128xf32>
    %cst_94 = arith.constant 1.000000e+00 : f32
    %492 = vector.broadcast %cst_94 : f32 to vector<8x128xf32>
    %493 = arith.addf %492, %491 : vector<8x128xf32>
    %494 = arith.divf %492, %493 : vector<8x128xf32>
    %495 = vector.extract_strided_slice %484 {offsets = [0, 128], sizes = [8, 128], strides = [1, 1]} : vector<8x384xf32> to vector<8x128xf32>
    %496 = vector.extract_strided_slice %486 {offsets = [0, 128], sizes = [8, 128], strides = [1, 1]} : vector<8x384xf32> to vector<8x128xf32>
    %497 = arith.addf %495, %496 : vector<8x128xf32>
    %498 = arith.negf %497 : vector<8x128xf32>
    %499 = math.exp %498 : vector<8x128xf32>
    %cst_95 = arith.constant 1.000000e+00 : f32
    %500 = vector.broadcast %cst_95 : f32 to vector<8x128xf32>
    %501 = arith.addf %500, %499 : vector<8x128xf32>
    %502 = arith.divf %500, %501 : vector<8x128xf32>
    %503 = vector.extract_strided_slice %484 {offsets = [0, 256], sizes = [8, 128], strides = [1, 1]} : vector<8x384xf32> to vector<8x128xf32>
    %504 = vector.extract_strided_slice %486 {offsets = [0, 256], sizes = [8, 128], strides = [1, 1]} : vector<8x384xf32> to vector<8x128xf32>
    %505 = arith.addf %504, %13 : vector<8x128xf32>
    %506 = arith.mulf %494, %505 : vector<8x128xf32>
    %507 = arith.addf %503, %506 : vector<8x128xf32>
    %508 = math.tanh %507 : vector<8x128xf32>
    %509 = arith.subf %480, %508 : vector<8x128xf32>
    %510 = arith.mulf %502, %509 : vector<8x128xf32>
    %511 = arith.addf %508, %510 : vector<8x128xf32>
    %c16_i32 = arith.constant 16 : i32
    %c8_i32_96 = arith.constant 8 : i32
    %512 = arith.muli %c16_i32, %c8_i32_96 : i32
    %513 = tpu.assume_multiple %512, 8 : i32
    %514 = arith.index_cast %513 : i32 to index
    %c0_97 = arith.constant 0 : index
    %515 = vector.load %arg10[%514, %c0_97] : memref<224x384xf32, #tpu.memory_space<vmem>>, vector<8x384xf32>
    %516 = arith.truncf %511 : vector<8x128xf32> to vector<8x128xbf16>
    %cst_98 = arith.constant dense<0.000000e+00> : vector<8x384xf32>
    %517 = tpu.matmul %516, %14, %cst_98 {dimension_numbers = #tpu.dot_dimension_numbers<[1], [0], [0], [1], [0, 0, 1, 1], [], []>} : vector<8x128xbf16>, vector<128x384xbf16>, vector<8x384xf32> -> vector<8x384xf32>
    %518 = vector.extract_strided_slice %515 {offsets = [0, 0], sizes = [8, 128], strides = [1, 1]} : vector<8x384xf32> to vector<8x128xf32>
    %519 = vector.extract_strided_slice %517 {offsets = [0, 0], sizes = [8, 128], strides = [1, 1]} : vector<8x384xf32> to vector<8x128xf32>
    %520 = arith.addf %518, %519 : vector<8x128xf32>
    %521 = arith.negf %520 : vector<8x128xf32>
    %522 = math.exp %521 : vector<8x128xf32>
    %cst_99 = arith.constant 1.000000e+00 : f32
    %523 = vector.broadcast %cst_99 : f32 to vector<8x128xf32>
    %524 = arith.addf %523, %522 : vector<8x128xf32>
    %525 = arith.divf %523, %524 : vector<8x128xf32>
    %526 = vector.extract_strided_slice %515 {offsets = [0, 128], sizes = [8, 128], strides = [1, 1]} : vector<8x384xf32> to vector<8x128xf32>
    %527 = vector.extract_strided_slice %517 {offsets = [0, 128], sizes = [8, 128], strides = [1, 1]} : vector<8x384xf32> to vector<8x128xf32>
    %528 = arith.addf %526, %527 : vector<8x128xf32>
    %529 = arith.negf %528 : vector<8x128xf32>
    %530 = math.exp %529 : vector<8x128xf32>
    %cst_100 = arith.constant 1.000000e+00 : f32
    %531 = vector.broadcast %cst_100 : f32 to vector<8x128xf32>
    %532 = arith.addf %531, %530 : vector<8x128xf32>
    %533 = arith.divf %531, %532 : vector<8x128xf32>
    %534 = vector.extract_strided_slice %515 {offsets = [0, 256], sizes = [8, 128], strides = [1, 1]} : vector<8x384xf32> to vector<8x128xf32>
    %535 = vector.extract_strided_slice %517 {offsets = [0, 256], sizes = [8, 128], strides = [1, 1]} : vector<8x384xf32> to vector<8x128xf32>
    %536 = arith.addf %535, %13 : vector<8x128xf32>
    %537 = arith.mulf %525, %536 : vector<8x128xf32>
    %538 = arith.addf %534, %537 : vector<8x128xf32>
    %539 = math.tanh %538 : vector<8x128xf32>
    %540 = arith.subf %511, %539 : vector<8x128xf32>
    %541 = arith.mulf %533, %540 : vector<8x128xf32>
    %542 = arith.addf %539, %541 : vector<8x128xf32>
    %c17_i32 = arith.constant 17 : i32
    %c8_i32_101 = arith.constant 8 : i32
    %543 = arith.muli %c17_i32, %c8_i32_101 : i32
    %544 = tpu.assume_multiple %543, 8 : i32
    %545 = arith.index_cast %544 : i32 to index
    %c0_102 = arith.constant 0 : index
    %546 = vector.load %arg10[%545, %c0_102] : memref<224x384xf32, #tpu.memory_space<vmem>>, vector<8x384xf32>
    %547 = arith.truncf %542 : vector<8x128xf32> to vector<8x128xbf16>
    %cst_103 = arith.constant dense<0.000000e+00> : vector<8x384xf32>
    %548 = tpu.matmul %547, %14, %cst_103 {dimension_numbers = #tpu.dot_dimension_numbers<[1], [0], [0], [1], [0, 0, 1, 1], [], []>} : vector<8x128xbf16>, vector<128x384xbf16>, vector<8x384xf32> -> vector<8x384xf32>
    %549 = vector.extract_strided_slice %546 {offsets = [0, 0], sizes = [8, 128], strides = [1, 1]} : vector<8x384xf32> to vector<8x128xf32>
    %550 = vector.extract_strided_slice %548 {offsets = [0, 0], sizes = [8, 128], strides = [1, 1]} : vector<8x384xf32> to vector<8x128xf32>
    %551 = arith.addf %549, %550 : vector<8x128xf32>
    %552 = arith.negf %551 : vector<8x128xf32>
    %553 = math.exp %552 : vector<8x128xf32>
    %cst_104 = arith.constant 1.000000e+00 : f32
    %554 = vector.broadcast %cst_104 : f32 to vector<8x128xf32>
    %555 = arith.addf %554, %553 : vector<8x128xf32>
    %556 = arith.divf %554, %555 : vector<8x128xf32>
    %557 = vector.extract_strided_slice %546 {offsets = [0, 128], sizes = [8, 128], strides = [1, 1]} : vector<8x384xf32> to vector<8x128xf32>
    %558 = vector.extract_strided_slice %548 {offsets = [0, 128], sizes = [8, 128], strides = [1, 1]} : vector<8x384xf32> to vector<8x128xf32>
    %559 = arith.addf %557, %558 : vector<8x128xf32>
    %560 = arith.negf %559 : vector<8x128xf32>
    %561 = math.exp %560 : vector<8x128xf32>
    %cst_105 = arith.constant 1.000000e+00 : f32
    %562 = vector.broadcast %cst_105 : f32 to vector<8x128xf32>
    %563 = arith.addf %562, %561 : vector<8x128xf32>
    %564 = arith.divf %562, %563 : vector<8x128xf32>
    %565 = vector.extract_strided_slice %546 {offsets = [0, 256], sizes = [8, 128], strides = [1, 1]} : vector<8x384xf32> to vector<8x128xf32>
    %566 = vector.extract_strided_slice %548 {offsets = [0, 256], sizes = [8, 128], strides = [1, 1]} : vector<8x384xf32> to vector<8x128xf32>
    %567 = arith.addf %566, %13 : vector<8x128xf32>
    %568 = arith.mulf %556, %567 : vector<8x128xf32>
    %569 = arith.addf %565, %568 : vector<8x128xf32>
    %570 = math.tanh %569 : vector<8x128xf32>
    %571 = arith.subf %542, %570 : vector<8x128xf32>
    %572 = arith.mulf %564, %571 : vector<8x128xf32>
    %573 = arith.addf %570, %572 : vector<8x128xf32>
    %c18_i32 = arith.constant 18 : i32
    %c8_i32_106 = arith.constant 8 : i32
    %574 = arith.muli %c18_i32, %c8_i32_106 : i32
    %575 = tpu.assume_multiple %574, 8 : i32
    %576 = arith.index_cast %575 : i32 to index
    %c0_107 = arith.constant 0 : index
    %577 = vector.load %arg10[%576, %c0_107] : memref<224x384xf32, #tpu.memory_space<vmem>>, vector<8x384xf32>
    %578 = arith.truncf %573 : vector<8x128xf32> to vector<8x128xbf16>
    %cst_108 = arith.constant dense<0.000000e+00> : vector<8x384xf32>
    %579 = tpu.matmul %578, %14, %cst_108 {dimension_numbers = #tpu.dot_dimension_numbers<[1], [0], [0], [1], [0, 0, 1, 1], [], []>} : vector<8x128xbf16>, vector<128x384xbf16>, vector<8x384xf32> -> vector<8x384xf32>
    %580 = vector.extract_strided_slice %577 {offsets = [0, 0], sizes = [8, 128], strides = [1, 1]} : vector<8x384xf32> to vector<8x128xf32>
    %581 = vector.extract_strided_slice %579 {offsets = [0, 0], sizes = [8, 128], strides = [1, 1]} : vector<8x384xf32> to vector<8x128xf32>
    %582 = arith.addf %580, %581 : vector<8x128xf32>
    %583 = arith.negf %582 : vector<8x128xf32>
    %584 = math.exp %583 : vector<8x128xf32>
    %cst_109 = arith.constant 1.000000e+00 : f32
    %585 = vector.broadcast %cst_109 : f32 to vector<8x128xf32>
    %586 = arith.addf %585, %584 : vector<8x128xf32>
    %587 = arith.divf %585, %586 : vector<8x128xf32>
    %588 = vector.extract_strided_slice %577 {offsets = [0, 128], sizes = [8, 128], strides = [1, 1]} : vector<8x384xf32> to vector<8x128xf32>
    %589 = vector.extract_strided_slice %579 {offsets = [0, 128], sizes = [8, 128], strides = [1, 1]} : vector<8x384xf32> to vector<8x128xf32>
    %590 = arith.addf %588, %589 : vector<8x128xf32>
    %591 = arith.negf %590 : vector<8x128xf32>
    %592 = math.exp %591 : vector<8x128xf32>
    %cst_110 = arith.constant 1.000000e+00 : f32
    %593 = vector.broadcast %cst_110 : f32 to vector<8x128xf32>
    %594 = arith.addf %593, %592 : vector<8x128xf32>
    %595 = arith.divf %593, %594 : vector<8x128xf32>
    %596 = vector.extract_strided_slice %577 {offsets = [0, 256], sizes = [8, 128], strides = [1, 1]} : vector<8x384xf32> to vector<8x128xf32>
    %597 = vector.extract_strided_slice %579 {offsets = [0, 256], sizes = [8, 128], strides = [1, 1]} : vector<8x384xf32> to vector<8x128xf32>
    %598 = arith.addf %597, %13 : vector<8x128xf32>
    %599 = arith.mulf %587, %598 : vector<8x128xf32>
    %600 = arith.addf %596, %599 : vector<8x128xf32>
    %601 = math.tanh %600 : vector<8x128xf32>
    %602 = arith.subf %573, %601 : vector<8x128xf32>
    %603 = arith.mulf %595, %602 : vector<8x128xf32>
    %604 = arith.addf %601, %603 : vector<8x128xf32>
    %c19_i32 = arith.constant 19 : i32
    %c8_i32_111 = arith.constant 8 : i32
    %605 = arith.muli %c19_i32, %c8_i32_111 : i32
    %606 = tpu.assume_multiple %605, 8 : i32
    %607 = arith.index_cast %606 : i32 to index
    %c0_112 = arith.constant 0 : index
    %608 = vector.load %arg10[%607, %c0_112] : memref<224x384xf32, #tpu.memory_space<vmem>>, vector<8x384xf32>
    %609 = arith.truncf %604 : vector<8x128xf32> to vector<8x128xbf16>
    %cst_113 = arith.constant dense<0.000000e+00> : vector<8x384xf32>
    %610 = tpu.matmul %609, %14, %cst_113 {dimension_numbers = #tpu.dot_dimension_numbers<[1], [0], [0], [1], [0, 0, 1, 1], [], []>} : vector<8x128xbf16>, vector<128x384xbf16>, vector<8x384xf32> -> vector<8x384xf32>
    %611 = vector.extract_strided_slice %608 {offsets = [0, 0], sizes = [8, 128], strides = [1, 1]} : vector<8x384xf32> to vector<8x128xf32>
    %612 = vector.extract_strided_slice %610 {offsets = [0, 0], sizes = [8, 128], strides = [1, 1]} : vector<8x384xf32> to vector<8x128xf32>
    %613 = arith.addf %611, %612 : vector<8x128xf32>
    %614 = arith.negf %613 : vector<8x128xf32>
    %615 = math.exp %614 : vector<8x128xf32>
    %cst_114 = arith.constant 1.000000e+00 : f32
    %616 = vector.broadcast %cst_114 : f32 to vector<8x128xf32>
    %617 = arith.addf %616, %615 : vector<8x128xf32>
    %618 = arith.divf %616, %617 : vector<8x128xf32>
    %619 = vector.extract_strided_slice %608 {offsets = [0, 128], sizes = [8, 128], strides = [1, 1]} : vector<8x384xf32> to vector<8x128xf32>
    %620 = vector.extract_strided_slice %610 {offsets = [0, 128], sizes = [8, 128], strides = [1, 1]} : vector<8x384xf32> to vector<8x128xf32>
    %621 = arith.addf %619, %620 : vector<8x128xf32>
    %622 = arith.negf %621 : vector<8x128xf32>
    %623 = math.exp %622 : vector<8x128xf32>
    %cst_115 = arith.constant 1.000000e+00 : f32
    %624 = vector.broadcast %cst_115 : f32 to vector<8x128xf32>
    %625 = arith.addf %624, %623 : vector<8x128xf32>
    %626 = arith.divf %624, %625 : vector<8x128xf32>
    %627 = vector.extract_strided_slice %608 {offsets = [0, 256], sizes = [8, 128], strides = [1, 1]} : vector<8x384xf32> to vector<8x128xf32>
    %628 = vector.extract_strided_slice %610 {offsets = [0, 256], sizes = [8, 128], strides = [1, 1]} : vector<8x384xf32> to vector<8x128xf32>
    %629 = arith.addf %628, %13 : vector<8x128xf32>
    %630 = arith.mulf %618, %629 : vector<8x128xf32>
    %631 = arith.addf %627, %630 : vector<8x128xf32>
    %632 = math.tanh %631 : vector<8x128xf32>
    %633 = arith.subf %604, %632 : vector<8x128xf32>
    %634 = arith.mulf %626, %633 : vector<8x128xf32>
    %635 = arith.addf %632, %634 : vector<8x128xf32>
    %c20_i32 = arith.constant 20 : i32
    %c8_i32_116 = arith.constant 8 : i32
    %636 = arith.muli %c20_i32, %c8_i32_116 : i32
    %637 = tpu.assume_multiple %636, 8 : i32
    %638 = arith.index_cast %637 : i32 to index
    %c0_117 = arith.constant 0 : index
    %639 = vector.load %arg10[%638, %c0_117] : memref<224x384xf32, #tpu.memory_space<vmem>>, vector<8x384xf32>
    %640 = arith.truncf %635 : vector<8x128xf32> to vector<8x128xbf16>
    %cst_118 = arith.constant dense<0.000000e+00> : vector<8x384xf32>
    %641 = tpu.matmul %640, %14, %cst_118 {dimension_numbers = #tpu.dot_dimension_numbers<[1], [0], [0], [1], [0, 0, 1, 1], [], []>} : vector<8x128xbf16>, vector<128x384xbf16>, vector<8x384xf32> -> vector<8x384xf32>
    %642 = vector.extract_strided_slice %639 {offsets = [0, 0], sizes = [8, 128], strides = [1, 1]} : vector<8x384xf32> to vector<8x128xf32>
    %643 = vector.extract_strided_slice %641 {offsets = [0, 0], sizes = [8, 128], strides = [1, 1]} : vector<8x384xf32> to vector<8x128xf32>
    %644 = arith.addf %642, %643 : vector<8x128xf32>
    %645 = arith.negf %644 : vector<8x128xf32>
    %646 = math.exp %645 : vector<8x128xf32>
    %cst_119 = arith.constant 1.000000e+00 : f32
    %647 = vector.broadcast %cst_119 : f32 to vector<8x128xf32>
    %648 = arith.addf %647, %646 : vector<8x128xf32>
    %649 = arith.divf %647, %648 : vector<8x128xf32>
    %650 = vector.extract_strided_slice %639 {offsets = [0, 128], sizes = [8, 128], strides = [1, 1]} : vector<8x384xf32> to vector<8x128xf32>
    %651 = vector.extract_strided_slice %641 {offsets = [0, 128], sizes = [8, 128], strides = [1, 1]} : vector<8x384xf32> to vector<8x128xf32>
    %652 = arith.addf %650, %651 : vector<8x128xf32>
    %653 = arith.negf %652 : vector<8x128xf32>
    %654 = math.exp %653 : vector<8x128xf32>
    %cst_120 = arith.constant 1.000000e+00 : f32
    %655 = vector.broadcast %cst_120 : f32 to vector<8x128xf32>
    %656 = arith.addf %655, %654 : vector<8x128xf32>
    %657 = arith.divf %655, %656 : vector<8x128xf32>
    %658 = vector.extract_strided_slice %639 {offsets = [0, 256], sizes = [8, 128], strides = [1, 1]} : vector<8x384xf32> to vector<8x128xf32>
    %659 = vector.extract_strided_slice %641 {offsets = [0, 256], sizes = [8, 128], strides = [1, 1]} : vector<8x384xf32> to vector<8x128xf32>
    %660 = arith.addf %659, %13 : vector<8x128xf32>
    %661 = arith.mulf %649, %660 : vector<8x128xf32>
    %662 = arith.addf %658, %661 : vector<8x128xf32>
    %663 = math.tanh %662 : vector<8x128xf32>
    %664 = arith.subf %635, %663 : vector<8x128xf32>
    %665 = arith.mulf %657, %664 : vector<8x128xf32>
    %666 = arith.addf %663, %665 : vector<8x128xf32>
    %c21_i32 = arith.constant 21 : i32
    %c8_i32_121 = arith.constant 8 : i32
    %667 = arith.muli %c21_i32, %c8_i32_121 : i32
    %668 = tpu.assume_multiple %667, 8 : i32
    %669 = arith.index_cast %668 : i32 to index
    %c0_122 = arith.constant 0 : index
    %670 = vector.load %arg10[%669, %c0_122] : memref<224x384xf32, #tpu.memory_space<vmem>>, vector<8x384xf32>
    %671 = arith.truncf %666 : vector<8x128xf32> to vector<8x128xbf16>
    %cst_123 = arith.constant dense<0.000000e+00> : vector<8x384xf32>
    %672 = tpu.matmul %671, %14, %cst_123 {dimension_numbers = #tpu.dot_dimension_numbers<[1], [0], [0], [1], [0, 0, 1, 1], [], []>} : vector<8x128xbf16>, vector<128x384xbf16>, vector<8x384xf32> -> vector<8x384xf32>
    %673 = vector.extract_strided_slice %670 {offsets = [0, 0], sizes = [8, 128], strides = [1, 1]} : vector<8x384xf32> to vector<8x128xf32>
    %674 = vector.extract_strided_slice %672 {offsets = [0, 0], sizes = [8, 128], strides = [1, 1]} : vector<8x384xf32> to vector<8x128xf32>
    %675 = arith.addf %673, %674 : vector<8x128xf32>
    %676 = arith.negf %675 : vector<8x128xf32>
    %677 = math.exp %676 : vector<8x128xf32>
    %cst_124 = arith.constant 1.000000e+00 : f32
    %678 = vector.broadcast %cst_124 : f32 to vector<8x128xf32>
    %679 = arith.addf %678, %677 : vector<8x128xf32>
    %680 = arith.divf %678, %679 : vector<8x128xf32>
    %681 = vector.extract_strided_slice %670 {offsets = [0, 128], sizes = [8, 128], strides = [1, 1]} : vector<8x384xf32> to vector<8x128xf32>
    %682 = vector.extract_strided_slice %672 {offsets = [0, 128], sizes = [8, 128], strides = [1, 1]} : vector<8x384xf32> to vector<8x128xf32>
    %683 = arith.addf %681, %682 : vector<8x128xf32>
    %684 = arith.negf %683 : vector<8x128xf32>
    %685 = math.exp %684 : vector<8x128xf32>
    %cst_125 = arith.constant 1.000000e+00 : f32
    %686 = vector.broadcast %cst_125 : f32 to vector<8x128xf32>
    %687 = arith.addf %686, %685 : vector<8x128xf32>
    %688 = arith.divf %686, %687 : vector<8x128xf32>
    %689 = vector.extract_strided_slice %670 {offsets = [0, 256], sizes = [8, 128], strides = [1, 1]} : vector<8x384xf32> to vector<8x128xf32>
    %690 = vector.extract_strided_slice %672 {offsets = [0, 256], sizes = [8, 128], strides = [1, 1]} : vector<8x384xf32> to vector<8x128xf32>
    %691 = arith.addf %690, %13 : vector<8x128xf32>
    %692 = arith.mulf %680, %691 : vector<8x128xf32>
    %693 = arith.addf %689, %692 : vector<8x128xf32>
    %694 = math.tanh %693 : vector<8x128xf32>
    %695 = arith.subf %666, %694 : vector<8x128xf32>
    %696 = arith.mulf %688, %695 : vector<8x128xf32>
    %697 = arith.addf %694, %696 : vector<8x128xf32>
    %c22_i32 = arith.constant 22 : i32
    %c8_i32_126 = arith.constant 8 : i32
    %698 = arith.muli %c22_i32, %c8_i32_126 : i32
    %699 = tpu.assume_multiple %698, 8 : i32
    %700 = arith.index_cast %699 : i32 to index
    %c0_127 = arith.constant 0 : index
    %701 = vector.load %arg10[%700, %c0_127] : memref<224x384xf32, #tpu.memory_space<vmem>>, vector<8x384xf32>
    %702 = arith.truncf %697 : vector<8x128xf32> to vector<8x128xbf16>
    %cst_128 = arith.constant dense<0.000000e+00> : vector<8x384xf32>
    %703 = tpu.matmul %702, %14, %cst_128 {dimension_numbers = #tpu.dot_dimension_numbers<[1], [0], [0], [1], [0, 0, 1, 1], [], []>} : vector<8x128xbf16>, vector<128x384xbf16>, vector<8x384xf32> -> vector<8x384xf32>
    %704 = vector.extract_strided_slice %701 {offsets = [0, 0], sizes = [8, 128], strides = [1, 1]} : vector<8x384xf32> to vector<8x128xf32>
    %705 = vector.extract_strided_slice %703 {offsets = [0, 0], sizes = [8, 128], strides = [1, 1]} : vector<8x384xf32> to vector<8x128xf32>
    %706 = arith.addf %704, %705 : vector<8x128xf32>
    %707 = arith.negf %706 : vector<8x128xf32>
    %708 = math.exp %707 : vector<8x128xf32>
    %cst_129 = arith.constant 1.000000e+00 : f32
    %709 = vector.broadcast %cst_129 : f32 to vector<8x128xf32>
    %710 = arith.addf %709, %708 : vector<8x128xf32>
    %711 = arith.divf %709, %710 : vector<8x128xf32>
    %712 = vector.extract_strided_slice %701 {offsets = [0, 128], sizes = [8, 128], strides = [1, 1]} : vector<8x384xf32> to vector<8x128xf32>
    %713 = vector.extract_strided_slice %703 {offsets = [0, 128], sizes = [8, 128], strides = [1, 1]} : vector<8x384xf32> to vector<8x128xf32>
    %714 = arith.addf %712, %713 : vector<8x128xf32>
    %715 = arith.negf %714 : vector<8x128xf32>
    %716 = math.exp %715 : vector<8x128xf32>
    %cst_130 = arith.constant 1.000000e+00 : f32
    %717 = vector.broadcast %cst_130 : f32 to vector<8x128xf32>
    %718 = arith.addf %717, %716 : vector<8x128xf32>
    %719 = arith.divf %717, %718 : vector<8x128xf32>
    %720 = vector.extract_strided_slice %701 {offsets = [0, 256], sizes = [8, 128], strides = [1, 1]} : vector<8x384xf32> to vector<8x128xf32>
    %721 = vector.extract_strided_slice %703 {offsets = [0, 256], sizes = [8, 128], strides = [1, 1]} : vector<8x384xf32> to vector<8x128xf32>
    %722 = arith.addf %721, %13 : vector<8x128xf32>
    %723 = arith.mulf %711, %722 : vector<8x128xf32>
    %724 = arith.addf %720, %723 : vector<8x128xf32>
    %725 = math.tanh %724 : vector<8x128xf32>
    %726 = arith.subf %697, %725 : vector<8x128xf32>
    %727 = arith.mulf %719, %726 : vector<8x128xf32>
    %728 = arith.addf %725, %727 : vector<8x128xf32>
    %c23_i32 = arith.constant 23 : i32
    %c8_i32_131 = arith.constant 8 : i32
    %729 = arith.muli %c23_i32, %c8_i32_131 : i32
    %730 = tpu.assume_multiple %729, 8 : i32
    %731 = arith.index_cast %730 : i32 to index
    %c0_132 = arith.constant 0 : index
    %732 = vector.load %arg10[%731, %c0_132] : memref<224x384xf32, #tpu.memory_space<vmem>>, vector<8x384xf32>
    %733 = arith.truncf %728 : vector<8x128xf32> to vector<8x128xbf16>
    %cst_133 = arith.constant dense<0.000000e+00> : vector<8x384xf32>
    %734 = tpu.matmul %733, %14, %cst_133 {dimension_numbers = #tpu.dot_dimension_numbers<[1], [0], [0], [1], [0, 0, 1, 1], [], []>} : vector<8x128xbf16>, vector<128x384xbf16>, vector<8x384xf32> -> vector<8x384xf32>
    %735 = vector.extract_strided_slice %732 {offsets = [0, 0], sizes = [8, 128], strides = [1, 1]} : vector<8x384xf32> to vector<8x128xf32>
    %736 = vector.extract_strided_slice %734 {offsets = [0, 0], sizes = [8, 128], strides = [1, 1]} : vector<8x384xf32> to vector<8x128xf32>
    %737 = arith.addf %735, %736 : vector<8x128xf32>
    %738 = arith.negf %737 : vector<8x128xf32>
    %739 = math.exp %738 : vector<8x128xf32>
    %cst_134 = arith.constant 1.000000e+00 : f32
    %740 = vector.broadcast %cst_134 : f32 to vector<8x128xf32>
    %741 = arith.addf %740, %739 : vector<8x128xf32>
    %742 = arith.divf %740, %741 : vector<8x128xf32>
    %743 = vector.extract_strided_slice %732 {offsets = [0, 128], sizes = [8, 128], strides = [1, 1]} : vector<8x384xf32> to vector<8x128xf32>
    %744 = vector.extract_strided_slice %734 {offsets = [0, 128], sizes = [8, 128], strides = [1, 1]} : vector<8x384xf32> to vector<8x128xf32>
    %745 = arith.addf %743, %744 : vector<8x128xf32>
    %746 = arith.negf %745 : vector<8x128xf32>
    %747 = math.exp %746 : vector<8x128xf32>
    %cst_135 = arith.constant 1.000000e+00 : f32
    %748 = vector.broadcast %cst_135 : f32 to vector<8x128xf32>
    %749 = arith.addf %748, %747 : vector<8x128xf32>
    %750 = arith.divf %748, %749 : vector<8x128xf32>
    %751 = vector.extract_strided_slice %732 {offsets = [0, 256], sizes = [8, 128], strides = [1, 1]} : vector<8x384xf32> to vector<8x128xf32>
    %752 = vector.extract_strided_slice %734 {offsets = [0, 256], sizes = [8, 128], strides = [1, 1]} : vector<8x384xf32> to vector<8x128xf32>
    %753 = arith.addf %752, %13 : vector<8x128xf32>
    %754 = arith.mulf %742, %753 : vector<8x128xf32>
    %755 = arith.addf %751, %754 : vector<8x128xf32>
    %756 = math.tanh %755 : vector<8x128xf32>
    %757 = arith.subf %728, %756 : vector<8x128xf32>
    %758 = arith.mulf %750, %757 : vector<8x128xf32>
    %759 = arith.addf %756, %758 : vector<8x128xf32>
    %c24_i32 = arith.constant 24 : i32
    %c8_i32_136 = arith.constant 8 : i32
    %760 = arith.muli %c24_i32, %c8_i32_136 : i32
    %761 = tpu.assume_multiple %760, 8 : i32
    %762 = arith.index_cast %761 : i32 to index
    %c0_137 = arith.constant 0 : index
    %763 = vector.load %arg10[%762, %c0_137] : memref<224x384xf32, #tpu.memory_space<vmem>>, vector<8x384xf32>
    %764 = arith.truncf %759 : vector<8x128xf32> to vector<8x128xbf16>
    %cst_138 = arith.constant dense<0.000000e+00> : vector<8x384xf32>
    %765 = tpu.matmul %764, %14, %cst_138 {dimension_numbers = #tpu.dot_dimension_numbers<[1], [0], [0], [1], [0, 0, 1, 1], [], []>} : vector<8x128xbf16>, vector<128x384xbf16>, vector<8x384xf32> -> vector<8x384xf32>
    %766 = vector.extract_strided_slice %763 {offsets = [0, 0], sizes = [8, 128], strides = [1, 1]} : vector<8x384xf32> to vector<8x128xf32>
    %767 = vector.extract_strided_slice %765 {offsets = [0, 0], sizes = [8, 128], strides = [1, 1]} : vector<8x384xf32> to vector<8x128xf32>
    %768 = arith.addf %766, %767 : vector<8x128xf32>
    %769 = arith.negf %768 : vector<8x128xf32>
    %770 = math.exp %769 : vector<8x128xf32>
    %cst_139 = arith.constant 1.000000e+00 : f32
    %771 = vector.broadcast %cst_139 : f32 to vector<8x128xf32>
    %772 = arith.addf %771, %770 : vector<8x128xf32>
    %773 = arith.divf %771, %772 : vector<8x128xf32>
    %774 = vector.extract_strided_slice %763 {offsets = [0, 128], sizes = [8, 128], strides = [1, 1]} : vector<8x384xf32> to vector<8x128xf32>
    %775 = vector.extract_strided_slice %765 {offsets = [0, 128], sizes = [8, 128], strides = [1, 1]} : vector<8x384xf32> to vector<8x128xf32>
    %776 = arith.addf %774, %775 : vector<8x128xf32>
    %777 = arith.negf %776 : vector<8x128xf32>
    %778 = math.exp %777 : vector<8x128xf32>
    %cst_140 = arith.constant 1.000000e+00 : f32
    %779 = vector.broadcast %cst_140 : f32 to vector<8x128xf32>
    %780 = arith.addf %779, %778 : vector<8x128xf32>
    %781 = arith.divf %779, %780 : vector<8x128xf32>
    %782 = vector.extract_strided_slice %763 {offsets = [0, 256], sizes = [8, 128], strides = [1, 1]} : vector<8x384xf32> to vector<8x128xf32>
    %783 = vector.extract_strided_slice %765 {offsets = [0, 256], sizes = [8, 128], strides = [1, 1]} : vector<8x384xf32> to vector<8x128xf32>
    %784 = arith.addf %783, %13 : vector<8x128xf32>
    %785 = arith.mulf %773, %784 : vector<8x128xf32>
    %786 = arith.addf %782, %785 : vector<8x128xf32>
    %787 = math.tanh %786 : vector<8x128xf32>
    %788 = arith.subf %759, %787 : vector<8x128xf32>
    %789 = arith.mulf %781, %788 : vector<8x128xf32>
    %790 = arith.addf %787, %789 : vector<8x128xf32>
    %c25_i32 = arith.constant 25 : i32
    %c8_i32_141 = arith.constant 8 : i32
    %791 = arith.muli %c25_i32, %c8_i32_141 : i32
    %792 = tpu.assume_multiple %791, 8 : i32
    %793 = arith.index_cast %792 : i32 to index
    %c0_142 = arith.constant 0 : index
    %794 = vector.load %arg10[%793, %c0_142] : memref<224x384xf32, #tpu.memory_space<vmem>>, vector<8x384xf32>
    %795 = arith.truncf %790 : vector<8x128xf32> to vector<8x128xbf16>
    %cst_143 = arith.constant dense<0.000000e+00> : vector<8x384xf32>
    %796 = tpu.matmul %795, %14, %cst_143 {dimension_numbers = #tpu.dot_dimension_numbers<[1], [0], [0], [1], [0, 0, 1, 1], [], []>} : vector<8x128xbf16>, vector<128x384xbf16>, vector<8x384xf32> -> vector<8x384xf32>
    %797 = vector.extract_strided_slice %794 {offsets = [0, 0], sizes = [8, 128], strides = [1, 1]} : vector<8x384xf32> to vector<8x128xf32>
    %798 = vector.extract_strided_slice %796 {offsets = [0, 0], sizes = [8, 128], strides = [1, 1]} : vector<8x384xf32> to vector<8x128xf32>
    %799 = arith.addf %797, %798 : vector<8x128xf32>
    %800 = arith.negf %799 : vector<8x128xf32>
    %801 = math.exp %800 : vector<8x128xf32>
    %cst_144 = arith.constant 1.000000e+00 : f32
    %802 = vector.broadcast %cst_144 : f32 to vector<8x128xf32>
    %803 = arith.addf %802, %801 : vector<8x128xf32>
    %804 = arith.divf %802, %803 : vector<8x128xf32>
    %805 = vector.extract_strided_slice %794 {offsets = [0, 128], sizes = [8, 128], strides = [1, 1]} : vector<8x384xf32> to vector<8x128xf32>
    %806 = vector.extract_strided_slice %796 {offsets = [0, 128], sizes = [8, 128], strides = [1, 1]} : vector<8x384xf32> to vector<8x128xf32>
    %807 = arith.addf %805, %806 : vector<8x128xf32>
    %808 = arith.negf %807 : vector<8x128xf32>
    %809 = math.exp %808 : vector<8x128xf32>
    %cst_145 = arith.constant 1.000000e+00 : f32
    %810 = vector.broadcast %cst_145 : f32 to vector<8x128xf32>
    %811 = arith.addf %810, %809 : vector<8x128xf32>
    %812 = arith.divf %810, %811 : vector<8x128xf32>
    %813 = vector.extract_strided_slice %794 {offsets = [0, 256], sizes = [8, 128], strides = [1, 1]} : vector<8x384xf32> to vector<8x128xf32>
    %814 = vector.extract_strided_slice %796 {offsets = [0, 256], sizes = [8, 128], strides = [1, 1]} : vector<8x384xf32> to vector<8x128xf32>
    %815 = arith.addf %814, %13 : vector<8x128xf32>
    %816 = arith.mulf %804, %815 : vector<8x128xf32>
    %817 = arith.addf %813, %816 : vector<8x128xf32>
    %818 = math.tanh %817 : vector<8x128xf32>
    %819 = arith.subf %790, %818 : vector<8x128xf32>
    %820 = arith.mulf %812, %819 : vector<8x128xf32>
    %821 = arith.addf %818, %820 : vector<8x128xf32>
    %c26_i32 = arith.constant 26 : i32
    %c8_i32_146 = arith.constant 8 : i32
    %822 = arith.muli %c26_i32, %c8_i32_146 : i32
    %823 = tpu.assume_multiple %822, 8 : i32
    %824 = arith.index_cast %823 : i32 to index
    %c0_147 = arith.constant 0 : index
    %825 = vector.load %arg10[%824, %c0_147] : memref<224x384xf32, #tpu.memory_space<vmem>>, vector<8x384xf32>
    %826 = arith.truncf %821 : vector<8x128xf32> to vector<8x128xbf16>
    %cst_148 = arith.constant dense<0.000000e+00> : vector<8x384xf32>
    %827 = tpu.matmul %826, %14, %cst_148 {dimension_numbers = #tpu.dot_dimension_numbers<[1], [0], [0], [1], [0, 0, 1, 1], [], []>} : vector<8x128xbf16>, vector<128x384xbf16>, vector<8x384xf32> -> vector<8x384xf32>
    %828 = vector.extract_strided_slice %825 {offsets = [0, 0], sizes = [8, 128], strides = [1, 1]} : vector<8x384xf32> to vector<8x128xf32>
    %829 = vector.extract_strided_slice %827 {offsets = [0, 0], sizes = [8, 128], strides = [1, 1]} : vector<8x384xf32> to vector<8x128xf32>
    %830 = arith.addf %828, %829 : vector<8x128xf32>
    %831 = arith.negf %830 : vector<8x128xf32>
    %832 = math.exp %831 : vector<8x128xf32>
    %cst_149 = arith.constant 1.000000e+00 : f32
    %833 = vector.broadcast %cst_149 : f32 to vector<8x128xf32>
    %834 = arith.addf %833, %832 : vector<8x128xf32>
    %835 = arith.divf %833, %834 : vector<8x128xf32>
    %836 = vector.extract_strided_slice %825 {offsets = [0, 128], sizes = [8, 128], strides = [1, 1]} : vector<8x384xf32> to vector<8x128xf32>
    %837 = vector.extract_strided_slice %827 {offsets = [0, 128], sizes = [8, 128], strides = [1, 1]} : vector<8x384xf32> to vector<8x128xf32>
    %838 = arith.addf %836, %837 : vector<8x128xf32>
    %839 = arith.negf %838 : vector<8x128xf32>
    %840 = math.exp %839 : vector<8x128xf32>
    %cst_150 = arith.constant 1.000000e+00 : f32
    %841 = vector.broadcast %cst_150 : f32 to vector<8x128xf32>
    %842 = arith.addf %841, %840 : vector<8x128xf32>
    %843 = arith.divf %841, %842 : vector<8x128xf32>
    %844 = vector.extract_strided_slice %825 {offsets = [0, 256], sizes = [8, 128], strides = [1, 1]} : vector<8x384xf32> to vector<8x128xf32>
    %845 = vector.extract_strided_slice %827 {offsets = [0, 256], sizes = [8, 128], strides = [1, 1]} : vector<8x384xf32> to vector<8x128xf32>
    %846 = arith.addf %845, %13 : vector<8x128xf32>
    %847 = arith.mulf %835, %846 : vector<8x128xf32>
    %848 = arith.addf %844, %847 : vector<8x128xf32>
    %849 = math.tanh %848 : vector<8x128xf32>
    %850 = arith.subf %821, %849 : vector<8x128xf32>
    %851 = arith.mulf %843, %850 : vector<8x128xf32>
    %852 = arith.addf %849, %851 : vector<8x128xf32>
    %c27_i32 = arith.constant 27 : i32
    %c8_i32_151 = arith.constant 8 : i32
    %853 = arith.muli %c27_i32, %c8_i32_151 : i32
    %854 = tpu.assume_multiple %853, 8 : i32
    %855 = arith.index_cast %854 : i32 to index
    %c0_152 = arith.constant 0 : index
    %856 = vector.load %arg10[%855, %c0_152] : memref<224x384xf32, #tpu.memory_space<vmem>>, vector<8x384xf32>
    %857 = arith.truncf %852 : vector<8x128xf32> to vector<8x128xbf16>
    %cst_153 = arith.constant dense<0.000000e+00> : vector<8x384xf32>
    %858 = tpu.matmul %857, %14, %cst_153 {dimension_numbers = #tpu.dot_dimension_numbers<[1], [0], [0], [1], [0, 0, 1, 1], [], []>} : vector<8x128xbf16>, vector<128x384xbf16>, vector<8x384xf32> -> vector<8x384xf32>
    %859 = vector.extract_strided_slice %856 {offsets = [0, 0], sizes = [8, 128], strides = [1, 1]} : vector<8x384xf32> to vector<8x128xf32>
    %860 = vector.extract_strided_slice %858 {offsets = [0, 0], sizes = [8, 128], strides = [1, 1]} : vector<8x384xf32> to vector<8x128xf32>
    %861 = arith.addf %859, %860 : vector<8x128xf32>
    %862 = arith.negf %861 : vector<8x128xf32>
    %863 = math.exp %862 : vector<8x128xf32>
    %cst_154 = arith.constant 1.000000e+00 : f32
    %864 = vector.broadcast %cst_154 : f32 to vector<8x128xf32>
    %865 = arith.addf %864, %863 : vector<8x128xf32>
    %866 = arith.divf %864, %865 : vector<8x128xf32>
    %867 = vector.extract_strided_slice %856 {offsets = [0, 128], sizes = [8, 128], strides = [1, 1]} : vector<8x384xf32> to vector<8x128xf32>
    %868 = vector.extract_strided_slice %858 {offsets = [0, 128], sizes = [8, 128], strides = [1, 1]} : vector<8x384xf32> to vector<8x128xf32>
    %869 = arith.addf %867, %868 : vector<8x128xf32>
    %870 = arith.negf %869 : vector<8x128xf32>
    %871 = math.exp %870 : vector<8x128xf32>
    %cst_155 = arith.constant 1.000000e+00 : f32
    %872 = vector.broadcast %cst_155 : f32 to vector<8x128xf32>
    %873 = arith.addf %872, %871 : vector<8x128xf32>
    %874 = arith.divf %872, %873 : vector<8x128xf32>
    %875 = vector.extract_strided_slice %856 {offsets = [0, 256], sizes = [8, 128], strides = [1, 1]} : vector<8x384xf32> to vector<8x128xf32>
    %876 = vector.extract_strided_slice %858 {offsets = [0, 256], sizes = [8, 128], strides = [1, 1]} : vector<8x384xf32> to vector<8x128xf32>
    %877 = arith.addf %876, %13 : vector<8x128xf32>
    %878 = arith.mulf %866, %877 : vector<8x128xf32>
    %879 = arith.addf %875, %878 : vector<8x128xf32>
    %880 = math.tanh %879 : vector<8x128xf32>
    %881 = arith.subf %852, %880 : vector<8x128xf32>
    %882 = arith.mulf %874, %881 : vector<8x128xf32>
    %883 = arith.addf %880, %882 : vector<8x128xf32>
    %c28_i32 = arith.constant 28 : i32
    %c0_156 = arith.constant 0 : index
    %c0_157 = arith.constant 0 : index
    %884 = vector.load %arg11[%c0_156, %c0_157] : memref<8x128xf32, #tpu.memory_space<vmem>>, vector<8x128xf32>
    tpu.vector_store %arg11[%c0_156, %c0_157], %883 {strides = array<i32>} : memref<8x128xf32, #tpu.memory_space<vmem>>, vector<8x128xf32>,
    %c0_i32_158 = arith.constant 0 : i32
    %885 = arith.cmpi eq, %arg1, %c0_i32_158 : i32
    %886 = arith.extui %885 : i1 to i32
    %c0_i32_159 = arith.constant 0 : i32
    %887 = arith.cmpi ne, %886, %c0_i32_159 : i32
    scf.if %887 {
      %c0_160 = arith.constant 0 : index
      %c0_161 = arith.constant 0 : index
      %888 = vector.load %arg7[%c0_160, %c0_161] : memref<128x128xf32, #tpu.memory_space<vmem>>, vector<128x128xf32>
      %cst_162 = arith.constant dense<0.000000e+00> : vector<8x128xf32>
      %889 = tpu.matmul %883, %888, %cst_162 {dimension_numbers = #tpu.dot_dimension_numbers<[1], [0], [0], [1], [0, 0, 1, 1], [], []>} : vector<8x128xf32>, vector<128x128xf32>, vector<8x128xf32> -> vector<8x128xf32>
      %c0_163 = arith.constant 0 : index
      %c0_164 = arith.constant 0 : index
      %890 = vector.load %arg8[%c0_163, %c0_164] : memref<1x128xf32, #tpu.memory_space<vmem>>, vector<1x128xf32>
      %891 = vector.broadcast %890 : vector<1x128xf32> to vector<8x128xf32>
      %892 = arith.addf %889, %891 : vector<8x128xf32>
      %c0_165 = arith.constant 0 : index
      %c0_166 = arith.constant 0 : index
      %c0_167 = arith.constant 0 : index
      %893 = vector.load %arg9[%c0_165, %c0_166, %c0_167] : memref<1x8x128xf32, #tpu.memory_space<vmem>>, vector<1x8x128xf32>
      %894 = vector.shape_cast %893 : vector<1x8x128xf32> to vector<8x128xf32>
      %895 = vector.shape_cast %892 : vector<8x128xf32> to vector<1x8x128xf32>
      tpu.vector_store %arg9[%c0_165, %c0_166, %c0_167], %895 {strides = array<i32>} : memref<1x8x128xf32, #tpu.memory_space<vmem>>, vector<1x8x128xf32>,
    } else {
    }
    return
  }
  func.func @transform_0(%arg0: i32, %arg1: i32) -> (i32, i32, i32) {
    %c0_i32 = arith.constant 0 : i32
    %c0_i32_0 = arith.constant 0 : i32
    return %arg0, %arg1, %c0_i32 : i32, i32, i32
  }
  func.func @transform_1(%arg0: i32, %arg1: i32) -> (i32, i32) {
    %c0_i32 = arith.constant 0 : i32
    %c0_i32_0 = arith.constant 0 : i32
    %c0_i32_1 = arith.constant 0 : i32
    return %c0_i32, %c0_i32_0 : i32, i32
  }
  func.func @transform_2(%arg0: i32, %arg1: i32) -> (i32, i32) {
    %c0_i32 = arith.constant 0 : i32
    %c0_i32_0 = arith.constant 0 : i32
    %c0_i32_1 = arith.constant 0 : i32
    return %c0_i32, %c0_i32_0 : i32, i32
  }
  func.func @transform_3(%arg0: i32, %arg1: i32) -> (i32, i32) {
    %c0_i32 = arith.constant 0 : i32
    %c0_i32_0 = arith.constant 0 : i32
    %c0_i32_1 = arith.constant 0 : i32
    return %c0_i32, %c0_i32_0 : i32, i32
  }
  func.func @transform_4(%arg0: i32, %arg1: i32) -> (i32, i32) {
    %c0_i32 = arith.constant 0 : i32
    %c0_i32_0 = arith.constant 0 : i32
    %c0_i32_1 = arith.constant 0 : i32
    return %c0_i32, %c0_i32_0 : i32, i32
  }
  func.func @transform_5(%arg0: i32, %arg1: i32) -> (i32, i32) {
    %c0_i32 = arith.constant 0 : i32
    %c0_i32_0 = arith.constant 0 : i32
    %c0_i32_1 = arith.constant 0 : i32
    return %c0_i32, %c0_i32_0 : i32, i32
  }
  func.func @transform_6(%arg0: i32, %arg1: i32) -> (i32, i32) {
    %c0_i32 = arith.constant 0 : i32
    %c0_i32_0 = arith.constant 0 : i32
    %c0_i32_1 = arith.constant 0 : i32
    return %c0_i32, %c0_i32_0 : i32, i32
  }
  func.func @transform_7(%arg0: i32, %arg1: i32) -> (i32, i32, i32) {
    %c0_i32 = arith.constant 0 : i32
    %c0_i32_0 = arith.constant 0 : i32
    %c0_i32_1 = arith.constant 0 : i32
    return %arg0, %c0_i32, %c0_i32_0 : i32, i32, i32
  }
}

</mosaic_0001>

<llo_original>
// kernel: tpu_custom_call.1
$region0: #{tpu_custom_call.1}
  #allocation0 [shape = 'u32[]', space=smem, size = 0x4, offset = 0x4, fixed_abs, tag = 'smem constant byte address 0x4 - core index']
  #allocation1 [shape = 'u32[144,128]{1,0:T(1,128)}', space=vmem, size = 0x12000, scoped, tag = 'internal scratch']
  #allocation2 [shape = 'f32[224,384]{1,0:T(8,128)}', space=vmem, size = 0x54000, scoped, tag = 'scratch operand']
  #allocation3 [shape = 'f32[8,128]{1,0:T(8,128)}', space=vmem, size = 0x1000, scoped, tag = 'scratch operand']
  %s0 = inlined_call_operand.vmem [shape: f32[1,224,28], index: 0, kind: input, shape index: {}]
  %s1 = inlined_call_operand.hbm [shape: f32[28,384], index: 1, kind: input, shape index: {}]
  %s2 = inlined_call_operand.vmem [shape: bf16[128,384], index: 2, kind: input, shape index: {}]
  %s3 = inlined_call_operand.vmem [shape: f32[1,384], index: 3, kind: input, shape index: {}]
  %s4 = inlined_call_operand.vmem [shape: f32[1,128], index: 4, kind: input, shape index: {}]
  %s5 = inlined_call_operand.hbm [shape: f32[128,128], index: 5, kind: input, shape index: {}]
  %s6 = inlined_call_operand.vmem [shape: f32[1,128], index: 6, kind: input, shape index: {}]
  %s7 = inlined_call_operand.hbm [shape: f32[1,8,128], index: 7, kind: output, shape index: {}]
  %s8 = sld [smem:[#allocation0]]
  $region54: #{tpu_custom_call.1} parent=0
    _
  %s10 = ssub.s32 1, %s8
  %s11 = scalar_select 0, %s10, %s8
  $region1: #{tpu_custom_call.1} parent=0
    #allocation4 [shape = 'u8[49152]{0}', space=vmem, size = 0xc000, scoped, tag = 'input window, operand 1, single buffered']
    #allocation5 [shape = 's32[1]{0}', space=sflag, size = 0x4, scoped, tag = 'scoped memory for tpu_custom_call.1']
    #allocation6 [shape = 's32[1]{0}', space=sflag, size = 0x4, scoped, tag = 'scoped memory for tpu_custom_call.1']
    #allocation7 [shape = 'u8[65536]{0}', space=vmem, size = 0x10000, scoped, tag = 'input window, operand 5, single buffered']
    #allocation8 [shape = 's32[1]{0}', space=sflag, size = 0x4, scoped, tag = 'scoped memory for tpu_custom_call.1']
    #allocation9 [shape = 'u8[4096]{0}', space=vmem, size = 0x1000, scoped, tag = 'output window, operand 0, single buffered']
    %12 = vsyncpa [#allocation5], 0
    %13 = vsyncpa [#allocation8], 0
    %14 = vsyncpa [#allocation6], 0
    // Predicated region
    $region2: #{tpu_custom_call.1} parent=1 // pred_check
      _
    $region3: #{tpu_custom_call.1} parent=1 // pred_check_branch
      %16 = sbr.rel (0) target = $region5
    $region4: #{tpu_custom_call.1} parent=1 // pred_region
      _
    $region5: #{tpu_custom_call.1} parent=1 // pred_fallthru
      _
    // Predicated region
    $region6: #{tpu_custom_call.1} parent=1 // pred_check
      _
    $region7: #{tpu_custom_call.1} parent=1 // pred_check_branch
      %18 = sbr.rel (0) target = $region9
    $region8: #{tpu_custom_call.1} parent=1 // pred_region
      %s20 = ssub.s32 1536, 1536
      %21 = vsyncadd [#allocation5], %s20
      %s22 = sshll.u32 [#allocation4], 4
      %s23 = int_to_ptr.vmem [resolvable:$true] %s22
      %28 = dma.hbm_to_vmem [thread:$0]  %s1, 1536, %s23, [#allocation5], 384, 384, 24
    $region9: #{tpu_custom_call.1} parent=1 // pred_fallthru
      _
    // Predicated region
    $region10: #{tpu_custom_call.1} parent=1 // pred_check
      _
    $region11: #{tpu_custom_call.1} parent=1 // pred_check_branch
      %30 = sbr.rel (0) target = $region13
    $region12: #{tpu_custom_call.1} parent=1 // pred_region
      _
    $region13: #{tpu_custom_call.1} parent=1 // pred_fallthru
      _
    // Predicated region
    $region14: #{tpu_custom_call.1} parent=1 // pred_check
      _
    $region15: #{tpu_custom_call.1} parent=1 // pred_check_branch
      %32 = sbr.rel (0) target = $region17
    $region16: #{tpu_custom_call.1} parent=1 // pred_region
      _
    $region17: #{tpu_custom_call.1} parent=1 // pred_fallthru
      _
    // Predicated region
    $region18: #{tpu_custom_call.1} parent=1 // pred_check
      _
    $region19: #{tpu_custom_call.1} parent=1 // pred_check_branch
      %34 = sbr.rel (0) target = $region21
    $region20: #{tpu_custom_call.1} parent=1 // pred_region
      _
    $region21: #{tpu_custom_call.1} parent=1 // pred_fallthru
      _
    // Predicated region
    $region22: #{tpu_custom_call.1} parent=1 // pred_check
      _
    $region23: #{tpu_custom_call.1} parent=1 // pred_check_branch
      %36 = sbr.rel (0) target = $region25
    $region24: #{tpu_custom_call.1} parent=1 // pred_region
      %s38 = ssub.s32 2048, 2048
      %39 = vsyncadd [#allocation8], %s38
      %s40 = sshll.u32 [#allocation7], 4
      %s41 = int_to_ptr.vmem [resolvable:$true] %s40
      %46 = dma.hbm_to_vmem [thread:$0]  %s5, 2048, %s41, [#allocation8], 128, 128, 8
    $region25: #{tpu_custom_call.1} parent=1 // pred_fallthru
      _
    // Predicated region
    $region26: #{tpu_custom_call.1} parent=1 // pred_check
      _
    $region27: #{tpu_custom_call.1} parent=1 // pred_check_branch
      %48 = sbr.rel (0) target = $region29
    $region28: #{tpu_custom_call.1} parent=1 // pred_region
      _
    $region29: #{tpu_custom_call.1} parent=1 // pred_fallthru
      _
    // Predicated region
    $region30: #{tpu_custom_call.1} parent=1 // pred_check
      _
    $region31: #{tpu_custom_call.1} parent=1 // pred_check_branch
      %50 = sbr.rel (0) target = $region33
    $region32: #{tpu_custom_call.1} parent=1 // pred_region
      %51 = dma.done [#allocation5], 1536
    $region33: #{tpu_custom_call.1} parent=1 // pred_fallthru
      _
    // Predicated region
    $region34: #{tpu_custom_call.1} parent=1 // pred_check
      _
    $region35: #{tpu_custom_call.1} parent=1 // pred_check_branch
      %53 = sbr.rel (0) target = $region37
    $region36: #{tpu_custom_call.1} parent=1 // pred_region
      %54 = dma.done [#allocation8], 2048
    $region37: #{tpu_custom_call.1} parent=1 // pred_fallthru
      _
    %p56 = scmp.eq.s32.totalorder 0, 0
    // Predicated region
    $region38: #{tpu_custom_call.1} parent=1 // pred_check
      %p57 = pneg %p56
    $region39: #{tpu_custom_call.1} parent=1 // pred_check_branch
      %59 = sbr.rel (%p57) target = $region41
    $region40: #{tpu_custom_call.1} parent=1 // pred_region
      %60 = vst [vmem:[#allocation3] sm:$0xff] 0.0
    $region41: #{tpu_custom_call.1} parent=1 // pred_fallthru
      _
    %v61 = vld [vmem:[%s0] sm:$0xff]
    %v62 = vld [vmem:[%s0 + $0x8] sm:$0xff]
    %v63 = vld [vmem:[%s0 + $0x10] sm:$0xff]
    %v64 = vld [vmem:[%s0 + $0x18] sm:$0xff]
    %v65 = vld [vmem:[%s0 + $0x20] sm:$0xff]
    %v66 = vld [vmem:[%s0 + $0x28] sm:$0xff]
    %v67 = vld [vmem:[%s0 + $0x30] sm:$0xff]
    %v68 = vld [vmem:[%s0 + $0x38] sm:$0xff]
    %v69 = vld [vmem:[%s0 + $0x40] sm:$0xff]
    %v70 = vld [vmem:[%s0 + $0x48] sm:$0xff]
    %v71 = vld [vmem:[%s0 + $0x50] sm:$0xff]
    %v72 = vld [vmem:[%s0 + $0x58] sm:$0xff]
    %v73 = vld [vmem:[%s0 + $0x60] sm:$0xff]
    %v74 = vld [vmem:[%s0 + $0x68] sm:$0xff]
    %v75 = vld [vmem:[%s0 + $0x70] sm:$0xff]
    %v76 = vld [vmem:[%s0 + $0x78] sm:$0xff]
    %v77 = vld [vmem:[%s0 + $0x80] sm:$0xff]
    %v78 = vld [vmem:[%s0 + $0x88] sm:$0xff]
    %v79 = vld [vmem:[%s0 + $0x90] sm:$0xff]
    %v80 = vld [vmem:[%s0 + $0x98] sm:$0xff]
    %v81 = vld [vmem:[%s0 + $0xa0] sm:$0xff]
    %v82 = vld [vmem:[%s0 + $0xa8] sm:$0xff]
    %v83 = vld [vmem:[%s0 + $0xb0] sm:$0xff]
    %v84 = vld [vmem:[%s0 + $0xb8] sm:$0xff]
    %v85 = vld [vmem:[%s0 + $0xc0] sm:$0xff]
    %v86 = vld [vmem:[%s0 + $0xc8] sm:$0xff]
    %v87 = vld [vmem:[%s0 + $0xd0] sm:$0xff]
    %v88 = vld [vmem:[%s0 + $0xd8] sm:$0xff]
    %v89 = vld [vmem:[#allocation4] sm:$0xff]
    %v90 = vld [vmem:[#allocation4 + $0x8] sm:$0xff]
    %v91 = vld [vmem:[#allocation4 + $0x10] sm:$0xff]
    %v92 = vld [vmem:[#allocation4 + $0x18] sm:$0xff]
    %v93 = vld [vmem:[#allocation4 + $0x20] sm:$0xff]
    %v94 = vld [vmem:[#allocation4 + $0x28] sm:$0xff]
    %v95 = vld [vmem:[#allocation4 + $0x30] sm:$0xff]
    %v96 = vld [vmem:[#allocation4 + $0x38] sm:$0xff]
    %v97 = vld [vmem:[#allocation4 + $0x40] sm:$0xff]
    %v98 = vld [vmem:[#allocation4 + $0x48] sm:$0xf]
    %v99 = vld [vmem:[#allocation4 + $0x50] sm:$0xf]
    %v100 = vld [vmem:[#allocation4 + $0x58] sm:$0xf]
    %v101 = vld [vmem:[%s3] sm:$0x7]
    %v103 = vlaneseq
    %v104 = vshrl.u32 %v103, 7
    %v105 = vsub.s32 0, %v104
    %v106 = vrot.slane %v101, %v105
    %v107 = vlaneseq
    %v108 = vshrl.u32 %v107, 7
    %v109 = vsub.s32 1, %v108
    %v110 = vrot.slane %v101, %v109
    %v111 = vlaneseq
    %v112 = vshrl.u32 %v111, 7
    %v113 = vsub.s32 2, %v112
    %v114 = vrot.slane %v101, %v113
    %vm118 = vcmask 228352
    %v120 = vsel %vm118, %v61, 0
    %v123 = vsel %vm118, %v62, 0
    %v126 = vsel %vm118, %v63, 0
    %v129 = vsel %vm118, %v64, 0
    %v132 = vsel %vm118, %v65, 0
    %v135 = vsel %vm118, %v66, 0
    %v138 = vsel %vm118, %v67, 0
    %v141 = vsel %vm118, %v68, 0
    %v144 = vsel %vm118, %v69, 0
    %v147 = vsel %vm118, %v70, 0
    %v150 = vsel %vm118, %v71, 0
    %v153 = vsel %vm118, %v72, 0
    %v156 = vsel %vm118, %v73, 0
    %v159 = vsel %vm118, %v74, 0
    %v162 = vsel %vm118, %v75, 0
    %v165 = vsel %vm118, %v76, 0
    %v168 = vsel %vm118, %v77, 0
    %v171 = vsel %vm118, %v78, 0
    %v174 = vsel %vm118, %v79, 0
    %v177 = vsel %vm118, %v80, 0
    %v180 = vsel %vm118, %v81, 0
    %v183 = vsel %vm118, %v82, 0
    %v186 = vsel %vm118, %v83, 0
    %v189 = vsel %vm118, %v84, 0
    %v192 = vsel %vm118, %v85, 0
    %v195 = vsel %vm118, %v86, 0
    %v198 = vsel %vm118, %v87, 0
    %v201 = vsel %vm118, %v88, 0
    %vm203 = vcmask 1043456
    %v205 = vsel %vm203, %v98, 0
    %v208 = vsel %vm203, %v99, 0
    %v211 = vsel %vm203, %v100, 0
    %213 = vmatprep.subr.mxu0 %v90
    %214 = vmatpush1.msra.mxu0 %v89
    %215 = vmatprep.subr.mxu0 %v93
    %216 = vmatpush1.msra.mxu0 %v92
    %217 = vmatprep.subr.mxu0 %v96
    %218 = vmatpush1.msra.mxu0 %v95
    %219 = vmatprep.subr.mxu0 %v208
    %220 = vmatpush1.msra.mxu0 %v205
    %221 = vmatprep.subr.mxu0 0.0
    %222 = vmatpush1.msra.mxu0 0.0
    %223 = vmatprep.subr.mxu0 0.0
    %224 = vmatpush1.msra.mxu0 0.0
    %225 = vmatprep.subr.mxu0 0.0
    %226 = vmatpush1.msra.mxu0 0.0
    %227 = vmatprep.subr.mxu0 0.0
    %228 = vmatpush1.msra.mxu0 0.0
    %229 = vmatprep.subr.mxu0 0.0
    %230 = vmatpush1.msra.mxu0 0.0
    %231 = vmatprep.subr.mxu0 0.0
    %232 = vmatpush1.msra.mxu0 0.0
    %233 = vmatprep.subr.mxu0 0.0
    %234 = vmatpush1.msra.mxu0 0.0
    %235 = vmatprep.subr.mxu0 0.0
    %236 = vmatpush1.msra.mxu0 0.0
    %237 = vmatprep.subr.mxu0 0.0
    %238 = vmatpush1.msra.mxu0 0.0
    %239 = vmatprep.subr.mxu0 0.0
    %240 = vmatpush1.msra.mxu0 0.0
    %241 = vmatprep.subr.mxu0 0.0
    %242 = vmatpush1.msra.mxu0 0.0
    %243 = vmatprep.subr.mxu0 0.0
    %244 = vmatpush1.msra.mxu0 0.0
    %245 = vmatprep.subr.mxu0 0.0
    %246 = vmatpush1.msra.mxu0 0.0
    %247 = vmatprep.subr.mxu0 0.0
    %248 = vmatpush1.msra.mxu0 0.0
    %249 = vmatprep.subr.mxu0 0.0
    %250 = vmatpush1.msra.mxu0 0.0
    %251 = vmatprep.subr.mxu0 0.0
    %252 = vmatpush1.msra.mxu0 0.0
    %253 = vmatprep.subr.mxu0 0.0
    %254 = vmatpush1.msra.mxu0 0.0
    %255 = vmatprep.subr.mxu0 0.0
    %256 = vmatpush1.msra.mxu0 0.0
    %257 = vmatprep.subr.mxu0 0.0
    %258 = vmatpush1.msra.mxu0 0.0
    %259 = vmatprep.subr.mxu0 0.0
    %260 = vmatpush1.msra.mxu0 0.0
    %261 = vmatprep.subr.mxu0 0.0
    %262 = vmatpush1.msra.mxu0 0.0
    %263 = vmatprep.subr.mxu0 0.0
    %264 = vmatpush1.msra.mxu0 0.0
    %265 = vmatprep.subr.mxu0 0.0
    %266 = vmatpush1.msra.mxu0 0.0
    %267 = vmatprep.subr.mxu0 0.0
    %268 = vmatpush1.msra.mxu0 0.0
    %269 = vmatprep.subr.mxu0 0.0
    %270 = vmatpush1.msra.mxu0 0.0
    %271 = vmatprep.subr.mxu0 0.0
    %272 = vmatpush1.msra.mxu0 0.0
    %273 = vmatprep.subr.mxu0 0.0
    %274 = vmatpush1.msra.mxu0 0.0
    %275 = vmatprep.subr.mxu0 0.0
    %276 = vmatpush1.msra.mxu0 0.0
    %277 = vmatprep.mubr.f32.mxu0 0.0
    %278 = vmatmul.mubr.f32.gmra.mrb[0].mxu0 %v120
    %v279 = vpop.f32.mrb[0].mxu0
    %v280 = vadd.f32 %v106, %v279
    %v281 = vpop.f32.mrb[0].mxu0
    %v282 = vadd.f32 %v110, %v281
    %283 = vmatprep.mubr.f32.mxu0 0.0
    %284 = vmatmul.mubr.f32.gmra.mrb[0].mxu0 %v123
    %v285 = vpop.f32.mrb[0].mxu0
    %v286 = vadd.f32 %v106, %v285
    %v287 = vpop.f32.mrb[0].mxu0
    %v288 = vadd.f32 %v110, %v287
    %289 = vmatprep.mubr.f32.mxu0 0.0
    %290 = vmatmul.mubr.f32.gmra.mrb[0].mxu0 %v126
    %v291 = vpop.f32.mrb[0].mxu0
    %v292 = vadd.f32 %v106, %v291
    %v293 = vpop.f32.mrb[0].mxu0
    %v294 = vadd.f32 %v110, %v293
    %295 = vmatprep.mubr.f32.mxu0 0.0
    %296 = vmatmul.mubr.f32.gmra.mrb[0].mxu0 %v129
    %v297 = vpop.f32.mrb[0].mxu0
    %v298 = vadd.f32 %v106, %v297
    %v299 = vpop.f32.mrb[0].mxu0
    %v300 = vadd.f32 %v110, %v299
    %301 = vmatprep.mubr.f32.mxu0 0.0
    %302 = vmatmul.mubr.f32.gmra.mrb[0].mxu0 %v132
    %v303 = vpop.f32.mrb[0].mxu0
    %v304 = vadd.f32 %v106, %v303
    %v305 = vpop.f32.mrb[0].mxu0
    %v306 = vadd.f32 %v110, %v305
    %307 = vmatprep.mubr.f32.mxu0 0.0
    %308 = vmatmul.mubr.f32.gmra.mrb[0].mxu0 %v135
    %v309 = vpop.f32.mrb[0].mxu0
    %v310 = vadd.f32 %v106, %v309
    %v311 = vpop.f32.mrb[0].mxu0
    %v312 = vadd.f32 %v110, %v311
    %313 = vmatprep.mubr.f32.mxu0 0.0
    %314 = vmatmul.mubr.f32.gmra.mrb[0].mxu0 %v138
    %v315 = vpop.f32.mrb[0].mxu0
    %v316 = vadd.f32 %v106, %v315
    %v317 = vpop.f32.mrb[0].mxu0
    %v318 = vadd.f32 %v110, %v317
    %319 = vmatprep.mubr.f32.mxu0 0.0
    %320 = vmatmul.mubr.f32.gmra.mrb[0].mxu0 %v141
    %v321 = vpop.f32.mrb[0].mxu0
    %v322 = vadd.f32 %v106, %v321
    %v323 = vpop.f32.mrb[0].mxu0
    %v324 = vadd.f32 %v110, %v323
    %325 = vmatprep.mubr.f32.mxu0 0.0
    %326 = vmatmul.mubr.f32.gmra.mrb[0].mxu0 %v144
    %v327 = vpop.f32.mrb[0].mxu0
    %v328 = vadd.f32 %v106, %v327
    %v329 = vpop.f32.mrb[0].mxu0
    %v330 = vadd.f32 %v110, %v329
    %331 = vmatprep.mubr.f32.mxu0 0.0
    %332 = vmatmul.mubr.f32.gmra.mrb[0].mxu0 %v147
    %v333 = vpop.f32.mrb[0].mxu0
    %v334 = vadd.f32 %v106, %v333
    %v335 = vpop.f32.mrb[0].mxu0
    %v336 = vadd.f32 %v110, %v335
    %337 = vmatprep.mubr.f32.mxu0 0.0
    %338 = vmatmul.mubr.f32.gmra.mrb[0].mxu0 %v150
    %v339 = vpop.f32.mrb[0].mxu0
    %v340 = vadd.f32 %v106, %v339
    %v341 = vpop.f32.mrb[0].mxu0
    %v342 = vadd.f32 %v110, %v341
    %343 = vmatprep.mubr.f32.mxu0 0.0
    %344 = vmatmul.mubr.f32.gmra.mrb[0].mxu0 %v153
    %v345 = vpop.f32.mrb[0].mxu0
    %v346 = vadd.f32 %v106, %v345
    %v347 = vpop.f32.mrb[0].mxu0
    %v348 = vadd.f32 %v110, %v347
    %349 = vmatprep.mubr.f32.mxu0 0.0
    %350 = vmatmul.mubr.f32.gmra.mrb[0].mxu0 %v156
    %v351 = vpop.f32.mrb[0].mxu0
    %v352 = vadd.f32 %v106, %v351
    %v353 = vpop.f32.mrb[0].mxu0
    %v354 = vadd.f32 %v110, %v353
    %355 = vmatprep.mubr.f32.mxu0 0.0
    %356 = vmatmul.mubr.f32.gmra.mrb[0].mxu0 %v159
    %v357 = vpop.f32.mrb[0].mxu0
    %v358 = vadd.f32 %v106, %v357
    %v359 = vpop.f32.mrb[0].mxu0
    %v360 = vadd.f32 %v110, %v359
    %361 = vmatprep.mubr.f32.mxu0 0.0
    %362 = vmatmul.mubr.f32.gmra.mrb[0].mxu0 %v162
    %v363 = vpop.f32.mrb[0].mxu0
    %v364 = vadd.f32 %v106, %v363
    %v365 = vpop.f32.mrb[0].mxu0
    %v366 = vadd.f32 %v110, %v365
    %367 = vmatprep.mubr.f32.mxu0 0.0
    %368 = vmatmul.mubr.f32.gmra.mrb[0].mxu0 %v165
    %v369 = vpop.f32.mrb[0].mxu0
    %v370 = vadd.f32 %v106, %v369
    %v371 = vpop.f32.mrb[0].mxu0
    %v372 = vadd.f32 %v110, %v371
    %373 = vmatprep.mubr.f32.mxu0 0.0
    %374 = vmatmul.mubr.f32.gmra.mrb[0].mxu0 %v168
    %v375 = vpop.f32.mrb[0].mxu0
    %v376 = vadd.f32 %v106, %v375
    %v377 = vpop.f32.mrb[0].mxu0
    %v378 = vadd.f32 %v110, %v377
    %379 = vmatprep.mubr.f32.mxu0 0.0
    %380 = vmatmul.mubr.f32.gmra.mrb[0].mxu0 %v171
    %v381 = vpop.f32.mrb[0].mxu0
    %v382 = vadd.f32 %v106, %v381
    %v383 = vpop.f32.mrb[0].mxu0
    %v384 = vadd.f32 %v110, %v383
    %385 = vmatprep.mubr.f32.mxu0 0.0
    %386 = vmatmul.mubr.f32.gmra.mrb[0].mxu0 %v174
    %v387 = vpop.f32.mrb[0].mxu0
    %v388 = vadd.f32 %v106, %v387
    %v389 = vpop.f32.mrb[0].mxu0
    %v390 = vadd.f32 %v110, %v389
    %391 = vmatprep.mubr.f32.mxu0 0.0
    %392 = vmatmul.mubr.f32.gmra.mrb[0].mxu0 %v177
    %v393 = vpop.f32.mrb[0].mxu0
    %v394 = vadd.f32 %v106, %v393
    %v395 = vpop.f32.mrb[0].mxu0
    %v396 = vadd.f32 %v110, %v395
    %397 = vmatprep.mubr.f32.mxu0 0.0
    %398 = vmatmul.mubr.f32.gmra.mrb[0].mxu0 %v180
    %v399 = vpop.f32.mrb[0].mxu0
    %v400 = vadd.f32 %v106, %v399
    %v401 = vpop.f32.mrb[0].mxu0
    %v402 = vadd.f32 %v110, %v401
    %403 = vmatprep.mubr.f32.mxu0 0.0
    %404 = vmatmul.mubr.f32.gmra.mrb[0].mxu0 %v183
    %v405 = vpop.f32.mrb[0].mxu0
    %v406 = vadd.f32 %v106, %v405
    %v407 = vpop.f32.mrb[0].mxu0
    %v408 = vadd.f32 %v110, %v407
    %409 = vmatprep.mubr.f32.mxu0 0.0
    %410 = vmatmul.mubr.f32.gmra.mrb[0].mxu0 %v186
    %v411 = vpop.f32.mrb[0].mxu0
    %v412 = vadd.f32 %v106, %v411
    %v413 = vpop.f32.mrb[0].mxu0
    %v414 = vadd.f32 %v110, %v413
    %415 = vmatprep.mubr.f32.mxu0 0.0
    %416 = vmatmul.mubr.f32.gmra.mrb[0].mxu0 %v189
    %v417 = vpop.f32.mrb[0].mxu0
    %v418 = vadd.f32 %v106, %v417
    %v419 = vpop.f32.mrb[0].mxu0
    %v420 = vadd.f32 %v110, %v419
    %421 = vmatprep.mubr.f32.mxu0 0.0
    %422 = vmatmul.mubr.f32.gmra.mrb[0].mxu0 %v192
    %v423 = vpop.f32.mrb[0].mxu0
    %v424 = vadd.f32 %v106, %v423
    %v425 = vpop.f32.mrb[0].mxu0
    %v426 = vadd.f32 %v110, %v425
    %427 = vmatprep.mubr.f32.mxu0 0.0
    %428 = vmatmul.mubr.f32.gmra.mrb[0].mxu0 %v195
    %v429 = vpop.f32.mrb[0].mxu0
    %v430 = vadd.f32 %v106, %v429
    %v431 = vpop.f32.mrb[0].mxu0
    %v432 = vadd.f32 %v110, %v431
    %433 = vmatprep.mubr.f32.mxu0 0.0
    %434 = vmatmul.mubr.f32.gmra.mrb[0].mxu0 %v198
    %v435 = vpop.f32.mrb[0].mxu0
    %v436 = vadd.f32 %v106, %v435
    %v437 = vpop.f32.mrb[0].mxu0
    %v438 = vadd.f32 %v110, %v437
    %439 = vmatprep.mubr.f32.mxu0 0.0
    %440 = vmatmul.mubr.f32.gmra.mrb[0].mxu0 %v201
    %v441 = vpop.f32.mrb[0].mxu0
    %v442 = vadd.f32 %v106, %v441
    %v443 = vpop.f32.mrb[0].mxu0
    %v444 = vadd.f32 %v110, %v443
    %445 = vdwg.mxu0
    %446 = vmatprep.subr.mxu0 0.0
    %447 = vmatpush1.msra.mxu0 %v91
    %448 = vmatprep.subr.mxu0 0.0
    %449 = vmatpush1.msra.mxu0 %v94
    %450 = vmatprep.subr.mxu0 0.0
    %451 = vmatpush1.msra.mxu0 %v97
    %452 = vmatprep.subr.mxu0 0.0
    %453 = vmatpush1.msra.mxu0 %v211
    %454 = vmatprep.subr.mxu0 0.0
    %455 = vmatpush1.msra.mxu0 0.0
    %456 = vmatprep.subr.mxu0 0.0
    %457 = vmatpush1.msra.mxu0 0.0
    %458 = vmatprep.subr.mxu0 0.0
    %459 = vmatpush1.msra.mxu0 0.0
    %460 = vmatprep.subr.mxu0 0.0
    %461 = vmatpush1.msra.mxu0 0.0
    %462 = vmatprep.subr.mxu0 0.0
    %463 = vmatpush1.msra.mxu0 0.0
    %464 = vmatprep.subr.mxu0 0.0
    %465 = vmatpush1.msra.mxu0 0.0
    %466 = vmatprep.subr.mxu0 0.0
    %467 = vmatpush1.msra.mxu0 0.0
    %468 = vmatprep.subr.mxu0 0.0
    %469 = vmatpush1.msra.mxu0 0.0
    %470 = vmatprep.subr.mxu0 0.0
    %471 = vmatpush1.msra.mxu0 0.0
    %472 = vmatprep.subr.mxu0 0.0
    %473 = vmatpush1.msra.mxu0 0.0
    %474 = vmatprep.subr.mxu0 0.0
    %475 = vmatpush1.msra.mxu0 0.0
    %476 = vmatprep.subr.mxu0 0.0
    %477 = vmatpush1.msra.mxu0 0.0
    %478 = vmatprep.subr.mxu0 0.0
    %479 = vmatpush1.msra.mxu0 0.0
    %480 = vmatprep.subr.mxu0 0.0
    %481 = vmatpush1.msra.mxu0 0.0
    %482 = vmatprep.subr.mxu0 0.0
    %483 = vmatpush1.msra.mxu0 0.0
    %484 = vmatprep.subr.mxu0 0.0
    %485 = vmatpush1.msra.mxu0 0.0
    %486 = vmatprep.subr.mxu0 0.0
    %487 = vmatpush1.msra.mxu0 0.0
    %488 = vmatprep.subr.mxu0 0.0
    %489 = vmatpush1.msra.mxu0 0.0
    %490 = vmatprep.subr.mxu0 0.0
    %491 = vmatpush1.msra.mxu0 0.0
    %492 = vmatprep.subr.mxu0 0.0
    %493 = vmatpush1.msra.mxu0 0.0
    %494 = vmatprep.subr.mxu0 0.0
    %495 = vmatpush1.msra.mxu0 0.0
    %496 = vmatprep.subr.mxu0 0.0
    %497 = vmatpush1.msra.mxu0 0.0
    %498 = vmatprep.subr.mxu0 0.0
    %499 = vmatpush1.msra.mxu0 0.0
    %500 = vmatprep.subr.mxu0 0.0
    %501 = vmatpush1.msra.mxu0 0.0
    %502 = vmatprep.subr.mxu0 0.0
    %503 = vmatpush1.msra.mxu0 0.0
    %504 = vmatprep.subr.mxu0 0.0
    %505 = vmatpush1.msra.mxu0 0.0
    %506 = vmatprep.subr.mxu0 0.0
    %507 = vmatpush1.msra.mxu0 0.0
    %508 = vmatprep.subr.mxu0 0.0
    %509 = vmatpush1.msra.mxu0 0.0
    %510 = vmatprep.mubr.f32.mxu0 0.0
    %511 = vmatmul.mubr.f32.gmra.mrb[0].mxu0 %v120
    %v512 = vpop.f32.mrb[0].mxu0
    %v513 = vadd.f32 %v114, %v512
    %v514 = vpop.f32.mrb[0].mxu0
    %515 = vmatprep.mubr.f32.mxu0 0.0
    %516 = vmatmul.mubr.f32.gmra.mrb[0].mxu0 %v123
    %v517 = vpop.f32.mrb[0].mxu0
    %v518 = vadd.f32 %v114, %v517
    %v519 = vpop.f32.mrb[0].mxu0
    %520 = vmatprep.mubr.f32.mxu0 0.0
    %521 = vmatmul.mubr.f32.gmra.mrb[0].mxu0 %v126
    %v522 = vpop.f32.mrb[0].mxu0
    %v523 = vadd.f32 %v114, %v522
    %v524 = vpop.f32.mrb[0].mxu0
    %525 = vmatprep.mubr.f32.mxu0 0.0
    %526 = vmatmul.mubr.f32.gmra.mrb[0].mxu0 %v129
    %v527 = vpop.f32.mrb[0].mxu0
    %v528 = vadd.f32 %v114, %v527
    %v529 = vpop.f32.mrb[0].mxu0
    %530 = vmatprep.mubr.f32.mxu0 0.0
    %531 = vmatmul.mubr.f32.gmra.mrb[0].mxu0 %v132
    %v532 = vpop.f32.mrb[0].mxu0
    %v533 = vadd.f32 %v114, %v532
    %v534 = vpop.f32.mrb[0].mxu0
    %535 = vmatprep.mubr.f32.mxu0 0.0
    %536 = vmatmul.mubr.f32.gmra.mrb[0].mxu0 %v135
    %v537 = vpop.f32.mrb[0].mxu0
    %v538 = vadd.f32 %v114, %v537
    %v539 = vpop.f32.mrb[0].mxu0
    %540 = vmatprep.mubr.f32.mxu0 0.0
    %541 = vmatmul.mubr.f32.gmra.mrb[0].mxu0 %v138
    %v542 = vpop.f32.mrb[0].mxu0
    %v543 = vadd.f32 %v114, %v542
    %v544 = vpop.f32.mrb[0].mxu0
    %545 = vmatprep.mubr.f32.mxu0 0.0
    %546 = vmatmul.mubr.f32.gmra.mrb[0].mxu0 %v141
    %v547 = vpop.f32.mrb[0].mxu0
    %v548 = vadd.f32 %v114, %v547
    %v549 = vpop.f32.mrb[0].mxu0
    %550 = vmatprep.mubr.f32.mxu0 0.0
    %551 = vmatmul.mubr.f32.gmra.mrb[0].mxu0 %v144
    %v552 = vpop.f32.mrb[0].mxu0
    %v553 = vadd.f32 %v114, %v552
    %v554 = vpop.f32.mrb[0].mxu0
    %555 = vmatprep.mubr.f32.mxu0 0.0
    %556 = vmatmul.mubr.f32.gmra.mrb[0].mxu0 %v147
    %v557 = vpop.f32.mrb[0].mxu0
    %v558 = vadd.f32 %v114, %v557
    %v559 = vpop.f32.mrb[0].mxu0
    %560 = vmatprep.mubr.f32.mxu0 0.0
    %561 = vmatmul.mubr.f32.gmra.mrb[0].mxu0 %v150
    %v562 = vpop.f32.mrb[0].mxu0
    %v563 = vadd.f32 %v114, %v562
    %v564 = vpop.f32.mrb[0].mxu0
    %565 = vmatprep.mubr.f32.mxu0 0.0
    %566 = vmatmul.mubr.f32.gmra.mrb[0].mxu0 %v153
    %v567 = vpop.f32.mrb[0].mxu0
    %v568 = vadd.f32 %v114, %v567
    %v569 = vpop.f32.mrb[0].mxu0
    %570 = vmatprep.mubr.f32.mxu0 0.0
    %571 = vmatmul.mubr.f32.gmra.mrb[0].mxu0 %v156
    %v572 = vpop.f32.mrb[0].mxu0
    %v573 = vadd.f32 %v114, %v572
    %v574 = vpop.f32.mrb[0].mxu0
    %575 = vmatprep.mubr.f32.mxu0 0.0
    %576 = vmatmul.mubr.f32.gmra.mrb[0].mxu0 %v159
    %v577 = vpop.f32.mrb[0].mxu0
    %v578 = vadd.f32 %v114, %v577
    %v579 = vpop.f32.mrb[0].mxu0
    %580 = vmatprep.mubr.f32.mxu0 0.0
    %581 = vmatmul.mubr.f32.gmra.mrb[0].mxu0 %v162
    %v582 = vpop.f32.mrb[0].mxu0
    %v583 = vadd.f32 %v114, %v582
    %v584 = vpop.f32.mrb[0].mxu0
    %585 = vmatprep.mubr.f32.mxu0 0.0
    %586 = vmatmul.mubr.f32.gmra.mrb[0].mxu0 %v165
    %v587 = vpop.f32.mrb[0].mxu0
    %v588 = vadd.f32 %v114, %v587
    %v589 = vpop.f32.mrb[0].mxu0
    %590 = vmatprep.mubr.f32.mxu0 0.0
    %591 = vmatmul.mubr.f32.gmra.mrb[0].mxu0 %v168
    %v592 = vpop.f32.mrb[0].mxu0
    %v593 = vadd.f32 %v114, %v592
    %v594 = vpop.f32.mrb[0].mxu0
    %595 = vmatprep.mubr.f32.mxu0 0.0
    %596 = vmatmul.mubr.f32.gmra.mrb[0].mxu0 %v171
    %v597 = vpop.f32.mrb[0].mxu0
    %v598 = vadd.f32 %v114, %v597
    %v599 = vpop.f32.mrb[0].mxu0
    %600 = vmatprep.mubr.f32.mxu0 0.0
    %601 = vmatmul.mubr.f32.gmra.mrb[0].mxu0 %v174
    %v602 = vpop.f32.mrb[0].mxu0
    %v603 = vadd.f32 %v114, %v602
    %v604 = vpop.f32.mrb[0].mxu0
    %605 = vmatprep.mubr.f32.mxu0 0.0
    %606 = vmatmul.mubr.f32.gmra.mrb[0].mxu0 %v177
    %v607 = vpop.f32.mrb[0].mxu0
    %v608 = vadd.f32 %v114, %v607
    %v609 = vpop.f32.mrb[0].mxu0
    %610 = vmatprep.mubr.f32.mxu0 0.0
    %611 = vmatmul.mubr.f32.gmra.mrb[0].mxu0 %v180
    %v612 = vpop.f32.mrb[0].mxu0
    %v613 = vadd.f32 %v114, %v612
    %v614 = vpop.f32.mrb[0].mxu0
    %615 = vmatprep.mubr.f32.mxu0 0.0
    %616 = vmatmul.mubr.f32.gmra.mrb[0].mxu0 %v183
    %v617 = vpop.f32.mrb[0].mxu0
    %v618 = vadd.f32 %v114, %v617
    %v619 = vpop.f32.mrb[0].mxu0
    %620 = vmatprep.mubr.f32.mxu0 0.0
    %621 = vmatmul.mubr.f32.gmra.mrb[0].mxu0 %v186
    %v622 = vpop.f32.mrb[0].mxu0
    %v623 = vadd.f32 %v114, %v622
    %v624 = vpop.f32.mrb[0].mxu0
    %625 = vmatprep.mubr.f32.mxu0 0.0
    %626 = vmatmul.mubr.f32.gmra.mrb[0].mxu0 %v189
    %v627 = vpop.f32.mrb[0].mxu0
    %v628 = vadd.f32 %v114, %v627
    %v629 = vpop.f32.mrb[0].mxu0
    %630 = vmatprep.mubr.f32.mxu0 0.0
    %631 = vmatmul.mubr.f32.gmra.mrb[0].mxu0 %v192
    %v632 = vpop.f32.mrb[0].mxu0
    %v633 = vadd.f32 %v114, %v632
    %v634 = vpop.f32.mrb[0].mxu0
    %635 = vmatprep.mubr.f32.mxu0 0.0
    %636 = vmatmul.mubr.f32.gmra.mrb[0].mxu0 %v195
    %v637 = vpop.f32.mrb[0].mxu0
    %v638 = vadd.f32 %v114, %v637
    %v639 = vpop.f32.mrb[0].mxu0
    %640 = vmatprep.mubr.f32.mxu0 0.0
    %641 = vmatmul.mubr.f32.gmra.mrb[0].mxu0 %v198
    %v642 = vpop.f32.mrb[0].mxu0
    %v643 = vadd.f32 %v114, %v642
    %v644 = vpop.f32.mrb[0].mxu0
    %645 = vmatprep.mubr.f32.mxu0 0.0
    %646 = vmatmul.mubr.f32.gmra.mrb[0].mxu0 %v201
    %v647 = vpop.f32.mrb[0].mxu0
    %v648 = vadd.f32 %v114, %v647
    %v649 = vpop.f32.mrb[0].mxu0
    %650 = vdwg.mxu0
    %651 = vst [vmem:[#allocation2] sm:$0xff] %v280
    %652 = vst [vmem:[#allocation2 + $0x8] sm:$0xff] %v282
    %653 = vst [vmem:[#allocation2 + $0x10] sm:$0xff] %v513
    %654 = vst [vmem:[#allocation2 + $0x18] sm:$0xff] %v286
    %655 = vst [vmem:[#allocation2 + $0x20] sm:$0xff] %v288
    %656 = vst [vmem:[#allocation2 + $0x28] sm:$0xff] %v518
    %657 = vst [vmem:[#allocation2 + $0x30] sm:$0xff] %v292
    %658 = vst [vmem:[#allocation2 + $0x38] sm:$0xff] %v294
    %659 = vst [vmem:[#allocation2 + $0x40] sm:$0xff] %v523
    %660 = vst [vmem:[#allocation2 + $0x48] sm:$0xff] %v298
    %661 = vst [vmem:[#allocation2 + $0x50] sm:$0xff] %v300
    %662 = vst [vmem:[#allocation2 + $0x58] sm:$0xff] %v528
    %663 = vst [vmem:[#allocation2 + $0x60] sm:$0xff] %v304
    %664 = vst [vmem:[#allocation2 + $0x68] sm:$0xff] %v306
    %665 = vst [vmem:[#allocation2 + $0x70] sm:$0xff] %v533
    %666 = vst [vmem:[#allocation2 + $0x78] sm:$0xff] %v310
    %667 = vst [vmem:[#allocation2 + $0x80] sm:$0xff] %v312
    %668 = vst [vmem:[#allocation2 + $0x88] sm:$0xff] %v538
    %669 = vst [vmem:[#allocation2 + $0x90] sm:$0xff] %v316
    %670 = vst [vmem:[#allocation2 + $0x98] sm:$0xff] %v318
    %671 = vst [vmem:[#allocation2 + $0xa0] sm:$0xff] %v543
    %672 = vst [vmem:[#allocation2 + $0xa8] sm:$0xff] %v322
    %673 = vst [vmem:[#allocation2 + $0xb0] sm:$0xff] %v324
    %674 = vst [vmem:[#allocation2 + $0xb8] sm:$0xff] %v548
    %675 = vst [vmem:[#allocation2 + $0xc0] sm:$0xff] %v328
    %676 = vst [vmem:[#allocation2 + $0xc8] sm:$0xff] %v330
    %677 = vst [vmem:[#allocation2 + $0xd0] sm:$0xff] %v553
    %678 = vst [vmem:[#allocation2 + $0xd8] sm:$0xff] %v334
    %679 = vst [vmem:[#allocation2 + $0xe0] sm:$0xff] %v336
    %680 = vst [vmem:[#allocation2 + $0xe8] sm:$0xff] %v558
    %681 = vst [vmem:[#allocation2 + $0xf0] sm:$0xff] %v340
    %682 = vst [vmem:[#allocation2 + $0xf8] sm:$0xff] %v342
    %683 = vst [vmem:[#allocation2 + $0x100] sm:$0xff] %v563
    %684 = vst [vmem:[#allocation2 + $0x108] sm:$0xff] %v346
    %685 = vst [vmem:[#allocation2 + $0x110] sm:$0xff] %v348
    %686 = vst [vmem:[#allocation2 + $0x118] sm:$0xff] %v568
    %687 = vst [vmem:[#allocation2 + $0x120] sm:$0xff] %v352
    %688 = vst [vmem:[#allocation2 + $0x128] sm:$0xff] %v354
    %689 = vst [vmem:[#allocation2 + $0x130] sm:$0xff] %v573
    %690 = vst [vmem:[#allocation2 + $0x138] sm:$0xff] %v358
    %691 = vst [vmem:[#allocation2 + $0x140] sm:$0xff] %v360
    %692 = vst [vmem:[#allocation2 + $0x148] sm:$0xff] %v578
    %693 = vst [vmem:[#allocation2 + $0x150] sm:$0xff] %v364
    %694 = vst [vmem:[#allocation2 + $0x158] sm:$0xff] %v366
    %695 = vst [vmem:[#allocation2 + $0x160] sm:$0xff] %v583
    %696 = vst [vmem:[#allocation2 + $0x168] sm:$0xff] %v370
    %697 = vst [vmem:[#allocation2 + $0x170] sm:$0xff] %v372
    %698 = vst [vmem:[#allocation2 + $0x178] sm:$0xff] %v588
    %699 = vst [vmem:[#allocation2 + $0x180] sm:$0xff] %v376
    %700 = vst [vmem:[#allocation2 + $0x188] sm:$0xff] %v378
    %701 = vst [vmem:[#allocation2 + $0x190] sm:$0xff] %v593
    %702 = vst [vmem:[#allocation2 + $0x198] sm:$0xff] %v382
    %703 = vst [vmem:[#allocation2 + $0x1a0] sm:$0xff] %v384
    %704 = vst [vmem:[#allocation2 + $0x1a8] sm:$0xff] %v598
    %705 = vst [vmem:[#allocation2 + $0x1b0] sm:$0xff] %v388
    %706 = vst [vmem:[#allocation2 + $0x1b8] sm:$0xff] %v390
    %707 = vst [vmem:[#allocation2 + $0x1c0] sm:$0xff] %v603
    %708 = vst [vmem:[#allocation2 + $0x1c8] sm:$0xff] %v394
    %709 = vst [vmem:[#allocation2 + $0x1d0] sm:$0xff] %v396
    %710 = vst [vmem:[#allocation2 + $0x1d8] sm:$0xff] %v608
    %711 = vst [vmem:[#allocation2 + $0x1e0] sm:$0xff] %v400
    %712 = vst [vmem:[#allocation2 + $0x1e8] sm:$0xff] %v402
    %713 = vst [vmem:[#allocation2 + $0x1f0] sm:$0xff] %v613
    %714 = vst [vmem:[#allocation2 + $0x1f8] sm:$0xff] %v406
    %715 = vst [vmem:[#allocation2 + $0x200] sm:$0xff] %v408
    %716 = vst [vmem:[#allocation2 + $0x208] sm:$0xff] %v618
    %717 = vst [vmem:[#allocation2 + $0x210] sm:$0xff] %v412
    %718 = vst [vmem:[#allocation2 + $0x218] sm:$0xff] %v414
    %719 = vst [vmem:[#allocation2 + $0x220] sm:$0xff] %v623
    %720 = vst [vmem:[#allocation2 + $0x228] sm:$0xff] %v418
    %721 = vst [vmem:[#allocation2 + $0x230] sm:$0xff] %v420
    %722 = vst [vmem:[#allocation2 + $0x238] sm:$0xff] %v628
    %723 = vst [vmem:[#allocation2 + $0x240] sm:$0xff] %v424
    %724 = vst [vmem:[#allocation2 + $0x248] sm:$0xff] %v426
    %725 = vst [vmem:[#allocation2 + $0x250] sm:$0xff] %v633
    %726 = vst [vmem:[#allocation2 + $0x258] sm:$0xff] %v430
    %727 = vst [vmem:[#allocation2 + $0x260] sm:$0xff] %v432
    %728 = vst [vmem:[#allocation2 + $0x268] sm:$0xff] %v638
    %729 = vst [vmem:[#allocation2 + $0x270] sm:$0xff] %v436
    %730 = vst [vmem:[#allocation2 + $0x278] sm:$0xff] %v438
    %731 = vst [vmem:[#allocation2 + $0x280] sm:$0xff] %v643
    %732 = vst [vmem:[#allocation2 + $0x288] sm:$0xff] %v442
    %733 = vst [vmem:[#allocation2 + $0x290] sm:$0xff] %v444
    %734 = vst [vmem:[#allocation2 + $0x298] sm:$0xff] %v648
    %v735 = vld [vmem:[%s4] sm:$0x1]
    %v737 = vlaneseq
    %v738 = vshrl.u32 %v737, 7
    %v739 = vsub.s32 0, %v738
    %v740 = vrot.slane %v735, %v739
    %v742 = vld [vmem:[%s2] sm:$0xff]
    %v743 = vld [vmem:[%s2 + $0x8] sm:$0xf]
    %v744 = vld [vmem:[%s2 + $0xc] sm:$0xff]
    %v745 = vld [vmem:[%s2 + $0x14] sm:$0xf]
    %v746 = vld [vmem:[%s2 + $0x18] sm:$0xff]
    %v747 = vld [vmem:[%s2 + $0x20] sm:$0xf]
    %v748 = vld [vmem:[%s2 + $0x24] sm:$0xff]
    %v749 = vld [vmem:[%s2 + $0x2c] sm:$0xf]
    %v750 = vld [vmem:[%s2 + $0x30] sm:$0xff]
    %v751 = vld [vmem:[%s2 + $0x38] sm:$0xf]
    %v752 = vld [vmem:[%s2 + $0x3c] sm:$0xff]
    %v753 = vld [vmem:[%s2 + $0x44] sm:$0xf]
    %v754 = vld [vmem:[%s2 + $0x48] sm:$0xff]
    %v755 = vld [vmem:[%s2 + $0x50] sm:$0xf]
    %v756 = vld [vmem:[%s2 + $0x54] sm:$0xff]
    %v757 = vld [vmem:[%s2 + $0x5c] sm:$0xf]
    %v758 = vld [vmem:[%s2 + $0x60] sm:$0xff]
    %v759 = vld [vmem:[%s2 + $0x68] sm:$0xf]
    %v760 = vld [vmem:[%s2 + $0x6c] sm:$0xff]
    %v761 = vld [vmem:[%s2 + $0x74] sm:$0xf]
    %v762 = vld [vmem:[%s2 + $0x78] sm:$0xff]
    %v763 = vld [vmem:[%s2 + $0x80] sm:$0xf]
    %v764 = vld [vmem:[%s2 + $0x84] sm:$0xff]
    %v765 = vld [vmem:[%s2 + $0x8c] sm:$0xf]
    %v766 = vld [vmem:[%s2 + $0x90] sm:$0xff]
    %v767 = vld [vmem:[%s2 + $0x98] sm:$0xf]
    %v768 = vld [vmem:[%s2 + $0x9c] sm:$0xff]
    %v769 = vld [vmem:[%s2 + $0xa4] sm:$0xf]
    %v770 = vld [vmem:[%s2 + $0xa8] sm:$0xff]
    %v771 = vld [vmem:[%s2 + $0xb0] sm:$0xf]
    %v772 = vld [vmem:[%s2 + $0xb4] sm:$0xff]
    %v773 = vld [vmem:[%s2 + $0xbc] sm:$0xf]
    %v774 = vld [vmem:[#allocation3] sm:$0xff]
    %s775 = smul.u32 0, 3
    %s776 = smul.addr %s775, 8
    %s777 = scalar_lea.vmem [#allocation2], %s776
    %v778 = vld [vmem:[%s777] sm:$0xff]
    %v779 = vld [vmem:[%s777 + $0x8] sm:$0xff]
    %v780 = vld [vmem:[%s777 + $0x10] sm:$0xff]
    %v781 = vpack.c.bf16 %v774, %v774
    %v814 = vunpack.c.l.b16 %v742
    %v815 = vunpack.c.h.b16 %v742
    %v816 = vunpack.c.l.b16 %v743
    %v817 = vunpack.c.l.b16 %v744
    %v818 = vunpack.c.h.b16 %v744
    %v819 = vunpack.c.l.b16 %v745
    %v820 = vunpack.c.l.b16 %v746
    %v821 = vunpack.c.h.b16 %v746
    %v822 = vunpack.c.l.b16 %v747
    %v823 = vunpack.c.l.b16 %v748
    %v824 = vunpack.c.h.b16 %v748
    %v825 = vunpack.c.l.b16 %v749
    %v826 = vunpack.c.l.b16 %v750
    %v827 = vunpack.c.h.b16 %v750
    %v828 = vunpack.c.l.b16 %v751
    %v829 = vunpack.c.l.b16 %v752
    %v830 = vunpack.c.h.b16 %v752
    %v831 = vunpack.c.l.b16 %v753
    %v832 = vunpack.c.l.b16 %v754
    %v833 = vunpack.c.h.b16 %v754
    %v834 = vunpack.c.l.b16 %v755
    %v835 = vunpack.c.l.b16 %v756
    %v836 = vunpack.c.h.b16 %v756
    %v837 = vunpack.c.l.b16 %v757
    %v838 = vunpack.c.l.b16 %v758
    %v839 = vunpack.c.h.b16 %v758
    %v840 = vunpack.c.l.b16 %v759
    %v841 = vunpack.c.l.b16 %v760
    %v842 = vunpack.c.h.b16 %v760
    %v843 = vunpack.c.l.b16 %v761
    %v844 = vunpack.c.l.b16 %v762
    %v845 = vunpack.c.h.b16 %v762
    %v846 = vunpack.c.l.b16 %v763
    %v847 = vunpack.c.l.b16 %v764
    %v848 = vunpack.c.h.b16 %v764
    %v849 = vunpack.c.l.b16 %v765
    %v850 = vunpack.c.l.b16 %v766
    %v851 = vunpack.c.h.b16 %v766
    %v852 = vunpack.c.l.b16 %v767
    %v853 = vunpack.c.l.b16 %v768
    %v854 = vunpack.c.h.b16 %v768
    %v855 = vunpack.c.l.b16 %v769
    %v856 = vunpack.c.l.b16 %v770
    %v857 = vunpack.c.h.b16 %v770
    %v858 = vunpack.c.l.b16 %v771
    %v859 = vunpack.c.l.b16 %v772
    %v860 = vunpack.c.h.b16 %v772
    %v861 = vunpack.c.l.b16 %v773
    %v862 = vpack.c.b16 %v817, %v814
    %v863 = vpack.c.b16 %v818, %v815
    %v864 = vpack.c.b16 %v819, %v816
    %v865 = vpack.c.b16 %v823, %v820
    %v866 = vpack.c.b16 %v824, %v821
    %v867 = vpack.c.b16 %v825, %v822
    %v868 = vpack.c.b16 %v829, %v826
    %v869 = vpack.c.b16 %v830, %v827
    %v870 = vpack.c.b16 %v831, %v828
    %v871 = vpack.c.b16 %v835, %v832
    %v872 = vpack.c.b16 %v836, %v833
    %v873 = vpack.c.b16 %v837, %v834
    %v874 = vpack.c.b16 %v841, %v838
    %v875 = vpack.c.b16 %v842, %v839
    %v876 = vpack.c.b16 %v843, %v840
    %v877 = vpack.c.b16 %v847, %v844
    %v878 = vpack.c.b16 %v848, %v845
    %v879 = vpack.c.b16 %v849, %v846
    %v880 = vpack.c.b16 %v853, %v850
    %v881 = vpack.c.b16 %v854, %v851
    %v882 = vpack.c.b16 %v855, %v852
    %v883 = vpack.c.b16 %v859, %v856
    %v884 = vpack.c.b16 %v860, %v857
    %v885 = vpack.c.b16 %v861, %v858
    %910 = vmatprep.subr.bf16.mxu0 %v863
    %911 = vmatpush1.bf16.msra.mxu0 %v862
    %912 = vmatprep.subr.bf16.mxu0 %v866
    %913 = vmatpush1.bf16.msra.mxu0 %v865
    %914 = vmatprep.subr.bf16.mxu0 %v869
    %915 = vmatpush1.bf16.msra.mxu0 %v868
    %916 = vmatprep.subr.bf16.mxu0 %v872
    %917 = vmatpush1.bf16.msra.mxu0 %v871
    %918 = vmatprep.subr.bf16.mxu0 %v875
    %919 = vmatpush1.bf16.msra.mxu0 %v874
    %920 = vmatprep.subr.bf16.mxu0 %v878
    %921 = vmatpush1.bf16.msra.mxu0 %v877
    %922 = vmatprep.subr.bf16.mxu0 %v881
    %923 = vmatpush1.bf16.msra.mxu0 %v880
    %924 = vmatprep.subr.bf16.mxu0 %v884
    %925 = vmatpush1.bf16.msra.mxu0 %v883
    %926 = vmatprep.subr.bf16.mxu0 0
    %927 = vmatpush1.bf16.msra.mxu0 0
    %928 = vmatprep.subr.bf16.mxu0 0
    %929 = vmatpush1.bf16.msra.mxu0 0
    %930 = vmatprep.subr.bf16.mxu0 0
    %931 = vmatpush1.bf16.msra.mxu0 0
    %932 = vmatprep.subr.bf16.mxu0 0
    %933 = vmatpush1.bf16.msra.mxu0 0
    %934 = vmatprep.subr.bf16.mxu0 0
    %935 = vmatpush1.bf16.msra.mxu0 0
    %936 = vmatprep.subr.bf16.mxu0 0
    %937 = vmatpush1.bf16.msra.mxu0 0
    %938 = vmatprep.subr.bf16.mxu0 0
    %939 = vmatpush1.bf16.msra.mxu0 0
    %940 = vmatprep.subr.bf16.mxu0 0
    %941 = vmatpush1.bf16.msra.mxu0 0
    %942 = vmatprep.mubr.bf16.mxu0 0
    %943 = vmatmul.mubr.bf16.gmra.mrb[0].mxu0 %v781
    %v944 = vpop.f32.mrb[0].mxu0
    %v945 = vadd.f32 0.0, %v944
    %v946 = vpop.f32.mrb[0].mxu0
    %v947 = vadd.f32 0.0, %v946
    %v948 = vpop.f32.mrb[0].mxu0
    %v949 = vpop.f32.mrb[0].mxu0
    %950 = vdwg.mxu0
    %951 = vmatprep.subr.bf16.mxu0 0
    %952 = vmatpush1.bf16.msra.mxu0 %v864
    %953 = vmatprep.subr.bf16.mxu0 0
    %954 = vmatpush1.bf16.msra.mxu0 %v867
    %955 = vmatprep.subr.bf16.mxu0 0
    %956 = vmatpush1.bf16.msra.mxu0 %v870
    %957 = vmatprep.subr.bf16.mxu0 0
    %958 = vmatpush1.bf16.msra.mxu0 %v873
    %959 = vmatprep.subr.bf16.mxu0 0
    %960 = vmatpush1.bf16.msra.mxu0 %v876
    %961 = vmatprep.subr.bf16.mxu0 0
    %962 = vmatpush1.bf16.msra.mxu0 %v879
    %963 = vmatprep.subr.bf16.mxu0 0
    %964 = vmatpush1.bf16.msra.mxu0 %v882
    %965 = vmatprep.subr.bf16.mxu0 0
    %966 = vmatpush1.bf16.msra.mxu0 %v885
    %967 = vmatprep.subr.bf16.mxu0 0
    %968 = vmatpush1.bf16.msra.mxu0 0
    %969 = vmatprep.subr.bf16.mxu0 0
    %970 = vmatpush1.bf16.msra.mxu0 0
    %971 = vmatprep.subr.bf16.mxu0 0
    %972 = vmatpush1.bf16.msra.mxu0 0
    %973 = vmatprep.subr.bf16.mxu0 0
    %974 = vmatpush1.bf16.msra.mxu0 0
    %975 = vmatprep.subr.bf16.mxu0 0
    %976 = vmatpush1.bf16.msra.mxu0 0
    %977 = vmatprep.subr.bf16.mxu0 0
    %978 = vmatpush1.bf16.msra.mxu0 0
    %979 = vmatprep.subr.bf16.mxu0 0
    %980 = vmatpush1.bf16.msra.mxu0 0
    %981 = vmatprep.subr.bf16.mxu0 0
    %982 = vmatpush1.bf16.msra.mxu0 0
    %983 = vmatprep.mubr.bf16.mxu0 0
    %984 = vmatmul.mubr.bf16.gmra.mrb[0].mxu0 %v781
    %v985 = vpop.f32.mrb[0].mxu0
    %v986 = vadd.f32 0.0, %v985
    %v987 = vpop.f32.mrb[0].mxu0
    %v988 = vpop.f32.mrb[0].mxu0
    %v989 = vpop.f32.mrb[0].mxu0
    %990 = vdwg.mxu0
    %v991 = vadd.f32 %v778, %v945
    %v992 = vxor.u32 %v991, 2147483648
    %v993 = vmul.f32 %v992, 1.442695
    %v994 = vpow.pop %v993
    %v995 = vadd.f32 %v994, 1.0
    %v996 = vrcp.pop %v995
    %v997 = vmul.f32 1.0, %v996
    %v998 = vadd.f32 %v779, %v947
    %v999 = vxor.u32 %v998, 2147483648
    %v1000 = vmul.f32 %v999, 1.442695
    %v1001 = vpow.pop %v1000
    %v1002 = vadd.f32 %v1001, 1.0
    %v1003 = vrcp.pop %v1002
    %v1004 = vmul.f32 1.0, %v1003
    %v1005 = vadd.f32 %v986, %v740
    %v1006 = vmul.f32 %v997, %v1005
    %v1007 = vadd.f32 %v780, %v1006
    %v1008 = vtanh.pop %v1007
    %v1009 = vsub.f32 %v774, %v1008
    %v1010 = vmul.f32 %v1004, %v1009
    %v1011 = vadd.f32 %v1008, %v1010
    %s1012 = smul.u32 1, 3
    %s1013 = smul.addr %s1012, 8
    %s1014 = scalar_lea.vmem [#allocation2], %s1013
    %v1015 = vld [vmem:[%s1014] sm:$0xff]
    %v1016 = vld [vmem:[%s1014 + $0x8] sm:$0xff]
    %v1017 = vld [vmem:[%s1014 + $0x10] sm:$0xff]
    %v1018 = vpack.c.bf16 %v1011, %v1011
    %1019 = vmatprep.subr.bf16.mxu0 %v863
    %1020 = vmatpush1.bf16.msra.mxu0 %v862
    %1021 = vmatprep.subr.bf16.mxu0 %v866
    %1022 = vmatpush1.bf16.msra.mxu0 %v865
    %1023 = vmatprep.subr.bf16.mxu0 %v869
    %1024 = vmatpush1.bf16.msra.mxu0 %v868
    %1025 = vmatprep.subr.bf16.mxu0 %v872
    %1026 = vmatpush1.bf16.msra.mxu0 %v871
    %1027 = vmatprep.subr.bf16.mxu0 %v875
    %1028 = vmatpush1.bf16.msra.mxu0 %v874
    %1029 = vmatprep.subr.bf16.mxu0 %v878
    %1030 = vmatpush1.bf16.msra.mxu0 %v877
    %1031 = vmatprep.subr.bf16.mxu0 %v881
    %1032 = vmatpush1.bf16.msra.mxu0 %v880
    %1033 = vmatprep.subr.bf16.mxu0 %v884
    %1034 = vmatpush1.bf16.msra.mxu0 %v883
    %1035 = vmatprep.subr.bf16.mxu0 0
    %1036 = vmatpush1.bf16.msra.mxu0 0
    %1037 = vmatprep.subr.bf16.mxu0 0
    %1038 = vmatpush1.bf16.msra.mxu0 0
    %1039 = vmatprep.subr.bf16.mxu0 0
    %1040 = vmatpush1.bf16.msra.mxu0 0
    %1041 = vmatprep.subr.bf16.mxu0 0
    %1042 = vmatpush1.bf16.msra.mxu0 0
    %1043 = vmatprep.subr.bf16.mxu0 0
    %1044 = vmatpush1.bf16.msra.mxu0 0
    %1045 = vmatprep.subr.bf16.mxu0 0
    %1046 = vmatpush1.bf16.msra.mxu0 0
    %1047 = vmatprep.subr.bf16.mxu0 0
    %1048 = vmatpush1.bf16.msra.mxu0 0
    %1049 = vmatprep.subr.bf16.mxu0 0
    %1050 = vmatpush1.bf16.msra.mxu0 0
    %1051 = vmatprep.mubr.bf16.mxu0 0
    %1052 = vmatmul.mubr.bf16.gmra.mrb[0].mxu0 %v1018
    %v1053 = vpop.f32.mrb[0].mxu0
    %v1054 = vadd.f32 0.0, %v1053
    %v1055 = vpop.f32.mrb[0].mxu0
    %v1056 = vadd.f32 0.0, %v1055
    %v1057 = vpop.f32.mrb[0].mxu0
    %v1058 = vpop.f32.mrb[0].mxu0
    %1059 = vdwg.mxu0
    %1060 = vmatprep.subr.bf16.mxu0 0
    %1061 = vmatpush1.bf16.msra.mxu0 %v864
    %1062 = vmatprep.subr.bf16.mxu0 0
    %1063 = vmatpush1.bf16.msra.mxu0 %v867
    %1064 = vmatprep.subr.bf16.mxu0 0
    %1065 = vmatpush1.bf16.msra.mxu0 %v870
    %1066 = vmatprep.subr.bf16.mxu0 0
    %1067 = vmatpush1.bf16.msra.mxu0 %v873
    %1068 = vmatprep.subr.bf16.mxu0 0
    %1069 = vmatpush1.bf16.msra.mxu0 %v876
    %1070 = vmatprep.subr.bf16.mxu0 0
    %1071 = vmatpush1.bf16.msra.mxu0 %v879
    %1072 = vmatprep.subr.bf16.mxu0 0
    %1073 = vmatpush1.bf16.msra.mxu0 %v882
    %1074 = vmatprep.subr.bf16.mxu0 0
    %1075 = vmatpush1.bf16.msra.mxu0 %v885
    %1076 = vmatprep.subr.bf16.mxu0 0
    %1077 = vmatpush1.bf16.msra.mxu0 0
    %1078 = vmatprep.subr.bf16.mxu0 0
    %1079 = vmatpush1.bf16.msra.mxu0 0
    %1080 = vmatprep.subr.bf16.mxu0 0
    %1081 = vmatpush1.bf16.msra.mxu0 0
    %1082 = vmatprep.subr.bf16.mxu0 0
    %1083 = vmatpush1.bf16.msra.mxu0 0
    %1084 = vmatprep.subr.bf16.mxu0 0
    %1085 = vmatpush1.bf16.msra.mxu0 0
    %1086 = vmatprep.subr.bf16.mxu0 0
    %1087 = vmatpush1.bf16.msra.mxu0 0
    %1088 = vmatprep.subr.bf16.mxu0 0
    %1089 = vmatpush1.bf16.msra.mxu0 0
    %1090 = vmatprep.subr.bf16.mxu0 0
    %1091 = vmatpush1.bf16.msra.mxu0 0
    %1092 = vmatprep.mubr.bf16.mxu0 0
    %1093 = vmatmul.mubr.bf16.gmra.mrb[0].mxu0 %v1018
    %v1094 = vpop.f32.mrb[0].mxu0
    %v1095 = vadd.f32 0.0, %v1094
    %v1096 = vpop.f32.mrb[0].mxu0
    %v1097 = vpop.f32.mrb[0].mxu0
    %v1098 = vpop.f32.mrb[0].mxu0
    %1099 = vdwg.mxu0
    %v1100 = vadd.f32 %v1015, %v1054
    %v1101 = vxor.u32 %v1100, 2147483648
    %v1102 = vmul.f32 %v1101, 1.442695
    %v1103 = vpow.pop %v1102
    %v1104 = vadd.f32 %v1103, 1.0
    %v1105 = vrcp.pop %v1104
    %v1106 = vmul.f32 1.0, %v1105
    %v1107 = vadd.f32 %v1016, %v1056
    %v1108 = vxor.u32 %v1107, 2147483648
    %v1109 = vmul.f32 %v1108, 1.442695
    %v1110 = vpow.pop %v1109
    %v1111 = vadd.f32 %v1110, 1.0
    %v1112 = vrcp.pop %v1111
    %v1113 = vmul.f32 1.0, %v1112
    %v1114 = vadd.f32 %v1095, %v740
    %v1115 = vmul.f32 %v1106, %v1114
    %v1116 = vadd.f32 %v1017, %v1115
    %v1117 = vtanh.pop %v1116
    %v1118 = vsub.f32 %v1011, %v1117
    %v1119 = vmul.f32 %v1113, %v1118
    %v1120 = vadd.f32 %v1117, %v1119
    %s1121 = smul.u32 2, 3
    %s1122 = smul.addr %s1121, 8
    %s1123 = scalar_lea.vmem [#allocation2], %s1122
    %v1124 = vld [vmem:[%s1123] sm:$0xff]
    %v1125 = vld [vmem:[%s1123 + $0x8] sm:$0xff]
    %v1126 = vld [vmem:[%s1123 + $0x10] sm:$0xff]
    %v1127 = vpack.c.bf16 %v1120, %v1120
    %1128 = vmatprep.subr.bf16.mxu0 %v863
    %1129 = vmatpush1.bf16.msra.mxu0 %v862
    %1130 = vmatprep.subr.bf16.mxu0 %v866
    %1131 = vmatpush1.bf16.msra.mxu0 %v865
    %1132 = vmatprep.subr.bf16.mxu0 %v869
    %1133 = vmatpush1.bf16.msra.mxu0 %v868
    %1134 = vmatprep.subr.bf16.mxu0 %v872
    %1135 = vmatpush1.bf16.msra.mxu0 %v871
    %1136 = vmatprep.subr.bf16.mxu0 %v875
    %1137 = vmatpush1.bf16.msra.mxu0 %v874
    %1138 = vmatprep.subr.bf16.mxu0 %v878
    %1139 = vmatpush1.bf16.msra.mxu0 %v877
    %1140 = vmatprep.subr.bf16.mxu0 %v881
    %1141 = vmatpush1.bf16.msra.mxu0 %v880
    %1142 = vmatprep.subr.bf16.mxu0 %v884
    %1143 = vmatpush1.bf16.msra.mxu0 %v883
    %1144 = vmatprep.subr.bf16.mxu0 0
    %1145 = vmatpush1.bf16.msra.mxu0 0
    %1146 = vmatprep.subr.bf16.mxu0 0
    %1147 = vmatpush1.bf16.msra.mxu0 0
    %1148 = vmatprep.subr.bf16.mxu0 0
    %1149 = vmatpush1.bf16.msra.mxu0 0
    %1150 = vmatprep.subr.bf16.mxu0 0
    %1151 = vmatpush1.bf16.msra.mxu0 0
    %1152 = vmatprep.subr.bf16.mxu0 0
    %1153 = vmatpush1.bf16.msra.mxu0 0
    %1154 = vmatprep.subr.bf16.mxu0 0
    %1155 = vmatpush1.bf16.msra.mxu0 0
    %1156 = vmatprep.subr.bf16.mxu0 0
    %1157 = vmatpush1.bf16.msra.mxu0 0
    %1158 = vmatprep.subr.bf16.mxu0 0
    %1159 = vmatpush1.bf16.msra.mxu0 0
    %1160 = vmatprep.mubr.bf16.mxu0 0
    %1161 = vmatmul.mubr.bf16.gmra.mrb[0].mxu0 %v1127
    %v1162 = vpop.f32.mrb[0].mxu0
    %v1163 = vadd.f32 0.0, %v1162
    %v1164 = vpop.f32.mrb[0].mxu0
    %v1165 = vadd.f32 0.0, %v1164
    %v1166 = vpop.f32.mrb[0].mxu0
    %v1167 = vpop.f32.mrb[0].mxu0
    %1168 = vdwg.mxu0
    %1169 = vmatprep.subr.bf16.mxu0 0
    %1170 = vmatpush1.bf16.msra.mxu0 %v864
    %1171 = vmatprep.subr.bf16.mxu0 0
    %1172 = vmatpush1.bf16.msra.mxu0 %v867
    %1173 = vmatprep.subr.bf16.mxu0 0
    %1174 = vmatpush1.bf16.msra.mxu0 %v870
    %1175 = vmatprep.subr.bf16.mxu0 0
    %1176 = vmatpush1.bf16.msra.mxu0 %v873
    %1177 = vmatprep.subr.bf16.mxu0 0
    %1178 = vmatpush1.bf16.msra.mxu0 %v876
    %1179 = vmatprep.subr.bf16.mxu0 0
    %1180 = vmatpush1.bf16.msra.mxu0 %v879
    %1181 = vmatprep.subr.bf16.mxu0 0
    %1182 = vmatpush1.bf16.msra.mxu0 %v882
    %1183 = vmatprep.subr.bf16.mxu0 0
    %1184 = vmatpush1.bf16.msra.mxu0 %v885
    %1185 = vmatprep.subr.bf16.mxu0 0
    %1186 = vmatpush1.bf16.msra.mxu0 0
    %1187 = vmatprep.subr.bf16.mxu0 0
    %1188 = vmatpush1.bf16.msra.mxu0 0
    %1189 = vmatprep.subr.bf16.mxu0 0
    %1190 = vmatpush1.bf16.msra.mxu0 0
    %1191 = vmatprep.subr.bf16.mxu0 0
    %1192 = vmatpush1.bf16.msra.mxu0 0
    %1193 = vmatprep.subr.bf16.mxu0 0
    %1194 = vmatpush1.bf16.msra.mxu0 0
    %1195 = vmatprep.subr.bf16.mxu0 0
    %1196 = vmatpush1.bf16.msra.mxu0 0
    %1197 = vmatprep.subr.bf16.mxu0 0
    %1198 = vmatpush1.bf16.msra.mxu0 0
    %1199 = vmatprep.subr.bf16.mxu0 0
    %1200 = vmatpush1.bf16.msra.mxu0 0
    %1201 = vmatprep.mubr.bf16.mxu0 0
    %1202 = vmatmul.mubr.bf16.gmra.mrb[0].mxu0 %v1127
    %v1203 = vpop.f32.mrb[0].mxu0
    %v1204 = vadd.f32 0.0, %v1203
    %v1205 = vpop.f32.mrb[0].mxu0
    %v1206 = vpop.f32.mrb[0].mxu0
    %v1207 = vpop.f32.mrb[0].mxu0
    %1208 = vdwg.mxu0
    %v1209 = vadd.f32 %v1124, %v1163
    %v1210 = vxor.u32 %v1209, 2147483648
    %v1211 = vmul.f32 %v1210, 1.442695
    %v1212 = vpow.pop %v1211
    %v1213 = vadd.f32 %v1212, 1.0
    %v1214 = vrcp.pop %v1213
    %v1215 = vmul.f32 1.0, %v1214
    %v1216 = vadd.f32 %v1125, %v1165
    %v1217 = vxor.u32 %v1216, 2147483648
    %v1218 = vmul.f32 %v1217, 1.442695
    %v1219 = vpow.pop %v1218
    %v1220 = vadd.f32 %v1219, 1.0
    %v1221 = vrcp.pop %v1220
    %v1222 = vmul.f32 1.0, %v1221
    %v1223 = vadd.f32 %v1204, %v740
    %v1224 = vmul.f32 %v1215, %v1223
    %v1225 = vadd.f32 %v1126, %v1224
    %v1226 = vtanh.pop %v1225
    %v1227 = vsub.f32 %v1120, %v1226
    %v1228 = vmul.f32 %v1222, %v1227
    %v1229 = vadd.f32 %v1226, %v1228
    %s1230 = smul.u32 3, 3
    %s1231 = smul.addr %s1230, 8
    %s1232 = scalar_lea.vmem [#allocation2], %s1231
    %v1233 = vld [vmem:[%s1232] sm:$0xff]
    %v1234 = vld [vmem:[%s1232 + $0x8] sm:$0xff]
    %v1235 = vld [vmem:[%s1232 + $0x10] sm:$0xff]
    %v1236 = vpack.c.bf16 %v1229, %v1229
    %1237 = vmatprep.subr.bf16.mxu0 %v863
    %1238 = vmatpush1.bf16.msra.mxu0 %v862
    %1239 = vmatprep.subr.bf16.mxu0 %v866
    %1240 = vmatpush1.bf16.msra.mxu0 %v865
    %1241 = vmatprep.subr.bf16.mxu0 %v869
    %1242 = vmatpush1.bf16.msra.mxu0 %v868
    %1243 = vmatprep.subr.bf16.mxu0 %v872
    %1244 = vmatpush1.bf16.msra.mxu0 %v871
    %1245 = vmatprep.subr.bf16.mxu0 %v875
    %1246 = vmatpush1.bf16.msra.mxu0 %v874
    %1247 = vmatprep.subr.bf16.mxu0 %v878
    %1248 = vmatpush1.bf16.msra.mxu0 %v877
    %1249 = vmatprep.subr.bf16.mxu0 %v881
    %1250 = vmatpush1.bf16.msra.mxu0 %v880
    %1251 = vmatprep.subr.bf16.mxu0 %v884
    %1252 = vmatpush1.bf16.msra.mxu0 %v883
    %1253 = vmatprep.subr.bf16.mxu0 0
    %1254 = vmatpush1.bf16.msra.mxu0 0
    %1255 = vmatprep.subr.bf16.mxu0 0
    %1256 = vmatpush1.bf16.msra.mxu0 0
    %1257 = vmatprep.subr.bf16.mxu0 0
    %1258 = vmatpush1.bf16.msra.mxu0 0
    %1259 = vmatprep.subr.bf16.mxu0 0
    %1260 = vmatpush1.bf16.msra.mxu0 0
    %1261 = vmatprep.subr.bf16.mxu0 0
    %1262 = vmatpush1.bf16.msra.mxu0 0
    %1263 = vmatprep.subr.bf16.mxu0 0
    %1264 = vmatpush1.bf16.msra.mxu0 0
    %1265 = vmatprep.subr.bf16.mxu0 0
    %1266 = vmatpush1.bf16.msra.mxu0 0
    %1267 = vmatprep.subr.bf16.mxu0 0
    %1268 = vmatpush1.bf16.msra.mxu0 0
    %1269 = vmatprep.mubr.bf16.mxu0 0
    %1270 = vmatmul.mubr.bf16.gmra.mrb[0].mxu0 %v1236
    %v1271 = vpop.f32.mrb[0].mxu0
    %v1272 = vadd.f32 0.0, %v1271
    %v1273 = vpop.f32.mrb[0].mxu0
    %v1274 = vadd.f32 0.0, %v1273
    %v1275 = vpop.f32.mrb[0].mxu0
    %v1276 = vpop.f32.mrb[0].mxu0
    %1277 = vdwg.mxu0
    %1278 = vmatprep.subr.bf16.mxu0 0
    %1279 = vmatpush1.bf16.msra.mxu0 %v864
    %1280 = vmatprep.subr.bf16.mxu0 0
    %1281 = vmatpush1.bf16.msra.mxu0 %v867
    %1282 = vmatprep.subr.bf16.mxu0 0
    %1283 = vmatpush1.bf16.msra.mxu0 %v870
    %1284 = vmatprep.subr.bf16.mxu0 0
    %1285 = vmatpush1.bf16.msra.mxu0 %v873
    %1286 = vmatprep.subr.bf16.mxu0 0
    %1287 = vmatpush1.bf16.msra.mxu0 %v876
    %1288 = vmatprep.subr.bf16.mxu0 0
    %1289 = vmatpush1.bf16.msra.mxu0 %v879
    %1290 = vmatprep.subr.bf16.mxu0 0
    %1291 = vmatpush1.bf16.msra.mxu0 %v882
    %1292 = vmatprep.subr.bf16.mxu0 0
    %1293 = vmatpush1.bf16.msra.mxu0 %v885
    %1294 = vmatprep.subr.bf16.mxu0 0
    %1295 = vmatpush1.bf16.msra.mxu0 0
    %1296 = vmatprep.subr.bf16.mxu0 0
    %1297 = vmatpush1.bf16.msra.mxu0 0
    %1298 = vmatprep.subr.bf16.mxu0 0
    %1299 = vmatpush1.bf16.msra.mxu0 0
    %1300 = vmatprep.subr.bf16.mxu0 0
    %1301 = vmatpush1.bf16.msra.mxu0 0
    %1302 = vmatprep.subr.bf16.mxu0 0
    %1303 = vmatpush1.bf16.msra.mxu0 0
    %1304 = vmatprep.subr.bf16.mxu0 0
    %1305 = vmatpush1.bf16.msra.mxu0 0
    %1306 = vmatprep.subr.bf16.mxu0 0
    %1307 = vmatpush1.bf16.msra.mxu0 0
    %1308 = vmatprep.subr.bf16.mxu0 0
    %1309 = vmatpush1.bf16.msra.mxu0 0
    %1310 = vmatprep.mubr.bf16.mxu0 0
    %1311 = vmatmul.mubr.bf16.gmra.mrb[0].mxu0 %v1236
    %v1312 = vpop.f32.mrb[0].mxu0
    %v1313 = vadd.f32 0.0, %v1312
    %v1314 = vpop.f32.mrb[0].mxu0
    %v1315 = vpop.f32.mrb[0].mxu0
    %v1316 = vpop.f32.mrb[0].mxu0
    %1317 = vdwg.mxu0
    %v1318 = vadd.f32 %v1233, %v1272
    %v1319 = vxor.u32 %v1318, 2147483648
    %v1320 = vmul.f32 %v1319, 1.442695
    %v1321 = vpow.pop %v1320
    %v1322 = vadd.f32 %v1321, 1.0
    %v1323 = vrcp.pop %v1322
    %v1324 = vmul.f32 1.0, %v1323
    %v1325 = vadd.f32 %v1234, %v1274
    %v1326 = vxor.u32 %v1325, 2147483648
    %v1327 = vmul.f32 %v1326, 1.442695
    %v1328 = vpow.pop %v1327
    %v1329 = vadd.f32 %v1328, 1.0
    %v1330 = vrcp.pop %v1329
    %v1331 = vmul.f32 1.0, %v1330
    %v1332 = vadd.f32 %v1313, %v740
    %v1333 = vmul.f32 %v1324, %v1332
    %v1334 = vadd.f32 %v1235, %v1333
    %v1335 = vtanh.pop %v1334
    %v1336 = vsub.f32 %v1229, %v1335
    %v1337 = vmul.f32 %v1331, %v1336
    %v1338 = vadd.f32 %v1335, %v1337
    %s1339 = smul.u32 4, 3
    %s1340 = smul.addr %s1339, 8
    %s1341 = scalar_lea.vmem [#allocation2], %s1340
    %v1342 = vld [vmem:[%s1341] sm:$0xff]
    %v1343 = vld [vmem:[%s1341 + $0x8] sm:$0xff]
    %v1344 = vld [vmem:[%s1341 + $0x10] sm:$0xff]
    %v1345 = vpack.c.bf16 %v1338, %v1338
    %1346 = vmatprep.subr.bf16.mxu0 %v863
    %1347 = vmatpush1.bf16.msra.mxu0 %v862
    %1348 = vmatprep.subr.bf16.mxu0 %v866
    %1349 = vmatpush1.bf16.msra.mxu0 %v865
    %1350 = vmatprep.subr.bf16.mxu0 %v869
    %1351 = vmatpush1.bf16.msra.mxu0 %v868
    %1352 = vmatprep.subr.bf16.mxu0 %v872
    %1353 = vmatpush1.bf16.msra.mxu0 %v871
    %1354 = vmatprep.subr.bf16.mxu0 %v875
    %1355 = vmatpush1.bf16.msra.mxu0 %v874
    %1356 = vmatprep.subr.bf16.mxu0 %v878
    %1357 = vmatpush1.bf16.msra.mxu0 %v877
    %1358 = vmatprep.subr.bf16.mxu0 %v881
    %1359 = vmatpush1.bf16.msra.mxu0 %v880
    %1360 = vmatprep.subr.bf16.mxu0 %v884
    %1361 = vmatpush1.bf16.msra.mxu0 %v883
    %1362 = vmatprep.subr.bf16.mxu0 0
    %1363 = vmatpush1.bf16.msra.mxu0 0
    %1364 = vmatprep.subr.bf16.mxu0 0
    %1365 = vmatpush1.bf16.msra.mxu0 0
    %1366 = vmatprep.subr.bf16.mxu0 0
    %1367 = vmatpush1.bf16.msra.mxu0 0
    %1368 = vmatprep.subr.bf16.mxu0 0
    %1369 = vmatpush1.bf16.msra.mxu0 0
    %1370 = vmatprep.subr.bf16.mxu0 0
    %1371 = vmatpush1.bf16.msra.mxu0 0
    %1372 = vmatprep.subr.bf16.mxu0 0
    %1373 = vmatpush1.bf16.msra.mxu0 0
    %1374 = vmatprep.subr.bf16.mxu0 0
    %1375 = vmatpush1.bf16.msra.mxu0 0
    %1376 = vmatprep.subr.bf16.mxu0 0
    %1377 = vmatpush1.bf16.msra.mxu0 0
    %1378 = vmatprep.mubr.bf16.mxu0 0
    %1379 = vmatmul.mubr.bf16.gmra.mrb[0].mxu0 %v1345
    %v1380 = vpop.f32.mrb[0].mxu0
    %v1381 = vadd.f32 0.0, %v1380
    %v1382 = vpop.f32.mrb[0].mxu0
    %v1383 = vadd.f32 0.0, %v1382
    %v1384 = vpop.f32.mrb[0].mxu0
    %v1385 = vpop.f32.mrb[0].mxu0
    %1386 = vdwg.mxu0
    %1387 = vmatprep.subr.bf16.mxu0 0
    %1388 = vmatpush1.bf16.msra.mxu0 %v864
    %1389 = vmatprep.subr.bf16.mxu0 0
    %1390 = vmatpush1.bf16.msra.mxu0 %v867
    %1391 = vmatprep.subr.bf16.mxu0 0
    %1392 = vmatpush1.bf16.msra.mxu0 %v870
    %1393 = vmatprep.subr.bf16.mxu0 0
    %1394 = vmatpush1.bf16.msra.mxu0 %v873
    %1395 = vmatprep.subr.bf16.mxu0 0
    %1396 = vmatpush1.bf16.msra.mxu0 %v876
    %1397 = vmatprep.subr.bf16.mxu0 0
    %1398 = vmatpush1.bf16.msra.mxu0 %v879
    %1399 = vmatprep.subr.bf16.mxu0 0
    %1400 = vmatpush1.bf16.msra.mxu0 %v882
    %1401 = vmatprep.subr.bf16.mxu0 0
    %1402 = vmatpush1.bf16.msra.mxu0 %v885
    %1403 = vmatprep.subr.bf16.mxu0 0
    %1404 = vmatpush1.bf16.msra.mxu0 0
    %1405 = vmatprep.subr.bf16.mxu0 0
    %1406 = vmatpush1.bf16.msra.mxu0 0
    %1407 = vmatprep.subr.bf16.mxu0 0
    %1408 = vmatpush1.bf16.msra.mxu0 0
    %1409 = vmatprep.subr.bf16.mxu0 0
    %1410 = vmatpush1.bf16.msra.mxu0 0
    %1411 = vmatprep.subr.bf16.mxu0 0
    %1412 = vmatpush1.bf16.msra.mxu0 0
    %1413 = vmatprep.subr.bf16.mxu0 0
    %1414 = vmatpush1.bf16.msra.mxu0 0
    %1415 = vmatprep.subr.bf16.mxu0 0
    %1416 = vmatpush1.bf16.msra.mxu0 0
    %1417 = vmatprep.subr.bf16.mxu0 0
    %1418 = vmatpush1.bf16.msra.mxu0 0
    %1419 = vmatprep.mubr.bf16.mxu0 0
    %1420 = vmatmul.mubr.bf16.gmra.mrb[0].mxu0 %v1345
    %v1421 = vpop.f32.mrb[0].mxu0
    %v1422 = vadd.f32 0.0, %v1421
    %v1423 = vpop.f32.mrb[0].mxu0
    %v1424 = vpop.f32.mrb[0].mxu0
    %v1425 = vpop.f32.mrb[0].mxu0
    %1426 = vdwg.mxu0
    %v1427 = vadd.f32 %v1342, %v1381
    %v1428 = vxor.u32 %v1427, 2147483648
    %v1429 = vmul.f32 %v1428, 1.442695
    %v1430 = vpow.pop %v1429
    %v1431 = vadd.f32 %v1430, 1.0
    %v1432 = vrcp.pop %v1431
    %v1433 = vmul.f32 1.0, %v1432
    %v1434 = vadd.f32 %v1343, %v1383
    %v1435 = vxor.u32 %v1434, 2147483648
    %v1436 = vmul.f32 %v1435, 1.442695
    %v1437 = vpow.pop %v1436
    %v1438 = vadd.f32 %v1437, 1.0
    %v1439 = vrcp.pop %v1438
    %v1440 = vmul.f32 1.0, %v1439
    %v1441 = vadd.f32 %v1422, %v740
    %v1442 = vmul.f32 %v1433, %v1441
    %v1443 = vadd.f32 %v1344, %v1442
    %v1444 = vtanh.pop %v1443
    %v1445 = vsub.f32 %v1338, %v1444
    %v1446 = vmul.f32 %v1440, %v1445
    %v1447 = vadd.f32 %v1444, %v1446
    %s1448 = smul.u32 5, 3
    %s1449 = smul.addr %s1448, 8
    %s1450 = scalar_lea.vmem [#allocation2], %s1449
    %v1451 = vld [vmem:[%s1450] sm:$0xff]
    %v1452 = vld [vmem:[%s1450 + $0x8] sm:$0xff]
    %v1453 = vld [vmem:[%s1450 + $0x10] sm:$0xff]
    %v1454 = vpack.c.bf16 %v1447, %v1447
    %1455 = vmatprep.subr.bf16.mxu0 %v863
    %1456 = vmatpush1.bf16.msra.mxu0 %v862
    %1457 = vmatprep.subr.bf16.mxu0 %v866
    %1458 = vmatpush1.bf16.msra.mxu0 %v865
    %1459 = vmatprep.subr.bf16.mxu0 %v869
    %1460 = vmatpush1.bf16.msra.mxu0 %v868
    %1461 = vmatprep.subr.bf16.mxu0 %v872
    %1462 = vmatpush1.bf16.msra.mxu0 %v871
    %1463 = vmatprep.subr.bf16.mxu0 %v875
    %1464 = vmatpush1.bf16.msra.mxu0 %v874
    %1465 = vmatprep.subr.bf16.mxu0 %v878
    %1466 = vmatpush1.bf16.msra.mxu0 %v877
    %1467 = vmatprep.subr.bf16.mxu0 %v881
    %1468 = vmatpush1.bf16.msra.mxu0 %v880
    %1469 = vmatprep.subr.bf16.mxu0 %v884
    %1470 = vmatpush1.bf16.msra.mxu0 %v883
    %1471 = vmatprep.subr.bf16.mxu0 0
    %1472 = vmatpush1.bf16.msra.mxu0 0
    %1473 = vmatprep.subr.bf16.mxu0 0
    %1474 = vmatpush1.bf16.msra.mxu0 0
    %1475 = vmatprep.subr.bf16.mxu0 0
    %1476 = vmatpush1.bf16.msra.mxu0 0
    %1477 = vmatprep.subr.bf16.mxu0 0
    %1478 = vmatpush1.bf16.msra.mxu0 0
    %1479 = vmatprep.subr.bf16.mxu0 0
    %1480 = vmatpush1.bf16.msra.mxu0 0
    %1481 = vmatprep.subr.bf16.mxu0 0
    %1482 = vmatpush1.bf16.msra.mxu0 0
    %1483 = vmatprep.subr.bf16.mxu0 0
    %1484 = vmatpush1.bf16.msra.mxu0 0
    %1485 = vmatprep.subr.bf16.mxu0 0
    %1486 = vmatpush1.bf16.msra.mxu0 0
    %1487 = vmatprep.mubr.bf16.mxu0 0
    %1488 = vmatmul.mubr.bf16.gmra.mrb[0].mxu0 %v1454
    %v1489 = vpop.f32.mrb[0].mxu0
    %v1490 = vadd.f32 0.0, %v1489
    %v1491 = vpop.f32.mrb[0].mxu0
    %v1492 = vadd.f32 0.0, %v1491
    %v1493 = vpop.f32.mrb[0].mxu0
    %v1494 = vpop.f32.mrb[0].mxu0
    %1495 = vdwg.mxu0
    %1496 = vmatprep.subr.bf16.mxu0 0
    %1497 = vmatpush1.bf16.msra.mxu0 %v864
    %1498 = vmatprep.subr.bf16.mxu0 0
    %1499 = vmatpush1.bf16.msra.mxu0 %v867
    %1500 = vmatprep.subr.bf16.mxu0 0
    %1501 = vmatpush1.bf16.msra.mxu0 %v870
    %1502 = vmatprep.subr.bf16.mxu0 0
    %1503 = vmatpush1.bf16.msra.mxu0 %v873
    %1504 = vmatprep.subr.bf16.mxu0 0
    %1505 = vmatpush1.bf16.msra.mxu0 %v876
    %1506 = vmatprep.subr.bf16.mxu0 0
    %1507 = vmatpush1.bf16.msra.mxu0 %v879
    %1508 = vmatprep.subr.bf16.mxu0 0
    %1509 = vmatpush1.bf16.msra.mxu0 %v882
    %1510 = vmatprep.subr.bf16.mxu0 0
    %1511 = vmatpush1.bf16.msra.mxu0 %v885
    %1512 = vmatprep.subr.bf16.mxu0 0
    %1513 = vmatpush1.bf16.msra.mxu0 0
    %1514 = vmatprep.subr.bf16.mxu0 0
    %1515 = vmatpush1.bf16.msra.mxu0 0
    %1516 = vmatprep.subr.bf16.mxu0 0
    %1517 = vmatpush1.bf16.msra.mxu0 0
    %1518 = vmatprep.subr.bf16.mxu0 0
    %1519 = vmatpush1.bf16.msra.mxu0 0
    %1520 = vmatprep.subr.bf16.mxu0 0
    %1521 = vmatpush1.bf16.msra.mxu0 0
    %1522 = vmatprep.subr.bf16.mxu0 0
    %1523 = vmatpush1.bf16.msra.mxu0 0
    %1524 = vmatprep.subr.bf16.mxu0 0
    %1525 = vmatpush1.bf16.msra.mxu0 0
    %1526 = vmatprep.subr.bf16.mxu0 0
    %1527 = vmatpush1.bf16.msra.mxu0 0
    %1528 = vmatprep.mubr.bf16.mxu0 0
    %1529 = vmatmul.mubr.bf16.gmra.mrb[0].mxu0 %v1454
    %v1530 = vpop.f32.mrb[0].mxu0
    %v1531 = vadd.f32 0.0, %v1530
    %v1532 = vpop.f32.mrb[0].mxu0
    %v1533 = vpop.f32.mrb[0].mxu0
    %v1534 = vpop.f32.mrb[0].mxu0
    %1535 = vdwg.mxu0
    %v1536 = vadd.f32 %v1451, %v1490
    %v1537 = vxor.u32 %v1536, 2147483648
    %v1538 = vmul.f32 %v1537, 1.442695
    %v1539 = vpow.pop %v1538
    %v1540 = vadd.f32 %v1539, 1.0
    %v1541 = vrcp.pop %v1540
    %v1542 = vmul.f32 1.0, %v1541
    %v1543 = vadd.f32 %v1452, %v1492
    %v1544 = vxor.u32 %v1543, 2147483648
    %v1545 = vmul.f32 %v1544, 1.442695
    %v1546 = vpow.pop %v1545
    %v1547 = vadd.f32 %v1546, 1.0
    %v1548 = vrcp.pop %v1547
    %v1549 = vmul.f32 1.0, %v1548
    %v1550 = vadd.f32 %v1531, %v740
    %v1551 = vmul.f32 %v1542, %v1550
    %v1552 = vadd.f32 %v1453, %v1551
    %v1553 = vtanh.pop %v1552
    %v1554 = vsub.f32 %v1447, %v1553
    %v1555 = vmul.f32 %v1549, %v1554
    %v1556 = vadd.f32 %v1553, %v1555
    %s1557 = smul.u32 6, 3
    %s1558 = smul.addr %s1557, 8
    %s1559 = scalar_lea.vmem [#allocation2], %s1558
    %v1560 = vld [vmem:[%s1559] sm:$0xff]
    %v1561 = vld [vmem:[%s1559 + $0x8] sm:$0xff]
    %v1562 = vld [vmem:[%s1559 + $0x10] sm:$0xff]
    %v1563 = vpack.c.bf16 %v1556, %v1556
    %1564 = vmatprep.subr.bf16.mxu0 %v863
    %1565 = vmatpush1.bf16.msra.mxu0 %v862
    %1566 = vmatprep.subr.bf16.mxu0 %v866
    %1567 = vmatpush1.bf16.msra.mxu0 %v865
    %1568 = vmatprep.subr.bf16.mxu0 %v869
    %1569 = vmatpush1.bf16.msra.mxu0 %v868
    %1570 = vmatprep.subr.bf16.mxu0 %v872
    %1571 = vmatpush1.bf16.msra.mxu0 %v871
    %1572 = vmatprep.subr.bf16.mxu0 %v875
    %1573 = vmatpush1.bf16.msra.mxu0 %v874
    %1574 = vmatprep.subr.bf16.mxu0 %v878
    %1575 = vmatpush1.bf16.msra.mxu0 %v877
    %1576 = vmatprep.subr.bf16.mxu0 %v881
    %1577 = vmatpush1.bf16.msra.mxu0 %v880
    %1578 = vmatprep.subr.bf16.mxu0 %v884
    %1579 = vmatpush1.bf16.msra.mxu0 %v883
    %1580 = vmatprep.subr.bf16.mxu0 0
    %1581 = vmatpush1.bf16.msra.mxu0 0
    %1582 = vmatprep.subr.bf16.mxu0 0
    %1583 = vmatpush1.bf16.msra.mxu0 0
    %1584 = vmatprep.subr.bf16.mxu0 0
    %1585 = vmatpush1.bf16.msra.mxu0 0
    %1586 = vmatprep.subr.bf16.mxu0 0
    %1587 = vmatpush1.bf16.msra.mxu0 0
    %1588 = vmatprep.subr.bf16.mxu0 0
    %1589 = vmatpush1.bf16.msra.mxu0 0
    %1590 = vmatprep.subr.bf16.mxu0 0
    %1591 = vmatpush1.bf16.msra.mxu0 0
    %1592 = vmatprep.subr.bf16.mxu0 0
    %1593 = vmatpush1.bf16.msra.mxu0 0
    %1594 = vmatprep.subr.bf16.mxu0 0
    %1595 = vmatpush1.bf16.msra.mxu0 0
    %1596 = vmatprep.mubr.bf16.mxu0 0
    %1597 = vmatmul.mubr.bf16.gmra.mrb[0].mxu0 %v1563
    %v1598 = vpop.f32.mrb[0].mxu0
    %v1599 = vadd.f32 0.0, %v1598
    %v1600 = vpop.f32.mrb[0].mxu0
    %v1601 = vadd.f32 0.0, %v1600
    %v1602 = vpop.f32.mrb[0].mxu0
    %v1603 = vpop.f32.mrb[0].mxu0
    %1604 = vdwg.mxu0
    %1605 = vmatprep.subr.bf16.mxu0 0
    %1606 = vmatpush1.bf16.msra.mxu0 %v864
    %1607 = vmatprep.subr.bf16.mxu0 0
    %1608 = vmatpush1.bf16.msra.mxu0 %v867
    %1609 = vmatprep.subr.bf16.mxu0 0
    %1610 = vmatpush1.bf16.msra.mxu0 %v870
    %1611 = vmatprep.subr.bf16.mxu0 0
    %1612 = vmatpush1.bf16.msra.mxu0 %v873
    %1613 = vmatprep.subr.bf16.mxu0 0
    %1614 = vmatpush1.bf16.msra.mxu0 %v876
    %1615 = vmatprep.subr.bf16.mxu0 0
    %1616 = vmatpush1.bf16.msra.mxu0 %v879
    %1617 = vmatprep.subr.bf16.mxu0 0
    %1618 = vmatpush1.bf16.msra.mxu0 %v882
    %1619 = vmatprep.subr.bf16.mxu0 0
    %1620 = vmatpush1.bf16.msra.mxu0 %v885
    %1621 = vmatprep.subr.bf16.mxu0 0
    %1622 = vmatpush1.bf16.msra.mxu0 0
    %1623 = vmatprep.subr.bf16.mxu0 0
    %1624 = vmatpush1.bf16.msra.mxu0 0
    %1625 = vmatprep.subr.bf16.mxu0 0
    %1626 = vmatpush1.bf16.msra.mxu0 0
    %1627 = vmatprep.subr.bf16.mxu0 0
    %1628 = vmatpush1.bf16.msra.mxu0 0
    %1629 = vmatprep.subr.bf16.mxu0 0
    %1630 = vmatpush1.bf16.msra.mxu0 0
    %1631 = vmatprep.subr.bf16.mxu0 0
    %1632 = vmatpush1.bf16.msra.mxu0 0
    %1633 = vmatprep.subr.bf16.mxu0 0
    %1634 = vmatpush1.bf16.msra.mxu0 0
    %1635 = vmatprep.subr.bf16.mxu0 0
    %1636 = vmatpush1.bf16.msra.mxu0 0
    %1637 = vmatprep.mubr.bf16.mxu0 0
    %1638 = vmatmul.mubr.bf16.gmra.mrb[0].mxu0 %v1563
    %v1639 = vpop.f32.mrb[0].mxu0
    %v1640 = vadd.f32 0.0, %v1639
    %v1641 = vpop.f32.mrb[0].mxu0
    %v1642 = vpop.f32.mrb[0].mxu0
    %v1643 = vpop.f32.mrb[0].mxu0
    %1644 = vdwg.mxu0
    %v1645 = vadd.f32 %v1560, %v1599
    %v1646 = vxor.u32 %v1645, 2147483648
    %v1647 = vmul.f32 %v1646, 1.442695
    %v1648 = vpow.pop %v1647
    %v1649 = vadd.f32 %v1648, 1.0
    %v1650 = vrcp.pop %v1649
    %v1651 = vmul.f32 1.0, %v1650
    %v1652 = vadd.f32 %v1561, %v1601
    %v1653 = vxor.u32 %v1652, 2147483648
    %v1654 = vmul.f32 %v1653, 1.442695
    %v1655 = vpow.pop %v1654
    %v1656 = vadd.f32 %v1655, 1.0
    %v1657 = vrcp.pop %v1656
    %v1658 = vmul.f32 1.0, %v1657
    %v1659 = vadd.f32 %v1640, %v740
    %v1660 = vmul.f32 %v1651, %v1659
    %v1661 = vadd.f32 %v1562, %v1660
    %v1662 = vtanh.pop %v1661
    %v1663 = vsub.f32 %v1556, %v1662
    %v1664 = vmul.f32 %v1658, %v1663
    %v1665 = vadd.f32 %v1662, %v1664
    %s1666 = smul.u32 7, 3
    %s1667 = smul.addr %s1666, 8
    %s1668 = scalar_lea.vmem [#allocation2], %s1667
    %v1669 = vld [vmem:[%s1668] sm:$0xff]
    %v1670 = vld [vmem:[%s1668 + $0x8] sm:$0xff]
    %v1671 = vld [vmem:[%s1668 + $0x10] sm:$0xff]
    %v1672 = vpack.c.bf16 %v1665, %v1665
    %1673 = vmatprep.subr.bf16.mxu0 %v863
    %1674 = vmatpush1.bf16.msra.mxu0 %v862
    %1675 = vmatprep.subr.bf16.mxu0 %v866
    %1676 = vmatpush1.bf16.msra.mxu0 %v865
    %1677 = vmatprep.subr.bf16.mxu0 %v869
    %1678 = vmatpush1.bf16.msra.mxu0 %v868
    %1679 = vmatprep.subr.bf16.mxu0 %v872
    %1680 = vmatpush1.bf16.msra.mxu0 %v871
    %1681 = vmatprep.subr.bf16.mxu0 %v875
    %1682 = vmatpush1.bf16.msra.mxu0 %v874
    %1683 = vmatprep.subr.bf16.mxu0 %v878
    %1684 = vmatpush1.bf16.msra.mxu0 %v877
    %1685 = vmatprep.subr.bf16.mxu0 %v881
    %1686 = vmatpush1.bf16.msra.mxu0 %v880
    %1687 = vmatprep.subr.bf16.mxu0 %v884
    %1688 = vmatpush1.bf16.msra.mxu0 %v883
    %1689 = vmatprep.subr.bf16.mxu0 0
    %1690 = vmatpush1.bf16.msra.mxu0 0
    %1691 = vmatprep.subr.bf16.mxu0 0
    %1692 = vmatpush1.bf16.msra.mxu0 0
    %1693 = vmatprep.subr.bf16.mxu0 0
    %1694 = vmatpush1.bf16.msra.mxu0 0
    %1695 = vmatprep.subr.bf16.mxu0 0
    %1696 = vmatpush1.bf16.msra.mxu0 0
    %1697 = vmatprep.subr.bf16.mxu0 0
    %1698 = vmatpush1.bf16.msra.mxu0 0
    %1699 = vmatprep.subr.bf16.mxu0 0
    %1700 = vmatpush1.bf16.msra.mxu0 0
    %1701 = vmatprep.subr.bf16.mxu0 0
    %1702 = vmatpush1.bf16.msra.mxu0 0
    %1703 = vmatprep.subr.bf16.mxu0 0
    %1704 = vmatpush1.bf16.msra.mxu0 0
    %1705 = vmatprep.mubr.bf16.mxu0 0
    %1706 = vmatmul.mubr.bf16.gmra.mrb[0].mxu0 %v1672
    %v1707 = vpop.f32.mrb[0].mxu0
    %v1708 = vadd.f32 0.0, %v1707
    %v1709 = vpop.f32.mrb[0].mxu0
    %v1710 = vadd.f32 0.0, %v1709
    %v1711 = vpop.f32.mrb[0].mxu0
    %v1712 = vpop.f32.mrb[0].mxu0
    %1713 = vdwg.mxu0
    %1714 = vmatprep.subr.bf16.mxu0 0
    %1715 = vmatpush1.bf16.msra.mxu0 %v864
    %1716 = vmatprep.subr.bf16.mxu0 0
    %1717 = vmatpush1.bf16.msra.mxu0 %v867
    %1718 = vmatprep.subr.bf16.mxu0 0
    %1719 = vmatpush1.bf16.msra.mxu0 %v870
    %1720 = vmatprep.subr.bf16.mxu0 0
    %1721 = vmatpush1.bf16.msra.mxu0 %v873
    %1722 = vmatprep.subr.bf16.mxu0 0
    %1723 = vmatpush1.bf16.msra.mxu0 %v876
    %1724 = vmatprep.subr.bf16.mxu0 0
    %1725 = vmatpush1.bf16.msra.mxu0 %v879
    %1726 = vmatprep.subr.bf16.mxu0 0
    %1727 = vmatpush1.bf16.msra.mxu0 %v882
    %1728 = vmatprep.subr.bf16.mxu0 0
    %1729 = vmatpush1.bf16.msra.mxu0 %v885
    %1730 = vmatprep.subr.bf16.mxu0 0
    %1731 = vmatpush1.bf16.msra.mxu0 0
    %1732 = vmatprep.subr.bf16.mxu0 0
    %1733 = vmatpush1.bf16.msra.mxu0 0
    %1734 = vmatprep.subr.bf16.mxu0 0
    %1735 = vmatpush1.bf16.msra.mxu0 0
    %1736 = vmatprep.subr.bf16.mxu0 0
    %1737 = vmatpush1.bf16.msra.mxu0 0
    %1738 = vmatprep.subr.bf16.mxu0 0
    %1739 = vmatpush1.bf16.msra.mxu0 0
    %1740 = vmatprep.subr.bf16.mxu0 0
    %1741 = vmatpush1.bf16.msra.mxu0 0
    %1742 = vmatprep.subr.bf16.mxu0 0
    %1743 = vmatpush1.bf16.msra.mxu0 0
    %1744 = vmatprep.subr.bf16.mxu0 0
    %1745 = vmatpush1.bf16.msra.mxu0 0
    %1746 = vmatprep.mubr.bf16.mxu0 0
    %1747 = vmatmul.mubr.bf16.gmra.mrb[0].mxu0 %v1672
    %v1748 = vpop.f32.mrb[0].mxu0
    %v1749 = vadd.f32 0.0, %v1748
    %v1750 = vpop.f32.mrb[0].mxu0
    %v1751 = vpop.f32.mrb[0].mxu0
    %v1752 = vpop.f32.mrb[0].mxu0
    %1753 = vdwg.mxu0
    %v1754 = vadd.f32 %v1669, %v1708
    %v1755 = vxor.u32 %v1754, 2147483648
    %v1756 = vmul.f32 %v1755, 1.442695
    %v1757 = vpow.pop %v1756
    %v1758 = vadd.f32 %v1757, 1.0
    %v1759 = vrcp.pop %v1758
    %v1760 = vmul.f32 1.0, %v1759
    %v1761 = vadd.f32 %v1670, %v1710
    %v1762 = vxor.u32 %v1761, 2147483648
    %v1763 = vmul.f32 %v1762, 1.442695
    %v1764 = vpow.pop %v1763
    %v1765 = vadd.f32 %v1764, 1.0
    %v1766 = vrcp.pop %v1765
    %v1767 = vmul.f32 1.0, %v1766
    %v1768 = vadd.f32 %v1749, %v740
    %v1769 = vmul.f32 %v1760, %v1768
    %v1770 = vadd.f32 %v1671, %v1769
    %v1771 = vtanh.pop %v1770
    %v1772 = vsub.f32 %v1665, %v1771
    %v1773 = vmul.f32 %v1767, %v1772
    %v1774 = vadd.f32 %v1771, %v1773
    %s1775 = smul.u32 8, 3
    %s1776 = smul.addr %s1775, 8
    %s1777 = scalar_lea.vmem [#allocation2], %s1776
    %v1778 = vld [vmem:[%s1777] sm:$0xff]
    %v1779 = vld [vmem:[%s1777 + $0x8] sm:$0xff]
    %v1780 = vld [vmem:[%s1777 + $0x10] sm:$0xff]
    %v1781 = vpack.c.bf16 %v1774, %v1774
    %1782 = vmatprep.subr.bf16.mxu0 %v863
    %1783 = vmatpush1.bf16.msra.mxu0 %v862
    %1784 = vmatprep.subr.bf16.mxu0 %v866
    %1785 = vmatpush1.bf16.msra.mxu0 %v865
    %1786 = vmatprep.subr.bf16.mxu0 %v869
    %1787 = vmatpush1.bf16.msra.mxu0 %v868
    %1788 = vmatprep.subr.bf16.mxu0 %v872
    %1789 = vmatpush1.bf16.msra.mxu0 %v871
    %1790 = vmatprep.subr.bf16.mxu0 %v875
    %1791 = vmatpush1.bf16.msra.mxu0 %v874
    %1792 = vmatprep.subr.bf16.mxu0 %v878
    %1793 = vmatpush1.bf16.msra.mxu0 %v877
    %1794 = vmatprep.subr.bf16.mxu0 %v881
    %1795 = vmatpush1.bf16.msra.mxu0 %v880
    %1796 = vmatprep.subr.bf16.mxu0 %v884
    %1797 = vmatpush1.bf16.msra.mxu0 %v883
    %1798 = vmatprep.subr.bf16.mxu0 0
    %1799 = vmatpush1.bf16.msra.mxu0 0
    %1800 = vmatprep.subr.bf16.mxu0 0
    %1801 = vmatpush1.bf16.msra.mxu0 0
    %1802 = vmatprep.subr.bf16.mxu0 0
    %1803 = vmatpush1.bf16.msra.mxu0 0
    %1804 = vmatprep.subr.bf16.mxu0 0
    %1805 = vmatpush1.bf16.msra.mxu0 0
    %1806 = vmatprep.subr.bf16.mxu0 0
    %1807 = vmatpush1.bf16.msra.mxu0 0
    %1808 = vmatprep.subr.bf16.mxu0 0
    %1809 = vmatpush1.bf16.msra.mxu0 0
    %1810 = vmatprep.subr.bf16.mxu0 0
    %1811 = vmatpush1.bf16.msra.mxu0 0
    %1812 = vmatprep.subr.bf16.mxu0 0
    %1813 = vmatpush1.bf16.msra.mxu0 0
    %1814 = vmatprep.mubr.bf16.mxu0 0
    %1815 = vmatmul.mubr.bf16.gmra.mrb[0].mxu0 %v1781
    %v1816 = vpop.f32.mrb[0].mxu0
    %v1817 = vadd.f32 0.0, %v1816
    %v1818 = vpop.f32.mrb[0].mxu0
    %v1819 = vadd.f32 0.0, %v1818
    %v1820 = vpop.f32.mrb[0].mxu0
    %v1821 = vpop.f32.mrb[0].mxu0
    %1822 = vdwg.mxu0
    %1823 = vmatprep.subr.bf16.mxu0 0
    %1824 = vmatpush1.bf16.msra.mxu0 %v864
    %1825 = vmatprep.subr.bf16.mxu0 0
    %1826 = vmatpush1.bf16.msra.mxu0 %v867
    %1827 = vmatprep.subr.bf16.mxu0 0
    %1828 = vmatpush1.bf16.msra.mxu0 %v870
    %1829 = vmatprep.subr.bf16.mxu0 0
    %1830 = vmatpush1.bf16.msra.mxu0 %v873
    %1831 = vmatprep.subr.bf16.mxu0 0
    %1832 = vmatpush1.bf16.msra.mxu0 %v876
    %1833 = vmatprep.subr.bf16.mxu0 0
    %1834 = vmatpush1.bf16.msra.mxu0 %v879
    %1835 = vmatprep.subr.bf16.mxu0 0
    %1836 = vmatpush1.bf16.msra.mxu0 %v882
    %1837 = vmatprep.subr.bf16.mxu0 0
    %1838 = vmatpush1.bf16.msra.mxu0 %v885
    %1839 = vmatprep.subr.bf16.mxu0 0
    %1840 = vmatpush1.bf16.msra.mxu0 0
    %1841 = vmatprep.subr.bf16.mxu0 0
    %1842 = vmatpush1.bf16.msra.mxu0 0
    %1843 = vmatprep.subr.bf16.mxu0 0
    %1844 = vmatpush1.bf16.msra.mxu0 0
    %1845 = vmatprep.subr.bf16.mxu0 0
    %1846 = vmatpush1.bf16.msra.mxu0 0
    %1847 = vmatprep.subr.bf16.mxu0 0
    %1848 = vmatpush1.bf16.msra.mxu0 0
    %1849 = vmatprep.subr.bf16.mxu0 0
    %1850 = vmatpush1.bf16.msra.mxu0 0
    %1851 = vmatprep.subr.bf16.mxu0 0
    %1852 = vmatpush1.bf16.msra.mxu0 0
    %1853 = vmatprep.subr.bf16.mxu0 0
    %1854 = vmatpush1.bf16.msra.mxu0 0
    %1855 = vmatprep.mubr.bf16.mxu0 0
    %1856 = vmatmul.mubr.bf16.gmra.mrb[0].mxu0 %v1781
    %v1857 = vpop.f32.mrb[0].mxu0
    %v1858 = vadd.f32 0.0, %v1857
    %v1859 = vpop.f32.mrb[0].mxu0
    %v1860 = vpop.f32.mrb[0].mxu0
    %v1861 = vpop.f32.mrb[0].mxu0
    %1862 = vdwg.mxu0
    %v1863 = vadd.f32 %v1778, %v1817
    %v1864 = vxor.u32 %v1863, 2147483648
    %v1865 = vmul.f32 %v1864, 1.442695
    %v1866 = vpow.pop %v1865
    %v1867 = vadd.f32 %v1866, 1.0
    %v1868 = vrcp.pop %v1867
    %v1869 = vmul.f32 1.0, %v1868
    %v1870 = vadd.f32 %v1779, %v1819
    %v1871 = vxor.u32 %v1870, 2147483648
    %v1872 = vmul.f32 %v1871, 1.442695
    %v1873 = vpow.pop %v1872
    %v1874 = vadd.f32 %v1873, 1.0
    %v1875 = vrcp.pop %v1874
    %v1876 = vmul.f32 1.0, %v1875
    %v1877 = vadd.f32 %v1858, %v740
    %v1878 = vmul.f32 %v1869, %v1877
    %v1879 = vadd.f32 %v1780, %v1878
    %v1880 = vtanh.pop %v1879
    %v1881 = vsub.f32 %v1774, %v1880
    %v1882 = vmul.f32 %v1876, %v1881
    %v1883 = vadd.f32 %v1880, %v1882
    %s1884 = smul.u32 9, 3
    %s1885 = smul.addr %s1884, 8
    %s1886 = scalar_lea.vmem [#allocation2], %s1885
    %v1887 = vld [vmem:[%s1886] sm:$0xff]
    %v1888 = vld [vmem:[%s1886 + $0x8] sm:$0xff]
    %v1889 = vld [vmem:[%s1886 + $0x10] sm:$0xff]
    %v1890 = vpack.c.bf16 %v1883, %v1883
    %1891 = vmatprep.subr.bf16.mxu0 %v863
    %1892 = vmatpush1.bf16.msra.mxu0 %v862
    %1893 = vmatprep.subr.bf16.mxu0 %v866
    %1894 = vmatpush1.bf16.msra.mxu0 %v865
    %1895 = vmatprep.subr.bf16.mxu0 %v869
    %1896 = vmatpush1.bf16.msra.mxu0 %v868
    %1897 = vmatprep.subr.bf16.mxu0 %v872
    %1898 = vmatpush1.bf16.msra.mxu0 %v871
    %1899 = vmatprep.subr.bf16.mxu0 %v875
    %1900 = vmatpush1.bf16.msra.mxu0 %v874
    %1901 = vmatprep.subr.bf16.mxu0 %v878
    %1902 = vmatpush1.bf16.msra.mxu0 %v877
    %1903 = vmatprep.subr.bf16.mxu0 %v881
    %1904 = vmatpush1.bf16.msra.mxu0 %v880
    %1905 = vmatprep.subr.bf16.mxu0 %v884
    %1906 = vmatpush1.bf16.msra.mxu0 %v883
    %1907 = vmatprep.subr.bf16.mxu0 0
    %1908 = vmatpush1.bf16.msra.mxu0 0
    %1909 = vmatprep.subr.bf16.mxu0 0
    %1910 = vmatpush1.bf16.msra.mxu0 0
    %1911 = vmatprep.subr.bf16.mxu0 0
    %1912 = vmatpush1.bf16.msra.mxu0 0
    %1913 = vmatprep.subr.bf16.mxu0 0
    %1914 = vmatpush1.bf16.msra.mxu0 0
    %1915 = vmatprep.subr.bf16.mxu0 0
    %1916 = vmatpush1.bf16.msra.mxu0 0
    %1917 = vmatprep.subr.bf16.mxu0 0
    %1918 = vmatpush1.bf16.msra.mxu0 0
    %1919 = vmatprep.subr.bf16.mxu0 0
    %1920 = vmatpush1.bf16.msra.mxu0 0
    %1921 = vmatprep.subr.bf16.mxu0 0
    %1922 = vmatpush1.bf16.msra.mxu0 0
    %1923 = vmatprep.mubr.bf16.mxu0 0
    %1924 = vmatmul.mubr.bf16.gmra.mrb[0].mxu0 %v1890
    %v1925 = vpop.f32.mrb[0].mxu0
    %v1926 = vadd.f32 0.0, %v1925
    %v1927 = vpop.f32.mrb[0].mxu0
    %v1928 = vadd.f32 0.0, %v1927
    %v1929 = vpop.f32.mrb[0].mxu0
    %v1930 = vpop.f32.mrb[0].mxu0
    %1931 = vdwg.mxu0
    %1932 = vmatprep.subr.bf16.mxu0 0
    %1933 = vmatpush1.bf16.msra.mxu0 %v864
    %1934 = vmatprep.subr.bf16.mxu0 0
    %1935 = vmatpush1.bf16.msra.mxu0 %v867
    %1936 = vmatprep.subr.bf16.mxu0 0
    %1937 = vmatpush1.bf16.msra.mxu0 %v870
    %1938 = vmatprep.subr.bf16.mxu0 0
    %1939 = vmatpush1.bf16.msra.mxu0 %v873
    %1940 = vmatprep.subr.bf16.mxu0 0
    %1941 = vmatpush1.bf16.msra.mxu0 %v876
    %1942 = vmatprep.subr.bf16.mxu0 0
    %1943 = vmatpush1.bf16.msra.mxu0 %v879
    %1944 = vmatprep.subr.bf16.mxu0 0
    %1945 = vmatpush1.bf16.msra.mxu0 %v882
    %1946 = vmatprep.subr.bf16.mxu0 0
    %1947 = vmatpush1.bf16.msra.mxu0 %v885
    %1948 = vmatprep.subr.bf16.mxu0 0
    %1949 = vmatpush1.bf16.msra.mxu0 0
    %1950 = vmatprep.subr.bf16.mxu0 0
    %1951 = vmatpush1.bf16.msra.mxu0 0
    %1952 = vmatprep.subr.bf16.mxu0 0
    %1953 = vmatpush1.bf16.msra.mxu0 0
    %1954 = vmatprep.subr.bf16.mxu0 0
    %1955 = vmatpush1.bf16.msra.mxu0 0
    %1956 = vmatprep.subr.bf16.mxu0 0
    %1957 = vmatpush1.bf16.msra.mxu0 0
    %1958 = vmatprep.subr.bf16.mxu0 0
    %1959 = vmatpush1.bf16.msra.mxu0 0
    %1960 = vmatprep.subr.bf16.mxu0 0
    %1961 = vmatpush1.bf16.msra.mxu0 0
    %1962 = vmatprep.subr.bf16.mxu0 0
    %1963 = vmatpush1.bf16.msra.mxu0 0
    %1964 = vmatprep.mubr.bf16.mxu0 0
    %1965 = vmatmul.mubr.bf16.gmra.mrb[0].mxu0 %v1890
    %v1966 = vpop.f32.mrb[0].mxu0
    %v1967 = vadd.f32 0.0, %v1966
    %v1968 = vpop.f32.mrb[0].mxu0
    %v1969 = vpop.f32.mrb[0].mxu0
    %v1970 = vpop.f32.mrb[0].mxu0
    %1971 = vdwg.mxu0
    %v1972 = vadd.f32 %v1887, %v1926
    %v1973 = vxor.u32 %v1972, 2147483648
    %v1974 = vmul.f32 %v1973, 1.442695
    %v1975 = vpow.pop %v1974
    %v1976 = vadd.f32 %v1975, 1.0
    %v1977 = vrcp.pop %v1976
    %v1978 = vmul.f32 1.0, %v1977
    %v1979 = vadd.f32 %v1888, %v1928
    %v1980 = vxor.u32 %v1979, 2147483648
    %v1981 = vmul.f32 %v1980, 1.442695
    %v1982 = vpow.pop %v1981
    %v1983 = vadd.f32 %v1982, 1.0
    %v1984 = vrcp.pop %v1983
    %v1985 = vmul.f32 1.0, %v1984
    %v1986 = vadd.f32 %v1967, %v740
    %v1987 = vmul.f32 %v1978, %v1986
    %v1988 = vadd.f32 %v1889, %v1987
    %v1989 = vtanh.pop %v1988
    %v1990 = vsub.f32 %v1883, %v1989
    %v1991 = vmul.f32 %v1985, %v1990
    %v1992 = vadd.f32 %v1989, %v1991
    %s1993 = smul.u32 10, 3
    %s1994 = smul.addr %s1993, 8
    %s1995 = scalar_lea.vmem [#allocation2], %s1994
    %v1996 = vld [vmem:[%s1995] sm:$0xff]
    %v1997 = vld [vmem:[%s1995 + $0x8] sm:$0xff]
    %v1998 = vld [vmem:[%s1995 + $0x10] sm:$0xff]
    %v1999 = vpack.c.bf16 %v1992, %v1992
    %2000 = vmatprep.subr.bf16.mxu0 %v863
    %2001 = vmatpush1.bf16.msra.mxu0 %v862
    %2002 = vmatprep.subr.bf16.mxu0 %v866
    %2003 = vmatpush1.bf16.msra.mxu0 %v865
    %2004 = vmatprep.subr.bf16.mxu0 %v869
    %2005 = vmatpush1.bf16.msra.mxu0 %v868
    %2006 = vmatprep.subr.bf16.mxu0 %v872
    %2007 = vmatpush1.bf16.msra.mxu0 %v871
    %2008 = vmatprep.subr.bf16.mxu0 %v875
    %2009 = vmatpush1.bf16.msra.mxu0 %v874
    %2010 = vmatprep.subr.bf16.mxu0 %v878
    %2011 = vmatpush1.bf16.msra.mxu0 %v877
    %2012 = vmatprep.subr.bf16.mxu0 %v881
    %2013 = vmatpush1.bf16.msra.mxu0 %v880
    %2014 = vmatprep.subr.bf16.mxu0 %v884
    %2015 = vmatpush1.bf16.msra.mxu0 %v883
    %2016 = vmatprep.subr.bf16.mxu0 0
    %2017 = vmatpush1.bf16.msra.mxu0 0
    %2018 = vmatprep.subr.bf16.mxu0 0
    %2019 = vmatpush1.bf16.msra.mxu0 0
    %2020 = vmatprep.subr.bf16.mxu0 0
    %2021 = vmatpush1.bf16.msra.mxu0 0
    %2022 = vmatprep.subr.bf16.mxu0 0
    %2023 = vmatpush1.bf16.msra.mxu0 0
    %2024 = vmatprep.subr.bf16.mxu0 0
    %2025 = vmatpush1.bf16.msra.mxu0 0
    %2026 = vmatprep.subr.bf16.mxu0 0
    %2027 = vmatpush1.bf16.msra.mxu0 0
    %2028 = vmatprep.subr.bf16.mxu0 0
    %2029 = vmatpush1.bf16.msra.mxu0 0
    %2030 = vmatprep.subr.bf16.mxu0 0
    %2031 = vmatpush1.bf16.msra.mxu0 0
    %2032 = vmatprep.mubr.bf16.mxu0 0
    %2033 = vmatmul.mubr.bf16.gmra.mrb[0].mxu0 %v1999
    %v2034 = vpop.f32.mrb[0].mxu0
    %v2035 = vadd.f32 0.0, %v2034
    %v2036 = vpop.f32.mrb[0].mxu0
    %v2037 = vadd.f32 0.0, %v2036
    %v2038 = vpop.f32.mrb[0].mxu0
    %v2039 = vpop.f32.mrb[0].mxu0
    %2040 = vdwg.mxu0
    %2041 = vmatprep.subr.bf16.mxu0 0
    %2042 = vmatpush1.bf16.msra.mxu0 %v864
    %2043 = vmatprep.subr.bf16.mxu0 0
    %2044 = vmatpush1.bf16.msra.mxu0 %v867
    %2045 = vmatprep.subr.bf16.mxu0 0
    %2046 = vmatpush1.bf16.msra.mxu0 %v870
    %2047 = vmatprep.subr.bf16.mxu0 0
    %2048 = vmatpush1.bf16.msra.mxu0 %v873
    %2049 = vmatprep.subr.bf16.mxu0 0
    %2050 = vmatpush1.bf16.msra.mxu0 %v876
    %2051 = vmatprep.subr.bf16.mxu0 0
    %2052 = vmatpush1.bf16.msra.mxu0 %v879
    %2053 = vmatprep.subr.bf16.mxu0 0
    %2054 = vmatpush1.bf16.msra.mxu0 %v882
    %2055 = vmatprep.subr.bf16.mxu0 0
    %2056 = vmatpush1.bf16.msra.mxu0 %v885
    %2057 = vmatprep.subr.bf16.mxu0 0
    %2058 = vmatpush1.bf16.msra.mxu0 0
    %2059 = vmatprep.subr.bf16.mxu0 0
    %2060 = vmatpush1.bf16.msra.mxu0 0
    %2061 = vmatprep.subr.bf16.mxu0 0
    %2062 = vmatpush1.bf16.msra.mxu0 0
    %2063 = vmatprep.subr.bf16.mxu0 0
    %2064 = vmatpush1.bf16.msra.mxu0 0
    %2065 = vmatprep.subr.bf16.mxu0 0
    %2066 = vmatpush1.bf16.msra.mxu0 0
    %2067 = vmatprep.subr.bf16.mxu0 0
    %2068 = vmatpush1.bf16.msra.mxu0 0
    %2069 = vmatprep.subr.bf16.mxu0 0
    %2070 = vmatpush1.bf16.msra.mxu0 0
    %2071 = vmatprep.subr.bf16.mxu0 0
    %2072 = vmatpush1.bf16.msra.mxu0 0
    %2073 = vmatprep.mubr.bf16.mxu0 0
    %2074 = vmatmul.mubr.bf16.gmra.mrb[0].mxu0 %v1999
    %v2075 = vpop.f32.mrb[0].mxu0
    %v2076 = vadd.f32 0.0, %v2075
    %v2077 = vpop.f32.mrb[0].mxu0
    %v2078 = vpop.f32.mrb[0].mxu0
    %v2079 = vpop.f32.mrb[0].mxu0
    %2080 = vdwg.mxu0
    %v2081 = vadd.f32 %v1996, %v2035
    %v2082 = vxor.u32 %v2081, 2147483648
    %v2083 = vmul.f32 %v2082, 1.442695
    %v2084 = vpow.pop %v2083
    %v2085 = vadd.f32 %v2084, 1.0
    %v2086 = vrcp.pop %v2085
    %v2087 = vmul.f32 1.0, %v2086
    %v2088 = vadd.f32 %v1997, %v2037
    %v2089 = vxor.u32 %v2088, 2147483648
    %v2090 = vmul.f32 %v2089, 1.442695
    %v2091 = vpow.pop %v2090
    %v2092 = vadd.f32 %v2091, 1.0
    %v2093 = vrcp.pop %v2092
    %v2094 = vmul.f32 1.0, %v2093
    %v2095 = vadd.f32 %v2076, %v740
    %v2096 = vmul.f32 %v2087, %v2095
    %v2097 = vadd.f32 %v1998, %v2096
    %v2098 = vtanh.pop %v2097
    %v2099 = vsub.f32 %v1992, %v2098
    %v2100 = vmul.f32 %v2094, %v2099
    %v2101 = vadd.f32 %v2098, %v2100
    %s2102 = smul.u32 11, 3
    %s2103 = smul.addr %s2102, 8
    %s2104 = scalar_lea.vmem [#allocation2], %s2103
    %v2105 = vld [vmem:[%s2104] sm:$0xff]
    %v2106 = vld [vmem:[%s2104 + $0x8] sm:$0xff]
    %v2107 = vld [vmem:[%s2104 + $0x10] sm:$0xff]
    %v2108 = vpack.c.bf16 %v2101, %v2101
    %2109 = vmatprep.subr.bf16.mxu0 %v863
    %2110 = vmatpush1.bf16.msra.mxu0 %v862
    %2111 = vmatprep.subr.bf16.mxu0 %v866
    %2112 = vmatpush1.bf16.msra.mxu0 %v865
    %2113 = vmatprep.subr.bf16.mxu0 %v869
    %2114 = vmatpush1.bf16.msra.mxu0 %v868
    %2115 = vmatprep.subr.bf16.mxu0 %v872
    %2116 = vmatpush1.bf16.msra.mxu0 %v871
    %2117 = vmatprep.subr.bf16.mxu0 %v875
    %2118 = vmatpush1.bf16.msra.mxu0 %v874
    %2119 = vmatprep.subr.bf16.mxu0 %v878
    %2120 = vmatpush1.bf16.msra.mxu0 %v877
    %2121 = vmatprep.subr.bf16.mxu0 %v881
    %2122 = vmatpush1.bf16.msra.mxu0 %v880
    %2123 = vmatprep.subr.bf16.mxu0 %v884
    %2124 = vmatpush1.bf16.msra.mxu0 %v883
    %2125 = vmatprep.subr.bf16.mxu0 0
    %2126 = vmatpush1.bf16.msra.mxu0 0
    %2127 = vmatprep.subr.bf16.mxu0 0
    %2128 = vmatpush1.bf16.msra.mxu0 0
    %2129 = vmatprep.subr.bf16.mxu0 0
    %2130 = vmatpush1.bf16.msra.mxu0 0
    %2131 = vmatprep.subr.bf16.mxu0 0
    %2132 = vmatpush1.bf16.msra.mxu0 0
    %2133 = vmatprep.subr.bf16.mxu0 0
    %2134 = vmatpush1.bf16.msra.mxu0 0
    %2135 = vmatprep.subr.bf16.mxu0 0
    %2136 = vmatpush1.bf16.msra.mxu0 0
    %2137 = vmatprep.subr.bf16.mxu0 0
    %2138 = vmatpush1.bf16.msra.mxu0 0
    %2139 = vmatprep.subr.bf16.mxu0 0
    %2140 = vmatpush1.bf16.msra.mxu0 0
    %2141 = vmatprep.mubr.bf16.mxu0 0
    %2142 = vmatmul.mubr.bf16.gmra.mrb[0].mxu0 %v2108
    %v2143 = vpop.f32.mrb[0].mxu0
    %v2144 = vadd.f32 0.0, %v2143
    %v2145 = vpop.f32.mrb[0].mxu0
    %v2146 = vadd.f32 0.0, %v2145
    %v2147 = vpop.f32.mrb[0].mxu0
    %v2148 = vpop.f32.mrb[0].mxu0
    %2149 = vdwg.mxu0
    %2150 = vmatprep.subr.bf16.mxu0 0
    %2151 = vmatpush1.bf16.msra.mxu0 %v864
    %2152 = vmatprep.subr.bf16.mxu0 0
    %2153 = vmatpush1.bf16.msra.mxu0 %v867
    %2154 = vmatprep.subr.bf16.mxu0 0
    %2155 = vmatpush1.bf16.msra.mxu0 %v870
    %2156 = vmatprep.subr.bf16.mxu0 0
    %2157 = vmatpush1.bf16.msra.mxu0 %v873
    %2158 = vmatprep.subr.bf16.mxu0 0
    %2159 = vmatpush1.bf16.msra.mxu0 %v876
    %2160 = vmatprep.subr.bf16.mxu0 0
    %2161 = vmatpush1.bf16.msra.mxu0 %v879
    %2162 = vmatprep.subr.bf16.mxu0 0
    %2163 = vmatpush1.bf16.msra.mxu0 %v882
    %2164 = vmatprep.subr.bf16.mxu0 0
    %2165 = vmatpush1.bf16.msra.mxu0 %v885
    %2166 = vmatprep.subr.bf16.mxu0 0
    %2167 = vmatpush1.bf16.msra.mxu0 0
    %2168 = vmatprep.subr.bf16.mxu0 0
    %2169 = vmatpush1.bf16.msra.mxu0 0
    %2170 = vmatprep.subr.bf16.mxu0 0
    %2171 = vmatpush1.bf16.msra.mxu0 0
    %2172 = vmatprep.subr.bf16.mxu0 0
    %2173 = vmatpush1.bf16.msra.mxu0 0
    %2174 = vmatprep.subr.bf16.mxu0 0
    %2175 = vmatpush1.bf16.msra.mxu0 0
    %2176 = vmatprep.subr.bf16.mxu0 0
    %2177 = vmatpush1.bf16.msra.mxu0 0
    %2178 = vmatprep.subr.bf16.mxu0 0
    %2179 = vmatpush1.bf16.msra.mxu0 0
    %2180 = vmatprep.subr.bf16.mxu0 0
    %2181 = vmatpush1.bf16.msra.mxu0 0
    %2182 = vmatprep.mubr.bf16.mxu0 0
    %2183 = vmatmul.mubr.bf16.gmra.mrb[0].mxu0 %v2108
    %v2184 = vpop.f32.mrb[0].mxu0
    %v2185 = vadd.f32 0.0, %v2184
    %v2186 = vpop.f32.mrb[0].mxu0
    %v2187 = vpop.f32.mrb[0].mxu0
    %v2188 = vpop.f32.mrb[0].mxu0
    %2189 = vdwg.mxu0
    %v2190 = vadd.f32 %v2105, %v2144
    %v2191 = vxor.u32 %v2190, 2147483648
    %v2192 = vmul.f32 %v2191, 1.442695
    %v2193 = vpow.pop %v2192
    %v2194 = vadd.f32 %v2193, 1.0
    %v2195 = vrcp.pop %v2194
    %v2196 = vmul.f32 1.0, %v2195
    %v2197 = vadd.f32 %v2106, %v2146
    %v2198 = vxor.u32 %v2197, 2147483648
    %v2199 = vmul.f32 %v2198, 1.442695
    %v2200 = vpow.pop %v2199
    %v2201 = vadd.f32 %v2200, 1.0
    %v2202 = vrcp.pop %v2201
    %v2203 = vmul.f32 1.0, %v2202
    %v2204 = vadd.f32 %v2185, %v740
    %v2205 = vmul.f32 %v2196, %v2204
    %v2206 = vadd.f32 %v2107, %v2205
    %v2207 = vtanh.pop %v2206
    %v2208 = vsub.f32 %v2101, %v2207
    %v2209 = vmul.f32 %v2203, %v2208
    %v2210 = vadd.f32 %v2207, %v2209
    %s2211 = smul.u32 12, 3
    %s2212 = smul.addr %s2211, 8
    %s2213 = scalar_lea.vmem [#allocation2], %s2212
    %v2214 = vld [vmem:[%s2213] sm:$0xff]
    %v2215 = vld [vmem:[%s2213 + $0x8] sm:$0xff]
    %v2216 = vld [vmem:[%s2213 + $0x10] sm:$0xff]
    %v2217 = vpack.c.bf16 %v2210, %v2210
    %2218 = vmatprep.subr.bf16.mxu0 %v863
    %2219 = vmatpush1.bf16.msra.mxu0 %v862
    %2220 = vmatprep.subr.bf16.mxu0 %v866
    %2221 = vmatpush1.bf16.msra.mxu0 %v865
    %2222 = vmatprep.subr.bf16.mxu0 %v869
    %2223 = vmatpush1.bf16.msra.mxu0 %v868
    %2224 = vmatprep.subr.bf16.mxu0 %v872
    %2225 = vmatpush1.bf16.msra.mxu0 %v871
    %2226 = vmatprep.subr.bf16.mxu0 %v875
    %2227 = vmatpush1.bf16.msra.mxu0 %v874
    %2228 = vmatprep.subr.bf16.mxu0 %v878
    %2229 = vmatpush1.bf16.msra.mxu0 %v877
    %2230 = vmatprep.subr.bf16.mxu0 %v881
    %2231 = vmatpush1.bf16.msra.mxu0 %v880
    %2232 = vmatprep.subr.bf16.mxu0 %v884
    %2233 = vmatpush1.bf16.msra.mxu0 %v883
    %2234 = vmatprep.subr.bf16.mxu0 0
    %2235 = vmatpush1.bf16.msra.mxu0 0
    %2236 = vmatprep.subr.bf16.mxu0 0
    %2237 = vmatpush1.bf16.msra.mxu0 0
    %2238 = vmatprep.subr.bf16.mxu0 0
    %2239 = vmatpush1.bf16.msra.mxu0 0
    %2240 = vmatprep.subr.bf16.mxu0 0
    %2241 = vmatpush1.bf16.msra.mxu0 0
    %2242 = vmatprep.subr.bf16.mxu0 0
    %2243 = vmatpush1.bf16.msra.mxu0 0
    %2244 = vmatprep.subr.bf16.mxu0 0
    %2245 = vmatpush1.bf16.msra.mxu0 0
    %2246 = vmatprep.subr.bf16.mxu0 0
    %2247 = vmatpush1.bf16.msra.mxu0 0
    %2248 = vmatprep.subr.bf16.mxu0 0
    %2249 = vmatpush1.bf16.msra.mxu0 0
    %2250 = vmatprep.mubr.bf16.mxu0 0
    %2251 = vmatmul.mubr.bf16.gmra.mrb[0].mxu0 %v2217
    %v2252 = vpop.f32.mrb[0].mxu0
    %v2253 = vadd.f32 0.0, %v2252
    %v2254 = vpop.f32.mrb[0].mxu0
    %v2255 = vadd.f32 0.0, %v2254
    %v2256 = vpop.f32.mrb[0].mxu0
    %v2257 = vpop.f32.mrb[0].mxu0
    %2258 = vdwg.mxu0
    %2259 = vmatprep.subr.bf16.mxu0 0
    %2260 = vmatpush1.bf16.msra.mxu0 %v864
    %2261 = vmatprep.subr.bf16.mxu0 0
    %2262 = vmatpush1.bf16.msra.mxu0 %v867
    %2263 = vmatprep.subr.bf16.mxu0 0
    %2264 = vmatpush1.bf16.msra.mxu0 %v870
    %2265 = vmatprep.subr.bf16.mxu0 0
    %2266 = vmatpush1.bf16.msra.mxu0 %v873
    %2267 = vmatprep.subr.bf16.mxu0 0
    %2268 = vmatpush1.bf16.msra.mxu0 %v876
    %2269 = vmatprep.subr.bf16.mxu0 0
    %2270 = vmatpush1.bf16.msra.mxu0 %v879
    %2271 = vmatprep.subr.bf16.mxu0 0
    %2272 = vmatpush1.bf16.msra.mxu0 %v882
    %2273 = vmatprep.subr.bf16.mxu0 0
    %2274 = vmatpush1.bf16.msra.mxu0 %v885
    %2275 = vmatprep.subr.bf16.mxu0 0
    %2276 = vmatpush1.bf16.msra.mxu0 0
    %2277 = vmatprep.subr.bf16.mxu0 0
    %2278 = vmatpush1.bf16.msra.mxu0 0
    %2279 = vmatprep.subr.bf16.mxu0 0
    %2280 = vmatpush1.bf16.msra.mxu0 0
    %2281 = vmatprep.subr.bf16.mxu0 0
    %2282 = vmatpush1.bf16.msra.mxu0 0
    %2283 = vmatprep.subr.bf16.mxu0 0
    %2284 = vmatpush1.bf16.msra.mxu0 0
    %2285 = vmatprep.subr.bf16.mxu0 0
    %2286 = vmatpush1.bf16.msra.mxu0 0
    %2287 = vmatprep.subr.bf16.mxu0 0
    %2288 = vmatpush1.bf16.msra.mxu0 0
    %2289 = vmatprep.subr.bf16.mxu0 0
    %2290 = vmatpush1.bf16.msra.mxu0 0
    %2291 = vmatprep.mubr.bf16.mxu0 0
    %2292 = vmatmul.mubr.bf16.gmra.mrb[0].mxu0 %v2217
    %v2293 = vpop.f32.mrb[0].mxu0
    %v2294 = vadd.f32 0.0, %v2293
    %v2295 = vpop.f32.mrb[0].mxu0
    %v2296 = vpop.f32.mrb[0].mxu0
    %v2297 = vpop.f32.mrb[0].mxu0
    %2298 = vdwg.mxu0
    %v2299 = vadd.f32 %v2214, %v2253
    %v2300 = vxor.u32 %v2299, 2147483648
    %v2301 = vmul.f32 %v2300, 1.442695
    %v2302 = vpow.pop %v2301
    %v2303 = vadd.f32 %v2302, 1.0
    %v2304 = vrcp.pop %v2303
    %v2305 = vmul.f32 1.0, %v2304
    %v2306 = vadd.f32 %v2215, %v2255
    %v2307 = vxor.u32 %v2306, 2147483648
    %v2308 = vmul.f32 %v2307, 1.442695
    %v2309 = vpow.pop %v2308
    %v2310 = vadd.f32 %v2309, 1.0
    %v2311 = vrcp.pop %v2310
    %v2312 = vmul.f32 1.0, %v2311
    %v2313 = vadd.f32 %v2294, %v740
    %v2314 = vmul.f32 %v2305, %v2313
    %v2315 = vadd.f32 %v2216, %v2314
    %v2316 = vtanh.pop %v2315
    %v2317 = vsub.f32 %v2210, %v2316
    %v2318 = vmul.f32 %v2312, %v2317
    %v2319 = vadd.f32 %v2316, %v2318
    %s2320 = smul.u32 13, 3
    %s2321 = smul.addr %s2320, 8
    %s2322 = scalar_lea.vmem [#allocation2], %s2321
    %v2323 = vld [vmem:[%s2322] sm:$0xff]
    %v2324 = vld [vmem:[%s2322 + $0x8] sm:$0xff]
    %v2325 = vld [vmem:[%s2322 + $0x10] sm:$0xff]
    %v2326 = vpack.c.bf16 %v2319, %v2319
    %2327 = vmatprep.subr.bf16.mxu0 %v863
    %2328 = vmatpush1.bf16.msra.mxu0 %v862
    %2329 = vmatprep.subr.bf16.mxu0 %v866
    %2330 = vmatpush1.bf16.msra.mxu0 %v865
    %2331 = vmatprep.subr.bf16.mxu0 %v869
    %2332 = vmatpush1.bf16.msra.mxu0 %v868
    %2333 = vmatprep.subr.bf16.mxu0 %v872
    %2334 = vmatpush1.bf16.msra.mxu0 %v871
    %2335 = vmatprep.subr.bf16.mxu0 %v875
    %2336 = vmatpush1.bf16.msra.mxu0 %v874
    %2337 = vmatprep.subr.bf16.mxu0 %v878
    %2338 = vmatpush1.bf16.msra.mxu0 %v877
    %2339 = vmatprep.subr.bf16.mxu0 %v881
    %2340 = vmatpush1.bf16.msra.mxu0 %v880
    %2341 = vmatprep.subr.bf16.mxu0 %v884
    %2342 = vmatpush1.bf16.msra.mxu0 %v883
    %2343 = vmatprep.subr.bf16.mxu0 0
    %2344 = vmatpush1.bf16.msra.mxu0 0
    %2345 = vmatprep.subr.bf16.mxu0 0
    %2346 = vmatpush1.bf16.msra.mxu0 0
    %2347 = vmatprep.subr.bf16.mxu0 0
    %2348 = vmatpush1.bf16.msra.mxu0 0
    %2349 = vmatprep.subr.bf16.mxu0 0
    %2350 = vmatpush1.bf16.msra.mxu0 0
    %2351 = vmatprep.subr.bf16.mxu0 0
    %2352 = vmatpush1.bf16.msra.mxu0 0
    %2353 = vmatprep.subr.bf16.mxu0 0
    %2354 = vmatpush1.bf16.msra.mxu0 0
    %2355 = vmatprep.subr.bf16.mxu0 0
    %2356 = vmatpush1.bf16.msra.mxu0 0
    %2357 = vmatprep.subr.bf16.mxu0 0
    %2358 = vmatpush1.bf16.msra.mxu0 0
    %2359 = vmatprep.mubr.bf16.mxu0 0
    %2360 = vmatmul.mubr.bf16.gmra.mrb[0].mxu0 %v2326
    %v2361 = vpop.f32.mrb[0].mxu0
    %v2362 = vadd.f32 0.0, %v2361
    %v2363 = vpop.f32.mrb[0].mxu0
    %v2364 = vadd.f32 0.0, %v2363
    %v2365 = vpop.f32.mrb[0].mxu0
    %v2366 = vpop.f32.mrb[0].mxu0
    %2367 = vdwg.mxu0
    %2368 = vmatprep.subr.bf16.mxu0 0
    %2369 = vmatpush1.bf16.msra.mxu0 %v864
    %2370 = vmatprep.subr.bf16.mxu0 0
    %2371 = vmatpush1.bf16.msra.mxu0 %v867
    %2372 = vmatprep.subr.bf16.mxu0 0
    %2373 = vmatpush1.bf16.msra.mxu0 %v870
    %2374 = vmatprep.subr.bf16.mxu0 0
    %2375 = vmatpush1.bf16.msra.mxu0 %v873
    %2376 = vmatprep.subr.bf16.mxu0 0
    %2377 = vmatpush1.bf16.msra.mxu0 %v876
    %2378 = vmatprep.subr.bf16.mxu0 0
    %2379 = vmatpush1.bf16.msra.mxu0 %v879
    %2380 = vmatprep.subr.bf16.mxu0 0
    %2381 = vmatpush1.bf16.msra.mxu0 %v882
    %2382 = vmatprep.subr.bf16.mxu0 0
    %2383 = vmatpush1.bf16.msra.mxu0 %v885
    %2384 = vmatprep.subr.bf16.mxu0 0
    %2385 = vmatpush1.bf16.msra.mxu0 0
    %2386 = vmatprep.subr.bf16.mxu0 0
    %2387 = vmatpush1.bf16.msra.mxu0 0
    %2388 = vmatprep.subr.bf16.mxu0 0
    %2389 = vmatpush1.bf16.msra.mxu0 0
    %2390 = vmatprep.subr.bf16.mxu0 0
    %2391 = vmatpush1.bf16.msra.mxu0 0
    %2392 = vmatprep.subr.bf16.mxu0 0
    %2393 = vmatpush1.bf16.msra.mxu0 0
    %2394 = vmatprep.subr.bf16.mxu0 0
    %2395 = vmatpush1.bf16.msra.mxu0 0
    %2396 = vmatprep.subr.bf16.mxu0 0
    %2397 = vmatpush1.bf16.msra.mxu0 0
    %2398 = vmatprep.subr.bf16.mxu0 0
    %2399 = vmatpush1.bf16.msra.mxu0 0
    %2400 = vmatprep.mubr.bf16.mxu0 0
    %2401 = vmatmul.mubr.bf16.gmra.mrb[0].mxu0 %v2326
    %v2402 = vpop.f32.mrb[0].mxu0
    %v2403 = vadd.f32 0.0, %v2402
    %v2404 = vpop.f32.mrb[0].mxu0
    %v2405 = vpop.f32.mrb[0].mxu0
    %v2406 = vpop.f32.mrb[0].mxu0
    %2407 = vdwg.mxu0
    %v2408 = vadd.f32 %v2323, %v2362
    %v2409 = vxor.u32 %v2408, 2147483648
    %v2410 = vmul.f32 %v2409, 1.442695
    %v2411 = vpow.pop %v2410
    %v2412 = vadd.f32 %v2411, 1.0
    %v2413 = vrcp.pop %v2412
    %v2414 = vmul.f32 1.0, %v2413
    %v2415 = vadd.f32 %v2324, %v2364
    %v2416 = vxor.u32 %v2415, 2147483648
    %v2417 = vmul.f32 %v2416, 1.442695
    %v2418 = vpow.pop %v2417
    %v2419 = vadd.f32 %v2418, 1.0
    %v2420 = vrcp.pop %v2419
    %v2421 = vmul.f32 1.0, %v2420
    %v2422 = vadd.f32 %v2403, %v740
    %v2423 = vmul.f32 %v2414, %v2422
    %v2424 = vadd.f32 %v2325, %v2423
    %v2425 = vtanh.pop %v2424
    %v2426 = vsub.f32 %v2319, %v2425
    %v2427 = vmul.f32 %v2421, %v2426
    %v2428 = vadd.f32 %v2425, %v2427
    %s2429 = smul.u32 14, 3
    %s2430 = smul.addr %s2429, 8
    %s2431 = scalar_lea.vmem [#allocation2], %s2430
    %v2432 = vld [vmem:[%s2431] sm:$0xff]
    %v2433 = vld [vmem:[%s2431 + $0x8] sm:$0xff]
    %v2434 = vld [vmem:[%s2431 + $0x10] sm:$0xff]
    %v2435 = vpack.c.bf16 %v2428, %v2428
    %2436 = vmatprep.subr.bf16.mxu0 %v863
    %2437 = vmatpush1.bf16.msra.mxu0 %v862
    %2438 = vmatprep.subr.bf16.mxu0 %v866
    %2439 = vmatpush1.bf16.msra.mxu0 %v865
    %2440 = vmatprep.subr.bf16.mxu0 %v869
    %2441 = vmatpush1.bf16.msra.mxu0 %v868
    %2442 = vmatprep.subr.bf16.mxu0 %v872
    %2443 = vmatpush1.bf16.msra.mxu0 %v871
    %2444 = vmatprep.subr.bf16.mxu0 %v875
    %2445 = vmatpush1.bf16.msra.mxu0 %v874
    %2446 = vmatprep.subr.bf16.mxu0 %v878
    %2447 = vmatpush1.bf16.msra.mxu0 %v877
    %2448 = vmatprep.subr.bf16.mxu0 %v881
    %2449 = vmatpush1.bf16.msra.mxu0 %v880
    %2450 = vmatprep.subr.bf16.mxu0 %v884
    %2451 = vmatpush1.bf16.msra.mxu0 %v883
    %2452 = vmatprep.subr.bf16.mxu0 0
    %2453 = vmatpush1.bf16.msra.mxu0 0
    %2454 = vmatprep.subr.bf16.mxu0 0
    %2455 = vmatpush1.bf16.msra.mxu0 0
    %2456 = vmatprep.subr.bf16.mxu0 0
    %2457 = vmatpush1.bf16.msra.mxu0 0
    %2458 = vmatprep.subr.bf16.mxu0 0
    %2459 = vmatpush1.bf16.msra.mxu0 0
    %2460 = vmatprep.subr.bf16.mxu0 0
    %2461 = vmatpush1.bf16.msra.mxu0 0
    %2462 = vmatprep.subr.bf16.mxu0 0
    %2463 = vmatpush1.bf16.msra.mxu0 0
    %2464 = vmatprep.subr.bf16.mxu0 0
    %2465 = vmatpush1.bf16.msra.mxu0 0
    %2466 = vmatprep.subr.bf16.mxu0 0
    %2467 = vmatpush1.bf16.msra.mxu0 0
    %2468 = vmatprep.mubr.bf16.mxu0 0
    %2469 = vmatmul.mubr.bf16.gmra.mrb[0].mxu0 %v2435
    %v2470 = vpop.f32.mrb[0].mxu0
    %v2471 = vadd.f32 0.0, %v2470
    %v2472 = vpop.f32.mrb[0].mxu0
    %v2473 = vadd.f32 0.0, %v2472
    %v2474 = vpop.f32.mrb[0].mxu0
    %v2475 = vpop.f32.mrb[0].mxu0
    %2476 = vdwg.mxu0
    %2477 = vmatprep.subr.bf16.mxu0 0
    %2478 = vmatpush1.bf16.msra.mxu0 %v864
    %2479 = vmatprep.subr.bf16.mxu0 0
    %2480 = vmatpush1.bf16.msra.mxu0 %v867
    %2481 = vmatprep.subr.bf16.mxu0 0
    %2482 = vmatpush1.bf16.msra.mxu0 %v870
    %2483 = vmatprep.subr.bf16.mxu0 0
    %2484 = vmatpush1.bf16.msra.mxu0 %v873
    %2485 = vmatprep.subr.bf16.mxu0 0
    %2486 = vmatpush1.bf16.msra.mxu0 %v876
    %2487 = vmatprep.subr.bf16.mxu0 0
    %2488 = vmatpush1.bf16.msra.mxu0 %v879
    %2489 = vmatprep.subr.bf16.mxu0 0
    %2490 = vmatpush1.bf16.msra.mxu0 %v882
    %2491 = vmatprep.subr.bf16.mxu0 0
    %2492 = vmatpush1.bf16.msra.mxu0 %v885
    %2493 = vmatprep.subr.bf16.mxu0 0
    %2494 = vmatpush1.bf16.msra.mxu0 0
    %2495 = vmatprep.subr.bf16.mxu0 0
    %2496 = vmatpush1.bf16.msra.mxu0 0
    %2497 = vmatprep.subr.bf16.mxu0 0
    %2498 = vmatpush1.bf16.msra.mxu0 0
    %2499 = vmatprep.subr.bf16.mxu0 0
    %2500 = vmatpush1.bf16.msra.mxu0 0
    %2501 = vmatprep.subr.bf16.mxu0 0
    %2502 = vmatpush1.bf16.msra.mxu0 0
    %2503 = vmatprep.subr.bf16.mxu0 0
    %2504 = vmatpush1.bf16.msra.mxu0 0
    %2505 = vmatprep.subr.bf16.mxu0 0
    %2506 = vmatpush1.bf16.msra.mxu0 0
    %2507 = vmatprep.subr.bf16.mxu0 0
    %2508 = vmatpush1.bf16.msra.mxu0 0
    %2509 = vmatprep.mubr.bf16.mxu0 0
    %2510 = vmatmul.mubr.bf16.gmra.mrb[0].mxu0 %v2435
    %v2511 = vpop.f32.mrb[0].mxu0
    %v2512 = vadd.f32 0.0, %v2511
    %v2513 = vpop.f32.mrb[0].mxu0
    %v2514 = vpop.f32.mrb[0].mxu0
    %v2515 = vpop.f32.mrb[0].mxu0
    %2516 = vdwg.mxu0
    %v2517 = vadd.f32 %v2432, %v2471
    %v2518 = vxor.u32 %v2517, 2147483648
    %v2519 = vmul.f32 %v2518, 1.442695
    %v2520 = vpow.pop %v2519
    %v2521 = vadd.f32 %v2520, 1.0
    %v2522 = vrcp.pop %v2521
    %v2523 = vmul.f32 1.0, %v2522
    %v2524 = vadd.f32 %v2433, %v2473
    %v2525 = vxor.u32 %v2524, 2147483648
    %v2526 = vmul.f32 %v2525, 1.442695
    %v2527 = vpow.pop %v2526
    %v2528 = vadd.f32 %v2527, 1.0
    %v2529 = vrcp.pop %v2528
    %v2530 = vmul.f32 1.0, %v2529
    %v2531 = vadd.f32 %v2512, %v740
    %v2532 = vmul.f32 %v2523, %v2531
    %v2533 = vadd.f32 %v2434, %v2532
    %v2534 = vtanh.pop %v2533
    %v2535 = vsub.f32 %v2428, %v2534
    %v2536 = vmul.f32 %v2530, %v2535
    %v2537 = vadd.f32 %v2534, %v2536
    %s2538 = smul.u32 15, 3
    %s2539 = smul.addr %s2538, 8
    %s2540 = scalar_lea.vmem [#allocation2], %s2539
    %v2541 = vld [vmem:[%s2540] sm:$0xff]
    %v2542 = vld [vmem:[%s2540 + $0x8] sm:$0xff]
    %v2543 = vld [vmem:[%s2540 + $0x10] sm:$0xff]
    %v2544 = vpack.c.bf16 %v2537, %v2537
    %2545 = vmatprep.subr.bf16.mxu0 %v863
    %2546 = vmatpush1.bf16.msra.mxu0 %v862
    %2547 = vmatprep.subr.bf16.mxu0 %v866
    %2548 = vmatpush1.bf16.msra.mxu0 %v865
    %2549 = vmatprep.subr.bf16.mxu0 %v869
    %2550 = vmatpush1.bf16.msra.mxu0 %v868
    %2551 = vmatprep.subr.bf16.mxu0 %v872
    %2552 = vmatpush1.bf16.msra.mxu0 %v871
    %2553 = vmatprep.subr.bf16.mxu0 %v875
    %2554 = vmatpush1.bf16.msra.mxu0 %v874
    %2555 = vmatprep.subr.bf16.mxu0 %v878
    %2556 = vmatpush1.bf16.msra.mxu0 %v877
    %2557 = vmatprep.subr.bf16.mxu0 %v881
    %2558 = vmatpush1.bf16.msra.mxu0 %v880
    %2559 = vmatprep.subr.bf16.mxu0 %v884
    %2560 = vmatpush1.bf16.msra.mxu0 %v883
    %2561 = vmatprep.subr.bf16.mxu0 0
    %2562 = vmatpush1.bf16.msra.mxu0 0
    %2563 = vmatprep.subr.bf16.mxu0 0
    %2564 = vmatpush1.bf16.msra.mxu0 0
    %2565 = vmatprep.subr.bf16.mxu0 0
    %2566 = vmatpush1.bf16.msra.mxu0 0
    %2567 = vmatprep.subr.bf16.mxu0 0
    %2568 = vmatpush1.bf16.msra.mxu0 0
    %2569 = vmatprep.subr.bf16.mxu0 0
    %2570 = vmatpush1.bf16.msra.mxu0 0
    %2571 = vmatprep.subr.bf16.mxu0 0
    %2572 = vmatpush1.bf16.msra.mxu0 0
    %2573 = vmatprep.subr.bf16.mxu0 0
    %2574 = vmatpush1.bf16.msra.mxu0 0
    %2575 = vmatprep.subr.bf16.mxu0 0
    %2576 = vmatpush1.bf16.msra.mxu0 0
    %2577 = vmatprep.mubr.bf16.mxu0 0
    %2578 = vmatmul.mubr.bf16.gmra.mrb[0].mxu0 %v2544
    %v2579 = vpop.f32.mrb[0].mxu0
    %v2580 = vadd.f32 0.0, %v2579
    %v2581 = vpop.f32.mrb[0].mxu0
    %v2582 = vadd.f32 0.0, %v2581
    %v2583 = vpop.f32.mrb[0].mxu0
    %v2584 = vpop.f32.mrb[0].mxu0
    %2585 = vdwg.mxu0
    %2586 = vmatprep.subr.bf16.mxu0 0
    %2587 = vmatpush1.bf16.msra.mxu0 %v864
    %2588 = vmatprep.subr.bf16.mxu0 0
    %2589 = vmatpush1.bf16.msra.mxu0 %v867
    %2590 = vmatprep.subr.bf16.mxu0 0
    %2591 = vmatpush1.bf16.msra.mxu0 %v870
    %2592 = vmatprep.subr.bf16.mxu0 0
    %2593 = vmatpush1.bf16.msra.mxu0 %v873
    %2594 = vmatprep.subr.bf16.mxu0 0
    %2595 = vmatpush1.bf16.msra.mxu0 %v876
    %2596 = vmatprep.subr.bf16.mxu0 0
    %2597 = vmatpush1.bf16.msra.mxu0 %v879
    %2598 = vmatprep.subr.bf16.mxu0 0
    %2599 = vmatpush1.bf16.msra.mxu0 %v882
    %2600 = vmatprep.subr.bf16.mxu0 0
    %2601 = vmatpush1.bf16.msra.mxu0 %v885
    %2602 = vmatprep.subr.bf16.mxu0 0
    %2603 = vmatpush1.bf16.msra.mxu0 0
    %2604 = vmatprep.subr.bf16.mxu0 0
    %2605 = vmatpush1.bf16.msra.mxu0 0
    %2606 = vmatprep.subr.bf16.mxu0 0
    %2607 = vmatpush1.bf16.msra.mxu0 0
    %2608 = vmatprep.subr.bf16.mxu0 0
    %2609 = vmatpush1.bf16.msra.mxu0 0
    %2610 = vmatprep.subr.bf16.mxu0 0
    %2611 = vmatpush1.bf16.msra.mxu0 0
    %2612 = vmatprep.subr.bf16.mxu0 0
    %2613 = vmatpush1.bf16.msra.mxu0 0
    %2614 = vmatprep.subr.bf16.mxu0 0
    %2615 = vmatpush1.bf16.msra.mxu0 0
    %2616 = vmatprep.subr.bf16.mxu0 0
    %2617 = vmatpush1.bf16.msra.mxu0 0
    %2618 = vmatprep.mubr.bf16.mxu0 0
    %2619 = vmatmul.mubr.bf16.gmra.mrb[0].mxu0 %v2544
    %v2620 = vpop.f32.mrb[0].mxu0
    %v2621 = vadd.f32 0.0, %v2620
    %v2622 = vpop.f32.mrb[0].mxu0
    %v2623 = vpop.f32.mrb[0].mxu0
    %v2624 = vpop.f32.mrb[0].mxu0
    %2625 = vdwg.mxu0
    %v2626 = vadd.f32 %v2541, %v2580
    %v2627 = vxor.u32 %v2626, 2147483648
    %v2628 = vmul.f32 %v2627, 1.442695
    %v2629 = vpow.pop %v2628
    %v2630 = vadd.f32 %v2629, 1.0
    %v2631 = vrcp.pop %v2630
    %v2632 = vmul.f32 1.0, %v2631
    %v2633 = vadd.f32 %v2542, %v2582
    %v2634 = vxor.u32 %v2633, 2147483648
    %v2635 = vmul.f32 %v2634, 1.442695
    %v2636 = vpow.pop %v2635
    %v2637 = vadd.f32 %v2636, 1.0
    %v2638 = vrcp.pop %v2637
    %v2639 = vmul.f32 1.0, %v2638
    %v2640 = vadd.f32 %v2621, %v740
    %v2641 = vmul.f32 %v2632, %v2640
    %v2642 = vadd.f32 %v2543, %v2641
    %v2643 = vtanh.pop %v2642
    %v2644 = vsub.f32 %v2537, %v2643
    %v2645 = vmul.f32 %v2639, %v2644
    %v2646 = vadd.f32 %v2643, %v2645
    %s2647 = smul.u32 16, 3
    %s2648 = smul.addr %s2647, 8
    %s2649 = scalar_lea.vmem [#allocation2], %s2648
    %v2650 = vld [vmem:[%s2649] sm:$0xff]
    %v2651 = vld [vmem:[%s2649 + $0x8] sm:$0xff]
    %v2652 = vld [vmem:[%s2649 + $0x10] sm:$0xff]
    %v2653 = vpack.c.bf16 %v2646, %v2646
    %2654 = vmatprep.subr.bf16.mxu0 %v863
    %2655 = vmatpush1.bf16.msra.mxu0 %v862
    %2656 = vmatprep.subr.bf16.mxu0 %v866
    %2657 = vmatpush1.bf16.msra.mxu0 %v865
    %2658 = vmatprep.subr.bf16.mxu0 %v869
    %2659 = vmatpush1.bf16.msra.mxu0 %v868
    %2660 = vmatprep.subr.bf16.mxu0 %v872
    %2661 = vmatpush1.bf16.msra.mxu0 %v871
    %2662 = vmatprep.subr.bf16.mxu0 %v875
    %2663 = vmatpush1.bf16.msra.mxu0 %v874
    %2664 = vmatprep.subr.bf16.mxu0 %v878
    %2665 = vmatpush1.bf16.msra.mxu0 %v877
    %2666 = vmatprep.subr.bf16.mxu0 %v881
    %2667 = vmatpush1.bf16.msra.mxu0 %v880
    %2668 = vmatprep.subr.bf16.mxu0 %v884
    %2669 = vmatpush1.bf16.msra.mxu0 %v883
    %2670 = vmatprep.subr.bf16.mxu0 0
    %2671 = vmatpush1.bf16.msra.mxu0 0
    %2672 = vmatprep.subr.bf16.mxu0 0
    %2673 = vmatpush1.bf16.msra.mxu0 0
    %2674 = vmatprep.subr.bf16.mxu0 0
    %2675 = vmatpush1.bf16.msra.mxu0 0
    %2676 = vmatprep.subr.bf16.mxu0 0
    %2677 = vmatpush1.bf16.msra.mxu0 0
    %2678 = vmatprep.subr.bf16.mxu0 0
    %2679 = vmatpush1.bf16.msra.mxu0 0
    %2680 = vmatprep.subr.bf16.mxu0 0
    %2681 = vmatpush1.bf16.msra.mxu0 0
    %2682 = vmatprep.subr.bf16.mxu0 0
    %2683 = vmatpush1.bf16.msra.mxu0 0
    %2684 = vmatprep.subr.bf16.mxu0 0
    %2685 = vmatpush1.bf16.msra.mxu0 0
    %2686 = vmatprep.mubr.bf16.mxu0 0
    %2687 = vmatmul.mubr.bf16.gmra.mrb[0].mxu0 %v2653
    %v2688 = vpop.f32.mrb[0].mxu0
    %v2689 = vadd.f32 0.0, %v2688
    %v2690 = vpop.f32.mrb[0].mxu0
    %v2691 = vadd.f32 0.0, %v2690
    %v2692 = vpop.f32.mrb[0].mxu0
    %v2693 = vpop.f32.mrb[0].mxu0
    %2694 = vdwg.mxu0
    %2695 = vmatprep.subr.bf16.mxu0 0
    %2696 = vmatpush1.bf16.msra.mxu0 %v864
    %2697 = vmatprep.subr.bf16.mxu0 0
    %2698 = vmatpush1.bf16.msra.mxu0 %v867
    %2699 = vmatprep.subr.bf16.mxu0 0
    %2700 = vmatpush1.bf16.msra.mxu0 %v870
    %2701 = vmatprep.subr.bf16.mxu0 0
    %2702 = vmatpush1.bf16.msra.mxu0 %v873
    %2703 = vmatprep.subr.bf16.mxu0 0
    %2704 = vmatpush1.bf16.msra.mxu0 %v876
    %2705 = vmatprep.subr.bf16.mxu0 0
    %2706 = vmatpush1.bf16.msra.mxu0 %v879
    %2707 = vmatprep.subr.bf16.mxu0 0
    %2708 = vmatpush1.bf16.msra.mxu0 %v882
    %2709 = vmatprep.subr.bf16.mxu0 0
    %2710 = vmatpush1.bf16.msra.mxu0 %v885
    %2711 = vmatprep.subr.bf16.mxu0 0
    %2712 = vmatpush1.bf16.msra.mxu0 0
    %2713 = vmatprep.subr.bf16.mxu0 0
    %2714 = vmatpush1.bf16.msra.mxu0 0
    %2715 = vmatprep.subr.bf16.mxu0 0
    %2716 = vmatpush1.bf16.msra.mxu0 0
    %2717 = vmatprep.subr.bf16.mxu0 0
    %2718 = vmatpush1.bf16.msra.mxu0 0
    %2719 = vmatprep.subr.bf16.mxu0 0
    %2720 = vmatpush1.bf16.msra.mxu0 0
    %2721 = vmatprep.subr.bf16.mxu0 0
    %2722 = vmatpush1.bf16.msra.mxu0 0
    %2723 = vmatprep.subr.bf16.mxu0 0
    %2724 = vmatpush1.bf16.msra.mxu0 0
    %2725 = vmatprep.subr.bf16.mxu0 0
    %2726 = vmatpush1.bf16.msra.mxu0 0
    %2727 = vmatprep.mubr.bf16.mxu0 0
    %2728 = vmatmul.mubr.bf16.gmra.mrb[0].mxu0 %v2653
    %v2729 = vpop.f32.mrb[0].mxu0
    %v2730 = vadd.f32 0.0, %v2729
    %v2731 = vpop.f32.mrb[0].mxu0
    %v2732 = vpop.f32.mrb[0].mxu0
    %v2733 = vpop.f32.mrb[0].mxu0
    %2734 = vdwg.mxu0
    %v2735 = vadd.f32 %v2650, %v2689
    %v2736 = vxor.u32 %v2735, 2147483648
    %v2737 = vmul.f32 %v2736, 1.442695
    %v2738 = vpow.pop %v2737
    %v2739 = vadd.f32 %v2738, 1.0
    %v2740 = vrcp.pop %v2739
    %v2741 = vmul.f32 1.0, %v2740
    %v2742 = vadd.f32 %v2651, %v2691
    %v2743 = vxor.u32 %v2742, 2147483648
    %v2744 = vmul.f32 %v2743, 1.442695
    %v2745 = vpow.pop %v2744
    %v2746 = vadd.f32 %v2745, 1.0
    %v2747 = vrcp.pop %v2746
    %v2748 = vmul.f32 1.0, %v2747
    %v2749 = vadd.f32 %v2730, %v740
    %v2750 = vmul.f32 %v2741, %v2749
    %v2751 = vadd.f32 %v2652, %v2750
    %v2752 = vtanh.pop %v2751
    %v2753 = vsub.f32 %v2646, %v2752
    %v2754 = vmul.f32 %v2748, %v2753
    %v2755 = vadd.f32 %v2752, %v2754
    %s2756 = smul.u32 17, 3
    %s2757 = smul.addr %s2756, 8
    %s2758 = scalar_lea.vmem [#allocation2], %s2757
    %v2759 = vld [vmem:[%s2758] sm:$0xff]
    %v2760 = vld [vmem:[%s2758 + $0x8] sm:$0xff]
    %v2761 = vld [vmem:[%s2758 + $0x10] sm:$0xff]
    %v2762 = vpack.c.bf16 %v2755, %v2755
    %2763 = vmatprep.subr.bf16.mxu0 %v863
    %2764 = vmatpush1.bf16.msra.mxu0 %v862
    %2765 = vmatprep.subr.bf16.mxu0 %v866
    %2766 = vmatpush1.bf16.msra.mxu0 %v865
    %2767 = vmatprep.subr.bf16.mxu0 %v869
    %2768 = vmatpush1.bf16.msra.mxu0 %v868
    %2769 = vmatprep.subr.bf16.mxu0 %v872
    %2770 = vmatpush1.bf16.msra.mxu0 %v871
    %2771 = vmatprep.subr.bf16.mxu0 %v875
    %2772 = vmatpush1.bf16.msra.mxu0 %v874
    %2773 = vmatprep.subr.bf16.mxu0 %v878
    %2774 = vmatpush1.bf16.msra.mxu0 %v877
    %2775 = vmatprep.subr.bf16.mxu0 %v881
    %2776 = vmatpush1.bf16.msra.mxu0 %v880
    %2777 = vmatprep.subr.bf16.mxu0 %v884
    %2778 = vmatpush1.bf16.msra.mxu0 %v883
    %2779 = vmatprep.subr.bf16.mxu0 0
    %2780 = vmatpush1.bf16.msra.mxu0 0
    %2781 = vmatprep.subr.bf16.mxu0 0
    %2782 = vmatpush1.bf16.msra.mxu0 0
    %2783 = vmatprep.subr.bf16.mxu0 0
    %2784 = vmatpush1.bf16.msra.mxu0 0
    %2785 = vmatprep.subr.bf16.mxu0 0
    %2786 = vmatpush1.bf16.msra.mxu0 0
    %2787 = vmatprep.subr.bf16.mxu0 0
    %2788 = vmatpush1.bf16.msra.mxu0 0
    %2789 = vmatprep.subr.bf16.mxu0 0
    %2790 = vmatpush1.bf16.msra.mxu0 0
    %2791 = vmatprep.subr.bf16.mxu0 0
    %2792 = vmatpush1.bf16.msra.mxu0 0
    %2793 = vmatprep.subr.bf16.mxu0 0
    %2794 = vmatpush1.bf16.msra.mxu0 0
    %2795 = vmatprep.mubr.bf16.mxu0 0
    %2796 = vmatmul.mubr.bf16.gmra.mrb[0].mxu0 %v2762
    %v2797 = vpop.f32.mrb[0].mxu0
    %v2798 = vadd.f32 0.0, %v2797
    %v2799 = vpop.f32.mrb[0].mxu0
    %v2800 = vadd.f32 0.0, %v2799
    %v2801 = vpop.f32.mrb[0].mxu0
    %v2802 = vpop.f32.mrb[0].mxu0
    %2803 = vdwg.mxu0
    %2804 = vmatprep.subr.bf16.mxu0 0
    %2805 = vmatpush1.bf16.msra.mxu0 %v864
    %2806 = vmatprep.subr.bf16.mxu0 0
    %2807 = vmatpush1.bf16.msra.mxu0 %v867
    %2808 = vmatprep.subr.bf16.mxu0 0
    %2809 = vmatpush1.bf16.msra.mxu0 %v870
    %2810 = vmatprep.subr.bf16.mxu0 0
    %2811 = vmatpush1.bf16.msra.mxu0 %v873
    %2812 = vmatprep.subr.bf16.mxu0 0
    %2813 = vmatpush1.bf16.msra.mxu0 %v876
    %2814 = vmatprep.subr.bf16.mxu0 0
    %2815 = vmatpush1.bf16.msra.mxu0 %v879
    %2816 = vmatprep.subr.bf16.mxu0 0
    %2817 = vmatpush1.bf16.msra.mxu0 %v882
    %2818 = vmatprep.subr.bf16.mxu0 0
    %2819 = vmatpush1.bf16.msra.mxu0 %v885
    %2820 = vmatprep.subr.bf16.mxu0 0
    %2821 = vmatpush1.bf16.msra.mxu0 0
    %2822 = vmatprep.subr.bf16.mxu0 0
    %2823 = vmatpush1.bf16.msra.mxu0 0
    %2824 = vmatprep.subr.bf16.mxu0 0
    %2825 = vmatpush1.bf16.msra.mxu0 0
    %2826 = vmatprep.subr.bf16.mxu0 0
    %2827 = vmatpush1.bf16.msra.mxu0 0
    %2828 = vmatprep.subr.bf16.mxu0 0
    %2829 = vmatpush1.bf16.msra.mxu0 0
    %2830 = vmatprep.subr.bf16.mxu0 0
    %2831 = vmatpush1.bf16.msra.mxu0 0
    %2832 = vmatprep.subr.bf16.mxu0 0
    %2833 = vmatpush1.bf16.msra.mxu0 0
    %2834 = vmatprep.subr.bf16.mxu0 0
    %2835 = vmatpush1.bf16.msra.mxu0 0
    %2836 = vmatprep.mubr.bf16.mxu0 0
    %2837 = vmatmul.mubr.bf16.gmra.mrb[0].mxu0 %v2762
    %v2838 = vpop.f32.mrb[0].mxu0
    %v2839 = vadd.f32 0.0, %v2838
    %v2840 = vpop.f32.mrb[0].mxu0
    %v2841 = vpop.f32.mrb[0].mxu0
    %v2842 = vpop.f32.mrb[0].mxu0
    %2843 = vdwg.mxu0
    %v2844 = vadd.f32 %v2759, %v2798
    %v2845 = vxor.u32 %v2844, 2147483648
    %v2846 = vmul.f32 %v2845, 1.442695
    %v2847 = vpow.pop %v2846
    %v2848 = vadd.f32 %v2847, 1.0
    %v2849 = vrcp.pop %v2848
    %v2850 = vmul.f32 1.0, %v2849
    %v2851 = vadd.f32 %v2760, %v2800
    %v2852 = vxor.u32 %v2851, 2147483648
    %v2853 = vmul.f32 %v2852, 1.442695
    %v2854 = vpow.pop %v2853
    %v2855 = vadd.f32 %v2854, 1.0
    %v2856 = vrcp.pop %v2855
    %v2857 = vmul.f32 1.0, %v2856
    %v2858 = vadd.f32 %v2839, %v740
    %v2859 = vmul.f32 %v2850, %v2858
    %v2860 = vadd.f32 %v2761, %v2859
    %v2861 = vtanh.pop %v2860
    %v2862 = vsub.f32 %v2755, %v2861
    %v2863 = vmul.f32 %v2857, %v2862
    %v2864 = vadd.f32 %v2861, %v2863
    %s2865 = smul.u32 18, 3
    %s2866 = smul.addr %s2865, 8
    %s2867 = scalar_lea.vmem [#allocation2], %s2866
    %v2868 = vld [vmem:[%s2867] sm:$0xff]
    %v2869 = vld [vmem:[%s2867 + $0x8] sm:$0xff]
    %v2870 = vld [vmem:[%s2867 + $0x10] sm:$0xff]
    %v2871 = vpack.c.bf16 %v2864, %v2864
    %2872 = vmatprep.subr.bf16.mxu0 %v863
    %2873 = vmatpush1.bf16.msra.mxu0 %v862
    %2874 = vmatprep.subr.bf16.mxu0 %v866
    %2875 = vmatpush1.bf16.msra.mxu0 %v865
    %2876 = vmatprep.subr.bf16.mxu0 %v869
    %2877 = vmatpush1.bf16.msra.mxu0 %v868
    %2878 = vmatprep.subr.bf16.mxu0 %v872
    %2879 = vmatpush1.bf16.msra.mxu0 %v871
    %2880 = vmatprep.subr.bf16.mxu0 %v875
    %2881 = vmatpush1.bf16.msra.mxu0 %v874
    %2882 = vmatprep.subr.bf16.mxu0 %v878
    %2883 = vmatpush1.bf16.msra.mxu0 %v877
    %2884 = vmatprep.subr.bf16.mxu0 %v881
    %2885 = vmatpush1.bf16.msra.mxu0 %v880
    %2886 = vmatprep.subr.bf16.mxu0 %v884
    %2887 = vmatpush1.bf16.msra.mxu0 %v883
    %2888 = vmatprep.subr.bf16.mxu0 0
    %2889 = vmatpush1.bf16.msra.mxu0 0
    %2890 = vmatprep.subr.bf16.mxu0 0
    %2891 = vmatpush1.bf16.msra.mxu0 0
    %2892 = vmatprep.subr.bf16.mxu0 0
    %2893 = vmatpush1.bf16.msra.mxu0 0
    %2894 = vmatprep.subr.bf16.mxu0 0
    %2895 = vmatpush1.bf16.msra.mxu0 0
    %2896 = vmatprep.subr.bf16.mxu0 0
    %2897 = vmatpush1.bf16.msra.mxu0 0
    %2898 = vmatprep.subr.bf16.mxu0 0
    %2899 = vmatpush1.bf16.msra.mxu0 0
    %2900 = vmatprep.subr.bf16.mxu0 0
    %2901 = vmatpush1.bf16.msra.mxu0 0
    %2902 = vmatprep.subr.bf16.mxu0 0
    %2903 = vmatpush1.bf16.msra.mxu0 0
    %2904 = vmatprep.mubr.bf16.mxu0 0
    %2905 = vmatmul.mubr.bf16.gmra.mrb[0].mxu0 %v2871
    %v2906 = vpop.f32.mrb[0].mxu0
    %v2907 = vadd.f32 0.0, %v2906
    %v2908 = vpop.f32.mrb[0].mxu0
    %v2909 = vadd.f32 0.0, %v2908
    %v2910 = vpop.f32.mrb[0].mxu0
    %v2911 = vpop.f32.mrb[0].mxu0
    %2912 = vdwg.mxu0
    %2913 = vmatprep.subr.bf16.mxu0 0
    %2914 = vmatpush1.bf16.msra.mxu0 %v864
    %2915 = vmatprep.subr.bf16.mxu0 0
    %2916 = vmatpush1.bf16.msra.mxu0 %v867
    %2917 = vmatprep.subr.bf16.mxu0 0
    %2918 = vmatpush1.bf16.msra.mxu0 %v870
    %2919 = vmatprep.subr.bf16.mxu0 0
    %2920 = vmatpush1.bf16.msra.mxu0 %v873
    %2921 = vmatprep.subr.bf16.mxu0 0
    %2922 = vmatpush1.bf16.msra.mxu0 %v876
    %2923 = vmatprep.subr.bf16.mxu0 0
    %2924 = vmatpush1.bf16.msra.mxu0 %v879
    %2925 = vmatprep.subr.bf16.mxu0 0
    %2926 = vmatpush1.bf16.msra.mxu0 %v882
    %2927 = vmatprep.subr.bf16.mxu0 0
    %2928 = vmatpush1.bf16.msra.mxu0 %v885
    %2929 = vmatprep.subr.bf16.mxu0 0
    %2930 = vmatpush1.bf16.msra.mxu0 0
    %2931 = vmatprep.subr.bf16.mxu0 0
    %2932 = vmatpush1.bf16.msra.mxu0 0
    %2933 = vmatprep.subr.bf16.mxu0 0
    %2934 = vmatpush1.bf16.msra.mxu0 0
    %2935 = vmatprep.subr.bf16.mxu0 0
    %2936 = vmatpush1.bf16.msra.mxu0 0
    %2937 = vmatprep.subr.bf16.mxu0 0
    %2938 = vmatpush1.bf16.msra.mxu0 0
    %2939 = vmatprep.subr.bf16.mxu0 0
    %2940 = vmatpush1.bf16.msra.mxu0 0
    %2941 = vmatprep.subr.bf16.mxu0 0
    %2942 = vmatpush1.bf16.msra.mxu0 0
    %2943 = vmatprep.subr.bf16.mxu0 0
    %2944 = vmatpush1.bf16.msra.mxu0 0
    %2945 = vmatprep.mubr.bf16.mxu0 0
    %2946 = vmatmul.mubr.bf16.gmra.mrb[0].mxu0 %v2871
    %v2947 = vpop.f32.mrb[0].mxu0
    %v2948 = vadd.f32 0.0, %v2947
    %v2949 = vpop.f32.mrb[0].mxu0
    %v2950 = vpop.f32.mrb[0].mxu0
    %v2951 = vpop.f32.mrb[0].mxu0
    %2952 = vdwg.mxu0
    %v2953 = vadd.f32 %v2868, %v2907
    %v2954 = vxor.u32 %v2953, 2147483648
    %v2955 = vmul.f32 %v2954, 1.442695
    %v2956 = vpow.pop %v2955
    %v2957 = vadd.f32 %v2956, 1.0
    %v2958 = vrcp.pop %v2957
    %v2959 = vmul.f32 1.0, %v2958
    %v2960 = vadd.f32 %v2869, %v2909
    %v2961 = vxor.u32 %v2960, 2147483648
    %v2962 = vmul.f32 %v2961, 1.442695
    %v2963 = vpow.pop %v2962
    %v2964 = vadd.f32 %v2963, 1.0
    %v2965 = vrcp.pop %v2964
    %v2966 = vmul.f32 1.0, %v2965
    %v2967 = vadd.f32 %v2948, %v740
    %v2968 = vmul.f32 %v2959, %v2967
    %v2969 = vadd.f32 %v2870, %v2968
    %v2970 = vtanh.pop %v2969
    %v2971 = vsub.f32 %v2864, %v2970
    %v2972 = vmul.f32 %v2966, %v2971
    %v2973 = vadd.f32 %v2970, %v2972
    %s2974 = smul.u32 19, 3
    %s2975 = smul.addr %s2974, 8
    %s2976 = scalar_lea.vmem [#allocation2], %s2975
    %v2977 = vld [vmem:[%s2976] sm:$0xff]
    %v2978 = vld [vmem:[%s2976 + $0x8] sm:$0xff]
    %v2979 = vld [vmem:[%s2976 + $0x10] sm:$0xff]
    %v2980 = vpack.c.bf16 %v2973, %v2973
    %2981 = vmatprep.subr.bf16.mxu0 %v863
    %2982 = vmatpush1.bf16.msra.mxu0 %v862
    %2983 = vmatprep.subr.bf16.mxu0 %v866
    %2984 = vmatpush1.bf16.msra.mxu0 %v865
    %2985 = vmatprep.subr.bf16.mxu0 %v869
    %2986 = vmatpush1.bf16.msra.mxu0 %v868
    %2987 = vmatprep.subr.bf16.mxu0 %v872
    %2988 = vmatpush1.bf16.msra.mxu0 %v871
    %2989 = vmatprep.subr.bf16.mxu0 %v875
    %2990 = vmatpush1.bf16.msra.mxu0 %v874
    %2991 = vmatprep.subr.bf16.mxu0 %v878
    %2992 = vmatpush1.bf16.msra.mxu0 %v877
    %2993 = vmatprep.subr.bf16.mxu0 %v881
    %2994 = vmatpush1.bf16.msra.mxu0 %v880
    %2995 = vmatprep.subr.bf16.mxu0 %v884
    %2996 = vmatpush1.bf16.msra.mxu0 %v883
    %2997 = vmatprep.subr.bf16.mxu0 0
    %2998 = vmatpush1.bf16.msra.mxu0 0
    %2999 = vmatprep.subr.bf16.mxu0 0
    %3000 = vmatpush1.bf16.msra.mxu0 0
    %3001 = vmatprep.subr.bf16.mxu0 0
    %3002 = vmatpush1.bf16.msra.mxu0 0
    %3003 = vmatprep.subr.bf16.mxu0 0
    %3004 = vmatpush1.bf16.msra.mxu0 0
    %3005 = vmatprep.subr.bf16.mxu0 0
    %3006 = vmatpush1.bf16.msra.mxu0 0
    %3007 = vmatprep.subr.bf16.mxu0 0
    %3008 = vmatpush1.bf16.msra.mxu0 0
    %3009 = vmatprep.subr.bf16.mxu0 0
    %3010 = vmatpush1.bf16.msra.mxu0 0
    %3011 = vmatprep.subr.bf16.mxu0 0
    %3012 = vmatpush1.bf16.msra.mxu0 0
    %3013 = vmatprep.mubr.bf16.mxu0 0
    %3014 = vmatmul.mubr.bf16.gmra.mrb[0].mxu0 %v2980
    %v3015 = vpop.f32.mrb[0].mxu0
    %v3016 = vadd.f32 0.0, %v3015
    %v3017 = vpop.f32.mrb[0].mxu0
    %v3018 = vadd.f32 0.0, %v3017
    %v3019 = vpop.f32.mrb[0].mxu0
    %v3020 = vpop.f32.mrb[0].mxu0
    %3021 = vdwg.mxu0
    %3022 = vmatprep.subr.bf16.mxu0 0
    %3023 = vmatpush1.bf16.msra.mxu0 %v864
    %3024 = vmatprep.subr.bf16.mxu0 0
    %3025 = vmatpush1.bf16.msra.mxu0 %v867
    %3026 = vmatprep.subr.bf16.mxu0 0
    %3027 = vmatpush1.bf16.msra.mxu0 %v870
    %3028 = vmatprep.subr.bf16.mxu0 0
    %3029 = vmatpush1.bf16.msra.mxu0 %v873
    %3030 = vmatprep.subr.bf16.mxu0 0
    %3031 = vmatpush1.bf16.msra.mxu0 %v876
    %3032 = vmatprep.subr.bf16.mxu0 0
    %3033 = vmatpush1.bf16.msra.mxu0 %v879
    %3034 = vmatprep.subr.bf16.mxu0 0
    %3035 = vmatpush1.bf16.msra.mxu0 %v882
    %3036 = vmatprep.subr.bf16.mxu0 0
    %3037 = vmatpush1.bf16.msra.mxu0 %v885
    %3038 = vmatprep.subr.bf16.mxu0 0
    %3039 = vmatpush1.bf16.msra.mxu0 0
    %3040 = vmatprep.subr.bf16.mxu0 0
    %3041 = vmatpush1.bf16.msra.mxu0 0
    %3042 = vmatprep.subr.bf16.mxu0 0
    %3043 = vmatpush1.bf16.msra.mxu0 0
    %3044 = vmatprep.subr.bf16.mxu0 0
    %3045 = vmatpush1.bf16.msra.mxu0 0
    %3046 = vmatprep.subr.bf16.mxu0 0
    %3047 = vmatpush1.bf16.msra.mxu0 0
    %3048 = vmatprep.subr.bf16.mxu0 0
    %3049 = vmatpush1.bf16.msra.mxu0 0
    %3050 = vmatprep.subr.bf16.mxu0 0
    %3051 = vmatpush1.bf16.msra.mxu0 0
    %3052 = vmatprep.subr.bf16.mxu0 0
    %3053 = vmatpush1.bf16.msra.mxu0 0
    %3054 = vmatprep.mubr.bf16.mxu0 0
    %3055 = vmatmul.mubr.bf16.gmra.mrb[0].mxu0 %v2980
    %v3056 = vpop.f32.mrb[0].mxu0
    %v3057 = vadd.f32 0.0, %v3056
    %v3058 = vpop.f32.mrb[0].mxu0
    %v3059 = vpop.f32.mrb[0].mxu0
    %v3060 = vpop.f32.mrb[0].mxu0
    %3061 = vdwg.mxu0
    %v3062 = vadd.f32 %v2977, %v3016
    %v3063 = vxor.u32 %v3062, 2147483648
    %v3064 = vmul.f32 %v3063, 1.442695
    %v3065 = vpow.pop %v3064
    %v3066 = vadd.f32 %v3065, 1.0
    %v3067 = vrcp.pop %v3066
    %v3068 = vmul.f32 1.0, %v3067
    %v3069 = vadd.f32 %v2978, %v3018
    %v3070 = vxor.u32 %v3069, 2147483648
    %v3071 = vmul.f32 %v3070, 1.442695
    %v3072 = vpow.pop %v3071
    %v3073 = vadd.f32 %v3072, 1.0
    %v3074 = vrcp.pop %v3073
    %v3075 = vmul.f32 1.0, %v3074
    %v3076 = vadd.f32 %v3057, %v740
    %v3077 = vmul.f32 %v3068, %v3076
    %v3078 = vadd.f32 %v2979, %v3077
    %v3079 = vtanh.pop %v3078
    %v3080 = vsub.f32 %v2973, %v3079
    %v3081 = vmul.f32 %v3075, %v3080
    %v3082 = vadd.f32 %v3079, %v3081
    %s3083 = smul.u32 20, 3
    %s3084 = smul.addr %s3083, 8
    %s3085 = scalar_lea.vmem [#allocation2], %s3084
    %v3086 = vld [vmem:[%s3085] sm:$0xff]
    %v3087 = vld [vmem:[%s3085 + $0x8] sm:$0xff]
    %v3088 = vld [vmem:[%s3085 + $0x10] sm:$0xff]
    %v3089 = vpack.c.bf16 %v3082, %v3082
    %3090 = vmatprep.subr.bf16.mxu0 %v863
    %3091 = vmatpush1.bf16.msra.mxu0 %v862
    %3092 = vmatprep.subr.bf16.mxu0 %v866
    %3093 = vmatpush1.bf16.msra.mxu0 %v865
    %3094 = vmatprep.subr.bf16.mxu0 %v869
    %3095 = vmatpush1.bf16.msra.mxu0 %v868
    %3096 = vmatprep.subr.bf16.mxu0 %v872
    %3097 = vmatpush1.bf16.msra.mxu0 %v871
    %3098 = vmatprep.subr.bf16.mxu0 %v875
    %3099 = vmatpush1.bf16.msra.mxu0 %v874
    %3100 = vmatprep.subr.bf16.mxu0 %v878
    %3101 = vmatpush1.bf16.msra.mxu0 %v877
    %3102 = vmatprep.subr.bf16.mxu0 %v881
    %3103 = vmatpush1.bf16.msra.mxu0 %v880
    %3104 = vmatprep.subr.bf16.mxu0 %v884
    %3105 = vmatpush1.bf16.msra.mxu0 %v883
    %3106 = vmatprep.subr.bf16.mxu0 0
    %3107 = vmatpush1.bf16.msra.mxu0 0
    %3108 = vmatprep.subr.bf16.mxu0 0
    %3109 = vmatpush1.bf16.msra.mxu0 0
    %3110 = vmatprep.subr.bf16.mxu0 0
    %3111 = vmatpush1.bf16.msra.mxu0 0
    %3112 = vmatprep.subr.bf16.mxu0 0
    %3113 = vmatpush1.bf16.msra.mxu0 0
    %3114 = vmatprep.subr.bf16.mxu0 0
    %3115 = vmatpush1.bf16.msra.mxu0 0
    %3116 = vmatprep.subr.bf16.mxu0 0
    %3117 = vmatpush1.bf16.msra.mxu0 0
    %3118 = vmatprep.subr.bf16.mxu0 0
    %3119 = vmatpush1.bf16.msra.mxu0 0
    %3120 = vmatprep.subr.bf16.mxu0 0
    %3121 = vmatpush1.bf16.msra.mxu0 0
    %3122 = vmatprep.mubr.bf16.mxu0 0
    %3123 = vmatmul.mubr.bf16.gmra.mrb[0].mxu0 %v3089
    %v3124 = vpop.f32.mrb[0].mxu0
    %v3125 = vadd.f32 0.0, %v3124
    %v3126 = vpop.f32.mrb[0].mxu0
    %v3127 = vadd.f32 0.0, %v3126
    %v3128 = vpop.f32.mrb[0].mxu0
    %v3129 = vpop.f32.mrb[0].mxu0
    %3130 = vdwg.mxu0
    %3131 = vmatprep.subr.bf16.mxu0 0
    %3132 = vmatpush1.bf16.msra.mxu0 %v864
    %3133 = vmatprep.subr.bf16.mxu0 0
    %3134 = vmatpush1.bf16.msra.mxu0 %v867
    %3135 = vmatprep.subr.bf16.mxu0 0
    %3136 = vmatpush1.bf16.msra.mxu0 %v870
    %3137 = vmatprep.subr.bf16.mxu0 0
    %3138 = vmatpush1.bf16.msra.mxu0 %v873
    %3139 = vmatprep.subr.bf16.mxu0 0
    %3140 = vmatpush1.bf16.msra.mxu0 %v876
    %3141 = vmatprep.subr.bf16.mxu0 0
    %3142 = vmatpush1.bf16.msra.mxu0 %v879
    %3143 = vmatprep.subr.bf16.mxu0 0
    %3144 = vmatpush1.bf16.msra.mxu0 %v882
    %3145 = vmatprep.subr.bf16.mxu0 0
    %3146 = vmatpush1.bf16.msra.mxu0 %v885
    %3147 = vmatprep.subr.bf16.mxu0 0
    %3148 = vmatpush1.bf16.msra.mxu0 0
    %3149 = vmatprep.subr.bf16.mxu0 0
    %3150 = vmatpush1.bf16.msra.mxu0 0
    %3151 = vmatprep.subr.bf16.mxu0 0
    %3152 = vmatpush1.bf16.msra.mxu0 0
    %3153 = vmatprep.subr.bf16.mxu0 0
    %3154 = vmatpush1.bf16.msra.mxu0 0
    %3155 = vmatprep.subr.bf16.mxu0 0
    %3156 = vmatpush1.bf16.msra.mxu0 0
    %3157 = vmatprep.subr.bf16.mxu0 0
    %3158 = vmatpush1.bf16.msra.mxu0 0
    %3159 = vmatprep.subr.bf16.mxu0 0
    %3160 = vmatpush1.bf16.msra.mxu0 0
    %3161 = vmatprep.subr.bf16.mxu0 0
    %3162 = vmatpush1.bf16.msra.mxu0 0
    %3163 = vmatprep.mubr.bf16.mxu0 0
    %3164 = vmatmul.mubr.bf16.gmra.mrb[0].mxu0 %v3089
    %v3165 = vpop.f32.mrb[0].mxu0
    %v3166 = vadd.f32 0.0, %v3165
    %v3167 = vpop.f32.mrb[0].mxu0
    %v3168 = vpop.f32.mrb[0].mxu0
    %v3169 = vpop.f32.mrb[0].mxu0
    %3170 = vdwg.mxu0
    %v3171 = vadd.f32 %v3086, %v3125
    %v3172 = vxor.u32 %v3171, 2147483648
    %v3173 = vmul.f32 %v3172, 1.442695
    %v3174 = vpow.pop %v3173
    %v3175 = vadd.f32 %v3174, 1.0
    %v3176 = vrcp.pop %v3175
    %v3177 = vmul.f32 1.0, %v3176
    %v3178 = vadd.f32 %v3087, %v3127
    %v3179 = vxor.u32 %v3178, 2147483648
    %v3180 = vmul.f32 %v3179, 1.442695
    %v3181 = vpow.pop %v3180
    %v3182 = vadd.f32 %v3181, 1.0
    %v3183 = vrcp.pop %v3182
    %v3184 = vmul.f32 1.0, %v3183
    %v3185 = vadd.f32 %v3166, %v740
    %v3186 = vmul.f32 %v3177, %v3185
    %v3187 = vadd.f32 %v3088, %v3186
    %v3188 = vtanh.pop %v3187
    %v3189 = vsub.f32 %v3082, %v3188
    %v3190 = vmul.f32 %v3184, %v3189
    %v3191 = vadd.f32 %v3188, %v3190
    %s3192 = smul.u32 21, 3
    %s3193 = smul.addr %s3192, 8
    %s3194 = scalar_lea.vmem [#allocation2], %s3193
    %v3195 = vld [vmem:[%s3194] sm:$0xff]
    %v3196 = vld [vmem:[%s3194 + $0x8] sm:$0xff]
    %v3197 = vld [vmem:[%s3194 + $0x10] sm:$0xff]
    %v3198 = vpack.c.bf16 %v3191, %v3191
    %3199 = vmatprep.subr.bf16.mxu0 %v863
    %3200 = vmatpush1.bf16.msra.mxu0 %v862
    %3201 = vmatprep.subr.bf16.mxu0 %v866
    %3202 = vmatpush1.bf16.msra.mxu0 %v865
    %3203 = vmatprep.subr.bf16.mxu0 %v869
    %3204 = vmatpush1.bf16.msra.mxu0 %v868
    %3205 = vmatprep.subr.bf16.mxu0 %v872
    %3206 = vmatpush1.bf16.msra.mxu0 %v871
    %3207 = vmatprep.subr.bf16.mxu0 %v875
    %3208 = vmatpush1.bf16.msra.mxu0 %v874
    %3209 = vmatprep.subr.bf16.mxu0 %v878
    %3210 = vmatpush1.bf16.msra.mxu0 %v877
    %3211 = vmatprep.subr.bf16.mxu0 %v881
    %3212 = vmatpush1.bf16.msra.mxu0 %v880
    %3213 = vmatprep.subr.bf16.mxu0 %v884
    %3214 = vmatpush1.bf16.msra.mxu0 %v883
    %3215 = vmatprep.subr.bf16.mxu0 0
    %3216 = vmatpush1.bf16.msra.mxu0 0
    %3217 = vmatprep.subr.bf16.mxu0 0
    %3218 = vmatpush1.bf16.msra.mxu0 0
    %3219 = vmatprep.subr.bf16.mxu0 0
    %3220 = vmatpush1.bf16.msra.mxu0 0
    %3221 = vmatprep.subr.bf16.mxu0 0
    %3222 = vmatpush1.bf16.msra.mxu0 0
    %3223 = vmatprep.subr.bf16.mxu0 0
    %3224 = vmatpush1.bf16.msra.mxu0 0
    %3225 = vmatprep.subr.bf16.mxu0 0
    %3226 = vmatpush1.bf16.msra.mxu0 0
    %3227 = vmatprep.subr.bf16.mxu0 0
    %3228 = vmatpush1.bf16.msra.mxu0 0
    %3229 = vmatprep.subr.bf16.mxu0 0
    %3230 = vmatpush1.bf16.msra.mxu0 0
    %3231 = vmatprep.mubr.bf16.mxu0 0
    %3232 = vmatmul.mubr.bf16.gmra.mrb[0].mxu0 %v3198
    %v3233 = vpop.f32.mrb[0].mxu0
    %v3234 = vadd.f32 0.0, %v3233
    %v3235 = vpop.f32.mrb[0].mxu0
    %v3236 = vadd.f32 0.0, %v3235
    %v3237 = vpop.f32.mrb[0].mxu0
    %v3238 = vpop.f32.mrb[0].mxu0
    %3239 = vdwg.mxu0
    %3240 = vmatprep.subr.bf16.mxu0 0
    %3241 = vmatpush1.bf16.msra.mxu0 %v864
    %3242 = vmatprep.subr.bf16.mxu0 0
    %3243 = vmatpush1.bf16.msra.mxu0 %v867
    %3244 = vmatprep.subr.bf16.mxu0 0
    %3245 = vmatpush1.bf16.msra.mxu0 %v870
    %3246 = vmatprep.subr.bf16.mxu0 0
    %3247 = vmatpush1.bf16.msra.mxu0 %v873
    %3248 = vmatprep.subr.bf16.mxu0 0
    %3249 = vmatpush1.bf16.msra.mxu0 %v876
    %3250 = vmatprep.subr.bf16.mxu0 0
    %3251 = vmatpush1.bf16.msra.mxu0 %v879
    %3252 = vmatprep.subr.bf16.mxu0 0
    %3253 = vmatpush1.bf16.msra.mxu0 %v882
    %3254 = vmatprep.subr.bf16.mxu0 0
    %3255 = vmatpush1.bf16.msra.mxu0 %v885
    %3256 = vmatprep.subr.bf16.mxu0 0
    %3257 = vmatpush1.bf16.msra.mxu0 0
    %3258 = vmatprep.subr.bf16.mxu0 0
    %3259 = vmatpush1.bf16.msra.mxu0 0
    %3260 = vmatprep.subr.bf16.mxu0 0
    %3261 = vmatpush1.bf16.msra.mxu0 0
    %3262 = vmatprep.subr.bf16.mxu0 0
    %3263 = vmatpush1.bf16.msra.mxu0 0
    %3264 = vmatprep.subr.bf16.mxu0 0
    %3265 = vmatpush1.bf16.msra.mxu0 0
    %3266 = vmatprep.subr.bf16.mxu0 0
    %3267 = vmatpush1.bf16.msra.mxu0 0
    %3268 = vmatprep.subr.bf16.mxu0 0
    %3269 = vmatpush1.bf16.msra.mxu0 0
    %3270 = vmatprep.subr.bf16.mxu0 0
    %3271 = vmatpush1.bf16.msra.mxu0 0
    %3272 = vmatprep.mubr.bf16.mxu0 0
    %3273 = vmatmul.mubr.bf16.gmra.mrb[0].mxu0 %v3198
    %v3274 = vpop.f32.mrb[0].mxu0
    %v3275 = vadd.f32 0.0, %v3274
    %v3276 = vpop.f32.mrb[0].mxu0
    %v3277 = vpop.f32.mrb[0].mxu0
    %v3278 = vpop.f32.mrb[0].mxu0
    %3279 = vdwg.mxu0
    %v3280 = vadd.f32 %v3195, %v3234
    %v3281 = vxor.u32 %v3280, 2147483648
    %v3282 = vmul.f32 %v3281, 1.442695
    %v3283 = vpow.pop %v3282
    %v3284 = vadd.f32 %v3283, 1.0
    %v3285 = vrcp.pop %v3284
    %v3286 = vmul.f32 1.0, %v3285
    %v3287 = vadd.f32 %v3196, %v3236
    %v3288 = vxor.u32 %v3287, 2147483648
    %v3289 = vmul.f32 %v3288, 1.442695
    %v3290 = vpow.pop %v3289
    %v3291 = vadd.f32 %v3290, 1.0
    %v3292 = vrcp.pop %v3291
    %v3293 = vmul.f32 1.0, %v3292
    %v3294 = vadd.f32 %v3275, %v740
    %v3295 = vmul.f32 %v3286, %v3294
    %v3296 = vadd.f32 %v3197, %v3295
    %v3297 = vtanh.pop %v3296
    %v3298 = vsub.f32 %v3191, %v3297
    %v3299 = vmul.f32 %v3293, %v3298
    %v3300 = vadd.f32 %v3297, %v3299
    %s3301 = smul.u32 22, 3
    %s3302 = smul.addr %s3301, 8
    %s3303 = scalar_lea.vmem [#allocation2], %s3302
    %v3304 = vld [vmem:[%s3303] sm:$0xff]
    %v3305 = vld [vmem:[%s3303 + $0x8] sm:$0xff]
    %v3306 = vld [vmem:[%s3303 + $0x10] sm:$0xff]
    %v3307 = vpack.c.bf16 %v3300, %v3300
    %3308 = vmatprep.subr.bf16.mxu0 %v863
    %3309 = vmatpush1.bf16.msra.mxu0 %v862
    %3310 = vmatprep.subr.bf16.mxu0 %v866
    %3311 = vmatpush1.bf16.msra.mxu0 %v865
    %3312 = vmatprep.subr.bf16.mxu0 %v869
    %3313 = vmatpush1.bf16.msra.mxu0 %v868
    %3314 = vmatprep.subr.bf16.mxu0 %v872
    %3315 = vmatpush1.bf16.msra.mxu0 %v871
    %3316 = vmatprep.subr.bf16.mxu0 %v875
    %3317 = vmatpush1.bf16.msra.mxu0 %v874
    %3318 = vmatprep.subr.bf16.mxu0 %v878
    %3319 = vmatpush1.bf16.msra.mxu0 %v877
    %3320 = vmatprep.subr.bf16.mxu0 %v881
    %3321 = vmatpush1.bf16.msra.mxu0 %v880
    %3322 = vmatprep.subr.bf16.mxu0 %v884
    %3323 = vmatpush1.bf16.msra.mxu0 %v883
    %3324 = vmatprep.subr.bf16.mxu0 0
    %3325 = vmatpush1.bf16.msra.mxu0 0
    %3326 = vmatprep.subr.bf16.mxu0 0
    %3327 = vmatpush1.bf16.msra.mxu0 0
    %3328 = vmatprep.subr.bf16.mxu0 0
    %3329 = vmatpush1.bf16.msra.mxu0 0
    %3330 = vmatprep.subr.bf16.mxu0 0
    %3331 = vmatpush1.bf16.msra.mxu0 0
    %3332 = vmatprep.subr.bf16.mxu0 0
    %3333 = vmatpush1.bf16.msra.mxu0 0
    %3334 = vmatprep.subr.bf16.mxu0 0
    %3335 = vmatpush1.bf16.msra.mxu0 0
    %3336 = vmatprep.subr.bf16.mxu0 0
    %3337 = vmatpush1.bf16.msra.mxu0 0
    %3338 = vmatprep.subr.bf16.mxu0 0
    %3339 = vmatpush1.bf16.msra.mxu0 0
    %3340 = vmatprep.mubr.bf16.mxu0 0
    %3341 = vmatmul.mubr.bf16.gmra.mrb[0].mxu0 %v3307
    %v3342 = vpop.f32.mrb[0].mxu0
    %v3343 = vadd.f32 0.0, %v3342
    %v3344 = vpop.f32.mrb[0].mxu0
    %v3345 = vadd.f32 0.0, %v3344
    %v3346 = vpop.f32.mrb[0].mxu0
    %v3347 = vpop.f32.mrb[0].mxu0
    %3348 = vdwg.mxu0
    %3349 = vmatprep.subr.bf16.mxu0 0
    %3350 = vmatpush1.bf16.msra.mxu0 %v864
    %3351 = vmatprep.subr.bf16.mxu0 0
    %3352 = vmatpush1.bf16.msra.mxu0 %v867
    %3353 = vmatprep.subr.bf16.mxu0 0
    %3354 = vmatpush1.bf16.msra.mxu0 %v870
    %3355 = vmatprep.subr.bf16.mxu0 0
    %3356 = vmatpush1.bf16.msra.mxu0 %v873
    %3357 = vmatprep.subr.bf16.mxu0 0
    %3358 = vmatpush1.bf16.msra.mxu0 %v876
    %3359 = vmatprep.subr.bf16.mxu0 0
    %3360 = vmatpush1.bf16.msra.mxu0 %v879
    %3361 = vmatprep.subr.bf16.mxu0 0
    %3362 = vmatpush1.bf16.msra.mxu0 %v882
    %3363 = vmatprep.subr.bf16.mxu0 0
    %3364 = vmatpush1.bf16.msra.mxu0 %v885
    %3365 = vmatprep.subr.bf16.mxu0 0
    %3366 = vmatpush1.bf16.msra.mxu0 0
    %3367 = vmatprep.subr.bf16.mxu0 0
    %3368 = vmatpush1.bf16.msra.mxu0 0
    %3369 = vmatprep.subr.bf16.mxu0 0
    %3370 = vmatpush1.bf16.msra.mxu0 0
    %3371 = vmatprep.subr.bf16.mxu0 0
    %3372 = vmatpush1.bf16.msra.mxu0 0
    %3373 = vmatprep.subr.bf16.mxu0 0
    %3374 = vmatpush1.bf16.msra.mxu0 0
    %3375 = vmatprep.subr.bf16.mxu0 0
    %3376 = vmatpush1.bf16.msra.mxu0 0
    %3377 = vmatprep.subr.bf16.mxu0 0
    %3378 = vmatpush1.bf16.msra.mxu0 0
    %3379 = vmatprep.subr.bf16.mxu0 0
    %3380 = vmatpush1.bf16.msra.mxu0 0
    %3381 = vmatprep.mubr.bf16.mxu0 0
    %3382 = vmatmul.mubr.bf16.gmra.mrb[0].mxu0 %v3307
    %v3383 = vpop.f32.mrb[0].mxu0
    %v3384 = vadd.f32 0.0, %v3383
    %v3385 = vpop.f32.mrb[0].mxu0
    %v3386 = vpop.f32.mrb[0].mxu0
    %v3387 = vpop.f32.mrb[0].mxu0
    %3388 = vdwg.mxu0
    %v3389 = vadd.f32 %v3304, %v3343
    %v3390 = vxor.u32 %v3389, 2147483648
    %v3391 = vmul.f32 %v3390, 1.442695
    %v3392 = vpow.pop %v3391
    %v3393 = vadd.f32 %v3392, 1.0
    %v3394 = vrcp.pop %v3393
    %v3395 = vmul.f32 1.0, %v3394
    %v3396 = vadd.f32 %v3305, %v3345
    %v3397 = vxor.u32 %v3396, 2147483648
    %v3398 = vmul.f32 %v3397, 1.442695
    %v3399 = vpow.pop %v3398
    %v3400 = vadd.f32 %v3399, 1.0
    %v3401 = vrcp.pop %v3400
    %v3402 = vmul.f32 1.0, %v3401
    %v3403 = vadd.f32 %v3384, %v740
    %v3404 = vmul.f32 %v3395, %v3403
    %v3405 = vadd.f32 %v3306, %v3404
    %v3406 = vtanh.pop %v3405
    %v3407 = vsub.f32 %v3300, %v3406
    %v3408 = vmul.f32 %v3402, %v3407
    %v3409 = vadd.f32 %v3406, %v3408
    %s3410 = smul.u32 23, 3
    %s3411 = smul.addr %s3410, 8
    %s3412 = scalar_lea.vmem [#allocation2], %s3411
    %v3413 = vld [vmem:[%s3412] sm:$0xff]
    %v3414 = vld [vmem:[%s3412 + $0x8] sm:$0xff]
    %v3415 = vld [vmem:[%s3412 + $0x10] sm:$0xff]
    %v3416 = vpack.c.bf16 %v3409, %v3409
    %3417 = vmatprep.subr.bf16.mxu0 %v863
    %3418 = vmatpush1.bf16.msra.mxu0 %v862
    %3419 = vmatprep.subr.bf16.mxu0 %v866
    %3420 = vmatpush1.bf16.msra.mxu0 %v865
    %3421 = vmatprep.subr.bf16.mxu0 %v869
    %3422 = vmatpush1.bf16.msra.mxu0 %v868
    %3423 = vmatprep.subr.bf16.mxu0 %v872
    %3424 = vmatpush1.bf16.msra.mxu0 %v871
    %3425 = vmatprep.subr.bf16.mxu0 %v875
    %3426 = vmatpush1.bf16.msra.mxu0 %v874
    %3427 = vmatprep.subr.bf16.mxu0 %v878
    %3428 = vmatpush1.bf16.msra.mxu0 %v877
    %3429 = vmatprep.subr.bf16.mxu0 %v881
    %3430 = vmatpush1.bf16.msra.mxu0 %v880
    %3431 = vmatprep.subr.bf16.mxu0 %v884
    %3432 = vmatpush1.bf16.msra.mxu0 %v883
    %3433 = vmatprep.subr.bf16.mxu0 0
    %3434 = vmatpush1.bf16.msra.mxu0 0
    %3435 = vmatprep.subr.bf16.mxu0 0
    %3436 = vmatpush1.bf16.msra.mxu0 0
    %3437 = vmatprep.subr.bf16.mxu0 0
    %3438 = vmatpush1.bf16.msra.mxu0 0
    %3439 = vmatprep.subr.bf16.mxu0 0
    %3440 = vmatpush1.bf16.msra.mxu0 0
    %3441 = vmatprep.subr.bf16.mxu0 0
    %3442 = vmatpush1.bf16.msra.mxu0 0
    %3443 = vmatprep.subr.bf16.mxu0 0
    %3444 = vmatpush1.bf16.msra.mxu0 0
    %3445 = vmatprep.subr.bf16.mxu0 0
    %3446 = vmatpush1.bf16.msra.mxu0 0
    %3447 = vmatprep.subr.bf16.mxu0 0
    %3448 = vmatpush1.bf16.msra.mxu0 0
    %3449 = vmatprep.mubr.bf16.mxu0 0
    %3450 = vmatmul.mubr.bf16.gmra.mrb[0].mxu0 %v3416
    %v3451 = vpop.f32.mrb[0].mxu0
    %v3452 = vadd.f32 0.0, %v3451
    %v3453 = vpop.f32.mrb[0].mxu0
    %v3454 = vadd.f32 0.0, %v3453
    %v3455 = vpop.f32.mrb[0].mxu0
    %v3456 = vpop.f32.mrb[0].mxu0
    %3457 = vdwg.mxu0
    %3458 = vmatprep.subr.bf16.mxu0 0
    %3459 = vmatpush1.bf16.msra.mxu0 %v864
    %3460 = vmatprep.subr.bf16.mxu0 0
    %3461 = vmatpush1.bf16.msra.mxu0 %v867
    %3462 = vmatprep.subr.bf16.mxu0 0
    %3463 = vmatpush1.bf16.msra.mxu0 %v870
    %3464 = vmatprep.subr.bf16.mxu0 0
    %3465 = vmatpush1.bf16.msra.mxu0 %v873
    %3466 = vmatprep.subr.bf16.mxu0 0
    %3467 = vmatpush1.bf16.msra.mxu0 %v876
    %3468 = vmatprep.subr.bf16.mxu0 0
    %3469 = vmatpush1.bf16.msra.mxu0 %v879
    %3470 = vmatprep.subr.bf16.mxu0 0
    %3471 = vmatpush1.bf16.msra.mxu0 %v882
    %3472 = vmatprep.subr.bf16.mxu0 0
    %3473 = vmatpush1.bf16.msra.mxu0 %v885
    %3474 = vmatprep.subr.bf16.mxu0 0
    %3475 = vmatpush1.bf16.msra.mxu0 0
    %3476 = vmatprep.subr.bf16.mxu0 0
    %3477 = vmatpush1.bf16.msra.mxu0 0
    %3478 = vmatprep.subr.bf16.mxu0 0
    %3479 = vmatpush1.bf16.msra.mxu0 0
    %3480 = vmatprep.subr.bf16.mxu0 0
    %3481 = vmatpush1.bf16.msra.mxu0 0
    %3482 = vmatprep.subr.bf16.mxu0 0
    %3483 = vmatpush1.bf16.msra.mxu0 0
    %3484 = vmatprep.subr.bf16.mxu0 0
    %3485 = vmatpush1.bf16.msra.mxu0 0
    %3486 = vmatprep.subr.bf16.mxu0 0
    %3487 = vmatpush1.bf16.msra.mxu0 0
    %3488 = vmatprep.subr.bf16.mxu0 0
    %3489 = vmatpush1.bf16.msra.mxu0 0
    %3490 = vmatprep.mubr.bf16.mxu0 0
    %3491 = vmatmul.mubr.bf16.gmra.mrb[0].mxu0 %v3416
    %v3492 = vpop.f32.mrb[0].mxu0
    %v3493 = vadd.f32 0.0, %v3492
    %v3494 = vpop.f32.mrb[0].mxu0
    %v3495 = vpop.f32.mrb[0].mxu0
    %v3496 = vpop.f32.mrb[0].mxu0
    %3497 = vdwg.mxu0
    %v3498 = vadd.f32 %v3413, %v3452
    %v3499 = vxor.u32 %v3498, 2147483648
    %v3500 = vmul.f32 %v3499, 1.442695
    %v3501 = vpow.pop %v3500
    %v3502 = vadd.f32 %v3501, 1.0
    %v3503 = vrcp.pop %v3502
    %v3504 = vmul.f32 1.0, %v3503
    %v3505 = vadd.f32 %v3414, %v3454
    %v3506 = vxor.u32 %v3505, 2147483648
    %v3507 = vmul.f32 %v3506, 1.442695
    %v3508 = vpow.pop %v3507
    %v3509 = vadd.f32 %v3508, 1.0
    %v3510 = vrcp.pop %v3509
    %v3511 = vmul.f32 1.0, %v3510
    %v3512 = vadd.f32 %v3493, %v740
    %v3513 = vmul.f32 %v3504, %v3512
    %v3514 = vadd.f32 %v3415, %v3513
    %v3515 = vtanh.pop %v3514
    %v3516 = vsub.f32 %v3409, %v3515
    %v3517 = vmul.f32 %v3511, %v3516
    %v3518 = vadd.f32 %v3515, %v3517
    %s3519 = smul.u32 24, 3
    %s3520 = smul.addr %s3519, 8
    %s3521 = scalar_lea.vmem [#allocation2], %s3520
    %v3522 = vld [vmem:[%s3521] sm:$0xff]
    %v3523 = vld [vmem:[%s3521 + $0x8] sm:$0xff]
    %v3524 = vld [vmem:[%s3521 + $0x10] sm:$0xff]
    %v3525 = vpack.c.bf16 %v3518, %v3518
    %3526 = vmatprep.subr.bf16.mxu0 %v863
    %3527 = vmatpush1.bf16.msra.mxu0 %v862
    %3528 = vmatprep.subr.bf16.mxu0 %v866
    %3529 = vmatpush1.bf16.msra.mxu0 %v865
    %3530 = vmatprep.subr.bf16.mxu0 %v869
    %3531 = vmatpush1.bf16.msra.mxu0 %v868
    %3532 = vmatprep.subr.bf16.mxu0 %v872
    %3533 = vmatpush1.bf16.msra.mxu0 %v871
    %3534 = vmatprep.subr.bf16.mxu0 %v875
    %3535 = vmatpush1.bf16.msra.mxu0 %v874
    %3536 = vmatprep.subr.bf16.mxu0 %v878
    %3537 = vmatpush1.bf16.msra.mxu0 %v877
    %3538 = vmatprep.subr.bf16.mxu0 %v881
    %3539 = vmatpush1.bf16.msra.mxu0 %v880
    %3540 = vmatprep.subr.bf16.mxu0 %v884
    %3541 = vmatpush1.bf16.msra.mxu0 %v883
    %3542 = vmatprep.subr.bf16.mxu0 0
    %3543 = vmatpush1.bf16.msra.mxu0 0
    %3544 = vmatprep.subr.bf16.mxu0 0
    %3545 = vmatpush1.bf16.msra.mxu0 0
    %3546 = vmatprep.subr.bf16.mxu0 0
    %3547 = vmatpush1.bf16.msra.mxu0 0
    %3548 = vmatprep.subr.bf16.mxu0 0
    %3549 = vmatpush1.bf16.msra.mxu0 0
    %3550 = vmatprep.subr.bf16.mxu0 0
    %3551 = vmatpush1.bf16.msra.mxu0 0
    %3552 = vmatprep.subr.bf16.mxu0 0
    %3553 = vmatpush1.bf16.msra.mxu0 0
    %3554 = vmatprep.subr.bf16.mxu0 0
    %3555 = vmatpush1.bf16.msra.mxu0 0
    %3556 = vmatprep.subr.bf16.mxu0 0
    %3557 = vmatpush1.bf16.msra.mxu0 0
    %3558 = vmatprep.mubr.bf16.mxu0 0
    %3559 = vmatmul.mubr.bf16.gmra.mrb[0].mxu0 %v3525
    %v3560 = vpop.f32.mrb[0].mxu0
    %v3561 = vadd.f32 0.0, %v3560
    %v3562 = vpop.f32.mrb[0].mxu0
    %v3563 = vadd.f32 0.0, %v3562
    %v3564 = vpop.f32.mrb[0].mxu0
    %v3565 = vpop.f32.mrb[0].mxu0
    %3566 = vdwg.mxu0
    %3567 = vmatprep.subr.bf16.mxu0 0
    %3568 = vmatpush1.bf16.msra.mxu0 %v864
    %3569 = vmatprep.subr.bf16.mxu0 0
    %3570 = vmatpush1.bf16.msra.mxu0 %v867
    %3571 = vmatprep.subr.bf16.mxu0 0
    %3572 = vmatpush1.bf16.msra.mxu0 %v870
    %3573 = vmatprep.subr.bf16.mxu0 0
    %3574 = vmatpush1.bf16.msra.mxu0 %v873
    %3575 = vmatprep.subr.bf16.mxu0 0
    %3576 = vmatpush1.bf16.msra.mxu0 %v876
    %3577 = vmatprep.subr.bf16.mxu0 0
    %3578 = vmatpush1.bf16.msra.mxu0 %v879
    %3579 = vmatprep.subr.bf16.mxu0 0
    %3580 = vmatpush1.bf16.msra.mxu0 %v882
    %3581 = vmatprep.subr.bf16.mxu0 0
    %3582 = vmatpush1.bf16.msra.mxu0 %v885
    %3583 = vmatprep.subr.bf16.mxu0 0
    %3584 = vmatpush1.bf16.msra.mxu0 0
    %3585 = vmatprep.subr.bf16.mxu0 0
    %3586 = vmatpush1.bf16.msra.mxu0 0
    %3587 = vmatprep.subr.bf16.mxu0 0
    %3588 = vmatpush1.bf16.msra.mxu0 0
    %3589 = vmatprep.subr.bf16.mxu0 0
    %3590 = vmatpush1.bf16.msra.mxu0 0
    %3591 = vmatprep.subr.bf16.mxu0 0
    %3592 = vmatpush1.bf16.msra.mxu0 0
    %3593 = vmatprep.subr.bf16.mxu0 0
    %3594 = vmatpush1.bf16.msra.mxu0 0
    %3595 = vmatprep.subr.bf16.mxu0 0
    %3596 = vmatpush1.bf16.msra.mxu0 0
    %3597 = vmatprep.subr.bf16.mxu0 0
    %3598 = vmatpush1.bf16.msra.mxu0 0
    %3599 = vmatprep.mubr.bf16.mxu0 0
    %3600 = vmatmul.mubr.bf16.gmra.mrb[0].mxu0 %v3525
    %v3601 = vpop.f32.mrb[0].mxu0
    %v3602 = vadd.f32 0.0, %v3601
    %v3603 = vpop.f32.mrb[0].mxu0
    %v3604 = vpop.f32.mrb[0].mxu0
    %v3605 = vpop.f32.mrb[0].mxu0
    %3606 = vdwg.mxu0
    %v3607 = vadd.f32 %v3522, %v3561
    %v3608 = vxor.u32 %v3607, 2147483648
    %v3609 = vmul.f32 %v3608, 1.442695
    %v3610 = vpow.pop %v3609
    %v3611 = vadd.f32 %v3610, 1.0
    %v3612 = vrcp.pop %v3611
    %v3613 = vmul.f32 1.0, %v3612
    %v3614 = vadd.f32 %v3523, %v3563
    %v3615 = vxor.u32 %v3614, 2147483648
    %v3616 = vmul.f32 %v3615, 1.442695
    %v3617 = vpow.pop %v3616
    %v3618 = vadd.f32 %v3617, 1.0
    %v3619 = vrcp.pop %v3618
    %v3620 = vmul.f32 1.0, %v3619
    %v3621 = vadd.f32 %v3602, %v740
    %v3622 = vmul.f32 %v3613, %v3621
    %v3623 = vadd.f32 %v3524, %v3622
    %v3624 = vtanh.pop %v3623
    %v3625 = vsub.f32 %v3518, %v3624
    %v3626 = vmul.f32 %v3620, %v3625
    %v3627 = vadd.f32 %v3624, %v3626
    %s3628 = smul.u32 25, 3
    %s3629 = smul.addr %s3628, 8
    %s3630 = scalar_lea.vmem [#allocation2], %s3629
    %v3631 = vld [vmem:[%s3630] sm:$0xff]
    %v3632 = vld [vmem:[%s3630 + $0x8] sm:$0xff]
    %v3633 = vld [vmem:[%s3630 + $0x10] sm:$0xff]
    %v3634 = vpack.c.bf16 %v3627, %v3627
    %3635 = vmatprep.subr.bf16.mxu0 %v863
    %3636 = vmatpush1.bf16.msra.mxu0 %v862
    %3637 = vmatprep.subr.bf16.mxu0 %v866
    %3638 = vmatpush1.bf16.msra.mxu0 %v865
    %3639 = vmatprep.subr.bf16.mxu0 %v869
    %3640 = vmatpush1.bf16.msra.mxu0 %v868
    %3641 = vmatprep.subr.bf16.mxu0 %v872
    %3642 = vmatpush1.bf16.msra.mxu0 %v871
    %3643 = vmatprep.subr.bf16.mxu0 %v875
    %3644 = vmatpush1.bf16.msra.mxu0 %v874
    %3645 = vmatprep.subr.bf16.mxu0 %v878
    %3646 = vmatpush1.bf16.msra.mxu0 %v877
    %3647 = vmatprep.subr.bf16.mxu0 %v881
    %3648 = vmatpush1.bf16.msra.mxu0 %v880
    %3649 = vmatprep.subr.bf16.mxu0 %v884
    %3650 = vmatpush1.bf16.msra.mxu0 %v883
    %3651 = vmatprep.subr.bf16.mxu0 0
    %3652 = vmatpush1.bf16.msra.mxu0 0
    %3653 = vmatprep.subr.bf16.mxu0 0
    %3654 = vmatpush1.bf16.msra.mxu0 0
    %3655 = vmatprep.subr.bf16.mxu0 0
    %3656 = vmatpush1.bf16.msra.mxu0 0
    %3657 = vmatprep.subr.bf16.mxu0 0
    %3658 = vmatpush1.bf16.msra.mxu0 0
    %3659 = vmatprep.subr.bf16.mxu0 0
    %3660 = vmatpush1.bf16.msra.mxu0 0
    %3661 = vmatprep.subr.bf16.mxu0 0
    %3662 = vmatpush1.bf16.msra.mxu0 0
    %3663 = vmatprep.subr.bf16.mxu0 0
    %3664 = vmatpush1.bf16.msra.mxu0 0
    %3665 = vmatprep.subr.bf16.mxu0 0
    %3666 = vmatpush1.bf16.msra.mxu0 0
    %3667 = vmatprep.mubr.bf16.mxu0 0
    %3668 = vmatmul.mubr.bf16.gmra.mrb[0].mxu0 %v3634
    %v3669 = vpop.f32.mrb[0].mxu0
    %v3670 = vadd.f32 0.0, %v3669
    %v3671 = vpop.f32.mrb[0].mxu0
    %v3672 = vadd.f32 0.0, %v3671
    %v3673 = vpop.f32.mrb[0].mxu0
    %v3674 = vpop.f32.mrb[0].mxu0
    %3675 = vdwg.mxu0
    %3676 = vmatprep.subr.bf16.mxu0 0
    %3677 = vmatpush1.bf16.msra.mxu0 %v864
    %3678 = vmatprep.subr.bf16.mxu0 0
    %3679 = vmatpush1.bf16.msra.mxu0 %v867
    %3680 = vmatprep.subr.bf16.mxu0 0
    %3681 = vmatpush1.bf16.msra.mxu0 %v870
    %3682 = vmatprep.subr.bf16.mxu0 0
    %3683 = vmatpush1.bf16.msra.mxu0 %v873
    %3684 = vmatprep.subr.bf16.mxu0 0
    %3685 = vmatpush1.bf16.msra.mxu0 %v876
    %3686 = vmatprep.subr.bf16.mxu0 0
    %3687 = vmatpush1.bf16.msra.mxu0 %v879
    %3688 = vmatprep.subr.bf16.mxu0 0
    %3689 = vmatpush1.bf16.msra.mxu0 %v882
    %3690 = vmatprep.subr.bf16.mxu0 0
    %3691 = vmatpush1.bf16.msra.mxu0 %v885
    %3692 = vmatprep.subr.bf16.mxu0 0
    %3693 = vmatpush1.bf16.msra.mxu0 0
    %3694 = vmatprep.subr.bf16.mxu0 0
    %3695 = vmatpush1.bf16.msra.mxu0 0
    %3696 = vmatprep.subr.bf16.mxu0 0
    %3697 = vmatpush1.bf16.msra.mxu0 0
    %3698 = vmatprep.subr.bf16.mxu0 0
    %3699 = vmatpush1.bf16.msra.mxu0 0
    %3700 = vmatprep.subr.bf16.mxu0 0
    %3701 = vmatpush1.bf16.msra.mxu0 0
    %3702 = vmatprep.subr.bf16.mxu0 0
    %3703 = vmatpush1.bf16.msra.mxu0 0
    %3704 = vmatprep.subr.bf16.mxu0 0
    %3705 = vmatpush1.bf16.msra.mxu0 0
    %3706 = vmatprep.subr.bf16.mxu0 0
    %3707 = vmatpush1.bf16.msra.mxu0 0
    %3708 = vmatprep.mubr.bf16.mxu0 0
    %3709 = vmatmul.mubr.bf16.gmra.mrb[0].mxu0 %v3634
    %v3710 = vpop.f32.mrb[0].mxu0
    %v3711 = vadd.f32 0.0, %v3710
    %v3712 = vpop.f32.mrb[0].mxu0
    %v3713 = vpop.f32.mrb[0].mxu0
    %v3714 = vpop.f32.mrb[0].mxu0
    %3715 = vdwg.mxu0
    %v3716 = vadd.f32 %v3631, %v3670
    %v3717 = vxor.u32 %v3716, 2147483648
    %v3718 = vmul.f32 %v3717, 1.442695
    %v3719 = vpow.pop %v3718
    %v3720 = vadd.f32 %v3719, 1.0
    %v3721 = vrcp.pop %v3720
    %v3722 = vmul.f32 1.0, %v3721
    %v3723 = vadd.f32 %v3632, %v3672
    %v3724 = vxor.u32 %v3723, 2147483648
    %v3725 = vmul.f32 %v3724, 1.442695
    %v3726 = vpow.pop %v3725
    %v3727 = vadd.f32 %v3726, 1.0
    %v3728 = vrcp.pop %v3727
    %v3729 = vmul.f32 1.0, %v3728
    %v3730 = vadd.f32 %v3711, %v740
    %v3731 = vmul.f32 %v3722, %v3730
    %v3732 = vadd.f32 %v3633, %v3731
    %v3733 = vtanh.pop %v3732
    %v3734 = vsub.f32 %v3627, %v3733
    %v3735 = vmul.f32 %v3729, %v3734
    %v3736 = vadd.f32 %v3733, %v3735
    %s3737 = smul.u32 26, 3
    %s3738 = smul.addr %s3737, 8
    %s3739 = scalar_lea.vmem [#allocation2], %s3738
    %v3740 = vld [vmem:[%s3739] sm:$0xff]
    %v3741 = vld [vmem:[%s3739 + $0x8] sm:$0xff]
    %v3742 = vld [vmem:[%s3739 + $0x10] sm:$0xff]
    %v3743 = vpack.c.bf16 %v3736, %v3736
    %3744 = vmatprep.subr.bf16.mxu0 %v863
    %3745 = vmatpush1.bf16.msra.mxu0 %v862
    %3746 = vmatprep.subr.bf16.mxu0 %v866
    %3747 = vmatpush1.bf16.msra.mxu0 %v865
    %3748 = vmatprep.subr.bf16.mxu0 %v869
    %3749 = vmatpush1.bf16.msra.mxu0 %v868
    %3750 = vmatprep.subr.bf16.mxu0 %v872
    %3751 = vmatpush1.bf16.msra.mxu0 %v871
    %3752 = vmatprep.subr.bf16.mxu0 %v875
    %3753 = vmatpush1.bf16.msra.mxu0 %v874
    %3754 = vmatprep.subr.bf16.mxu0 %v878
    %3755 = vmatpush1.bf16.msra.mxu0 %v877
    %3756 = vmatprep.subr.bf16.mxu0 %v881
    %3757 = vmatpush1.bf16.msra.mxu0 %v880
    %3758 = vmatprep.subr.bf16.mxu0 %v884
    %3759 = vmatpush1.bf16.msra.mxu0 %v883
    %3760 = vmatprep.subr.bf16.mxu0 0
    %3761 = vmatpush1.bf16.msra.mxu0 0
    %3762 = vmatprep.subr.bf16.mxu0 0
    %3763 = vmatpush1.bf16.msra.mxu0 0
    %3764 = vmatprep.subr.bf16.mxu0 0
    %3765 = vmatpush1.bf16.msra.mxu0 0
    %3766 = vmatprep.subr.bf16.mxu0 0
    %3767 = vmatpush1.bf16.msra.mxu0 0
    %3768 = vmatprep.subr.bf16.mxu0 0
    %3769 = vmatpush1.bf16.msra.mxu0 0
    %3770 = vmatprep.subr.bf16.mxu0 0
    %3771 = vmatpush1.bf16.msra.mxu0 0
    %3772 = vmatprep.subr.bf16.mxu0 0
    %3773 = vmatpush1.bf16.msra.mxu0 0
    %3774 = vmatprep.subr.bf16.mxu0 0
    %3775 = vmatpush1.bf16.msra.mxu0 0
    %3776 = vmatprep.mubr.bf16.mxu0 0
    %3777 = vmatmul.mubr.bf16.gmra.mrb[0].mxu0 %v3743
    %v3778 = vpop.f32.mrb[0].mxu0
    %v3779 = vadd.f32 0.0, %v3778
    %v3780 = vpop.f32.mrb[0].mxu0
    %v3781 = vadd.f32 0.0, %v3780
    %v3782 = vpop.f32.mrb[0].mxu0
    %v3783 = vpop.f32.mrb[0].mxu0
    %3784 = vdwg.mxu0
    %3785 = vmatprep.subr.bf16.mxu0 0
    %3786 = vmatpush1.bf16.msra.mxu0 %v864
    %3787 = vmatprep.subr.bf16.mxu0 0
    %3788 = vmatpush1.bf16.msra.mxu0 %v867
    %3789 = vmatprep.subr.bf16.mxu0 0
    %3790 = vmatpush1.bf16.msra.mxu0 %v870
    %3791 = vmatprep.subr.bf16.mxu0 0
    %3792 = vmatpush1.bf16.msra.mxu0 %v873
    %3793 = vmatprep.subr.bf16.mxu0 0
    %3794 = vmatpush1.bf16.msra.mxu0 %v876
    %3795 = vmatprep.subr.bf16.mxu0 0
    %3796 = vmatpush1.bf16.msra.mxu0 %v879
    %3797 = vmatprep.subr.bf16.mxu0 0
    %3798 = vmatpush1.bf16.msra.mxu0 %v882
    %3799 = vmatprep.subr.bf16.mxu0 0
    %3800 = vmatpush1.bf16.msra.mxu0 %v885
    %3801 = vmatprep.subr.bf16.mxu0 0
    %3802 = vmatpush1.bf16.msra.mxu0 0
    %3803 = vmatprep.subr.bf16.mxu0 0
    %3804 = vmatpush1.bf16.msra.mxu0 0
    %3805 = vmatprep.subr.bf16.mxu0 0
    %3806 = vmatpush1.bf16.msra.mxu0 0
    %3807 = vmatprep.subr.bf16.mxu0 0
    %3808 = vmatpush1.bf16.msra.mxu0 0
    %3809 = vmatprep.subr.bf16.mxu0 0
    %3810 = vmatpush1.bf16.msra.mxu0 0
    %3811 = vmatprep.subr.bf16.mxu0 0
    %3812 = vmatpush1.bf16.msra.mxu0 0
    %3813 = vmatprep.subr.bf16.mxu0 0
    %3814 = vmatpush1.bf16.msra.mxu0 0
    %3815 = vmatprep.subr.bf16.mxu0 0
    %3816 = vmatpush1.bf16.msra.mxu0 0
    %3817 = vmatprep.mubr.bf16.mxu0 0
    %3818 = vmatmul.mubr.bf16.gmra.mrb[0].mxu0 %v3743
    %v3819 = vpop.f32.mrb[0].mxu0
    %v3820 = vadd.f32 0.0, %v3819
    %v3821 = vpop.f32.mrb[0].mxu0
    %v3822 = vpop.f32.mrb[0].mxu0
    %v3823 = vpop.f32.mrb[0].mxu0
    %3824 = vdwg.mxu0
    %v3825 = vadd.f32 %v3740, %v3779
    %v3826 = vxor.u32 %v3825, 2147483648
    %v3827 = vmul.f32 %v3826, 1.442695
    %v3828 = vpow.pop %v3827
    %v3829 = vadd.f32 %v3828, 1.0
    %v3830 = vrcp.pop %v3829
    %v3831 = vmul.f32 1.0, %v3830
    %v3832 = vadd.f32 %v3741, %v3781
    %v3833 = vxor.u32 %v3832, 2147483648
    %v3834 = vmul.f32 %v3833, 1.442695
    %v3835 = vpow.pop %v3834
    %v3836 = vadd.f32 %v3835, 1.0
    %v3837 = vrcp.pop %v3836
    %v3838 = vmul.f32 1.0, %v3837
    %v3839 = vadd.f32 %v3820, %v740
    %v3840 = vmul.f32 %v3831, %v3839
    %v3841 = vadd.f32 %v3742, %v3840
    %v3842 = vtanh.pop %v3841
    %v3843 = vsub.f32 %v3736, %v3842
    %v3844 = vmul.f32 %v3838, %v3843
    %v3845 = vadd.f32 %v3842, %v3844
    %s3846 = smul.u32 27, 3
    %s3847 = smul.addr %s3846, 8
    %s3848 = scalar_lea.vmem [#allocation2], %s3847
    %v3849 = vld [vmem:[%s3848] sm:$0xff]
    %v3850 = vld [vmem:[%s3848 + $0x8] sm:$0xff]
    %v3851 = vld [vmem:[%s3848 + $0x10] sm:$0xff]
    %v3852 = vpack.c.bf16 %v3845, %v3845
    %3853 = vmatprep.subr.bf16.mxu0 %v863
    %3854 = vmatpush1.bf16.msra.mxu0 %v862
    %3855 = vmatprep.subr.bf16.mxu0 %v866
    %3856 = vmatpush1.bf16.msra.mxu0 %v865
    %3857 = vmatprep.subr.bf16.mxu0 %v869
    %3858 = vmatpush1.bf16.msra.mxu0 %v868
    %3859 = vmatprep.subr.bf16.mxu0 %v872
    %3860 = vmatpush1.bf16.msra.mxu0 %v871
    %3861 = vmatprep.subr.bf16.mxu0 %v875
    %3862 = vmatpush1.bf16.msra.mxu0 %v874
    %3863 = vmatprep.subr.bf16.mxu0 %v878
    %3864 = vmatpush1.bf16.msra.mxu0 %v877
    %3865 = vmatprep.subr.bf16.mxu0 %v881
    %3866 = vmatpush1.bf16.msra.mxu0 %v880
    %3867 = vmatprep.subr.bf16.mxu0 %v884
    %3868 = vmatpush1.bf16.msra.mxu0 %v883
    %3869 = vmatprep.subr.bf16.mxu0 0
    %3870 = vmatpush1.bf16.msra.mxu0 0
    %3871 = vmatprep.subr.bf16.mxu0 0
    %3872 = vmatpush1.bf16.msra.mxu0 0
    %3873 = vmatprep.subr.bf16.mxu0 0
    %3874 = vmatpush1.bf16.msra.mxu0 0
    %3875 = vmatprep.subr.bf16.mxu0 0
    %3876 = vmatpush1.bf16.msra.mxu0 0
    %3877 = vmatprep.subr.bf16.mxu0 0
    %3878 = vmatpush1.bf16.msra.mxu0 0
    %3879 = vmatprep.subr.bf16.mxu0 0
    %3880 = vmatpush1.bf16.msra.mxu0 0
    %3881 = vmatprep.subr.bf16.mxu0 0
    %3882 = vmatpush1.bf16.msra.mxu0 0
    %3883 = vmatprep.subr.bf16.mxu0 0
    %3884 = vmatpush1.bf16.msra.mxu0 0
    %3885 = vmatprep.mubr.bf16.mxu0 0
    %3886 = vmatmul.mubr.bf16.gmra.mrb[0].mxu0 %v3852
    %v3887 = vpop.f32.mrb[0].mxu0
    %v3888 = vadd.f32 0.0, %v3887
    %v3889 = vpop.f32.mrb[0].mxu0
    %v3890 = vadd.f32 0.0, %v3889
    %v3891 = vpop.f32.mrb[0].mxu0
    %v3892 = vpop.f32.mrb[0].mxu0
    %3893 = vdwg.mxu0
    %3894 = vmatprep.subr.bf16.mxu0 0
    %3895 = vmatpush1.bf16.msra.mxu0 %v864
    %3896 = vmatprep.subr.bf16.mxu0 0
    %3897 = vmatpush1.bf16.msra.mxu0 %v867
    %3898 = vmatprep.subr.bf16.mxu0 0
    %3899 = vmatpush1.bf16.msra.mxu0 %v870
    %3900 = vmatprep.subr.bf16.mxu0 0
    %3901 = vmatpush1.bf16.msra.mxu0 %v873
    %3902 = vmatprep.subr.bf16.mxu0 0
    %3903 = vmatpush1.bf16.msra.mxu0 %v876
    %3904 = vmatprep.subr.bf16.mxu0 0
    %3905 = vmatpush1.bf16.msra.mxu0 %v879
    %3906 = vmatprep.subr.bf16.mxu0 0
    %3907 = vmatpush1.bf16.msra.mxu0 %v882
    %3908 = vmatprep.subr.bf16.mxu0 0
    %3909 = vmatpush1.bf16.msra.mxu0 %v885
    %3910 = vmatprep.subr.bf16.mxu0 0
    %3911 = vmatpush1.bf16.msra.mxu0 0
    %3912 = vmatprep.subr.bf16.mxu0 0
    %3913 = vmatpush1.bf16.msra.mxu0 0
    %3914 = vmatprep.subr.bf16.mxu0 0
    %3915 = vmatpush1.bf16.msra.mxu0 0
    %3916 = vmatprep.subr.bf16.mxu0 0
    %3917 = vmatpush1.bf16.msra.mxu0 0
    %3918 = vmatprep.subr.bf16.mxu0 0
    %3919 = vmatpush1.bf16.msra.mxu0 0
    %3920 = vmatprep.subr.bf16.mxu0 0
    %3921 = vmatpush1.bf16.msra.mxu0 0
    %3922 = vmatprep.subr.bf16.mxu0 0
    %3923 = vmatpush1.bf16.msra.mxu0 0
    %3924 = vmatprep.subr.bf16.mxu0 0
    %3925 = vmatpush1.bf16.msra.mxu0 0
    %3926 = vmatprep.mubr.bf16.mxu0 0
    %3927 = vmatmul.mubr.bf16.gmra.mrb[0].mxu0 %v3852
    %v3928 = vpop.f32.mrb[0].mxu0
    %v3929 = vadd.f32 0.0, %v3928
    %v3930 = vpop.f32.mrb[0].mxu0
    %v3931 = vpop.f32.mrb[0].mxu0
    %v3932 = vpop.f32.mrb[0].mxu0
    %3933 = vdwg.mxu0
    %v3934 = vadd.f32 %v3849, %v3888
    %v3935 = vxor.u32 %v3934, 2147483648
    %v3936 = vmul.f32 %v3935, 1.442695
    %v3937 = vpow.pop %v3936
    %v3938 = vadd.f32 %v3937, 1.0
    %v3939 = vrcp.pop %v3938
    %v3940 = vmul.f32 1.0, %v3939
    %v3941 = vadd.f32 %v3850, %v3890
    %v3942 = vxor.u32 %v3941, 2147483648
    %v3943 = vmul.f32 %v3942, 1.442695
    %v3944 = vpow.pop %v3943
    %v3945 = vadd.f32 %v3944, 1.0
    %v3946 = vrcp.pop %v3945
    %v3947 = vmul.f32 1.0, %v3946
    %v3948 = vadd.f32 %v3929, %v740
    %v3949 = vmul.f32 %v3940, %v3948
    %v3950 = vadd.f32 %v3851, %v3949
    %v3951 = vtanh.pop %v3950
    %v3952 = vsub.f32 %v3845, %v3951
    %v3953 = vmul.f32 %v3947, %v3952
    %v3954 = vadd.f32 %v3951, %v3953
    %3955 = vst [vmem:[#allocation3] sm:$0xff] %v3954
    // Predicated region
    $region42: #{tpu_custom_call.1} parent=1 // pred_check
      %p3956 = pneg %p56
    $region43: #{tpu_custom_call.1} parent=1 // pred_check_branch
      %3958 = sbr.rel (%p3956) target = $region45
    $region44: #{tpu_custom_call.1} parent=1 // pred_region
      %v3959 = vld [vmem:[#allocation7] sm:$0xff]
      %v3960 = vld [vmem:[#allocation7 + $0x8] sm:$0xff]
      %v3961 = vld [vmem:[#allocation7 + $0x10] sm:$0xff]
      %v3962 = vld [vmem:[#allocation7 + $0x18] sm:$0xff]
      %v3963 = vld [vmem:[#allocation7 + $0x20] sm:$0xff]
      %v3964 = vld [vmem:[#allocation7 + $0x28] sm:$0xff]
      %v3965 = vld [vmem:[#allocation7 + $0x30] sm:$0xff]
      %v3966 = vld [vmem:[#allocation7 + $0x38] sm:$0xff]
      %v3967 = vld [vmem:[#allocation7 + $0x40] sm:$0xff]
      %v3968 = vld [vmem:[#allocation7 + $0x48] sm:$0xff]
      %v3969 = vld [vmem:[#allocation7 + $0x50] sm:$0xff]
      %v3970 = vld [vmem:[#allocation7 + $0x58] sm:$0xff]
      %v3971 = vld [vmem:[#allocation7 + $0x60] sm:$0xff]
      %v3972 = vld [vmem:[#allocation7 + $0x68] sm:$0xff]
      %v3973 = vld [vmem:[#allocation7 + $0x70] sm:$0xff]
      %v3974 = vld [vmem:[#allocation7 + $0x78] sm:$0xff]
      %v3975 = vld [vmem:[%s6] sm:$0x1]
      %v3977 = vlaneseq
      %v3978 = vshrl.u32 %v3977, 7
      %v3979 = vsub.s32 0, %v3978
      %v3980 = vrot.slane %v3975, %v3979
      %3982 = vmatprep.subr.mxu0 0.0
      %3983 = vmatpush1.msra.mxu0 %v3959
      %3984 = vmatprep.subr.mxu0 0.0
      %3985 = vmatpush1.msra.mxu0 %v3960
      %3986 = vmatprep.subr.mxu0 0.0
      %3987 = vmatpush1.msra.mxu0 %v3961
      %3988 = vmatprep.subr.mxu0 0.0
      %3989 = vmatpush1.msra.mxu0 %v3962
      %3990 = vmatprep.subr.mxu0 0.0
      %3991 = vmatpush1.msra.mxu0 %v3963
      %3992 = vmatprep.subr.mxu0 0.0
      %3993 = vmatpush1.msra.mxu0 %v3964
      %3994 = vmatprep.subr.mxu0 0.0
      %3995 = vmatpush1.msra.mxu0 %v3965
      %3996 = vmatprep.subr.mxu0 0.0
      %3997 = vmatpush1.msra.mxu0 %v3966
      %3998 = vmatprep.subr.mxu0 0.0
      %3999 = vmatpush1.msra.mxu0 %v3967
      %4000 = vmatprep.subr.mxu0 0.0
      %4001 = vmatpush1.msra.mxu0 %v3968
      %4002 = vmatprep.subr.mxu0 0.0
      %4003 = vmatpush1.msra.mxu0 %v3969
      %4004 = vmatprep.subr.mxu0 0.0
      %4005 = vmatpush1.msra.mxu0 %v3970
      %4006 = vmatprep.subr.mxu0 0.0
      %4007 = vmatpush1.msra.mxu0 %v3971
      %4008 = vmatprep.subr.mxu0 0.0
      %4009 = vmatpush1.msra.mxu0 %v3972
      %4010 = vmatprep.subr.mxu0 0.0
      %4011 = vmatpush1.msra.mxu0 %v3973
      %4012 = vmatprep.subr.mxu0 0.0
      %4013 = vmatpush1.msra.mxu0 %v3974
      %4014 = vmatprep.subr.mxu0 0.0
      %4015 = vmatpush1.msra.mxu0 0.0
      %4016 = vmatprep.subr.mxu0 0.0
      %4017 = vmatpush1.msra.mxu0 0.0
      %4018 = vmatprep.subr.mxu0 0.0
      %4019 = vmatpush1.msra.mxu0 0.0
      %4020 = vmatprep.subr.mxu0 0.0
      %4021 = vmatpush1.msra.mxu0 0.0
      %4022 = vmatprep.subr.mxu0 0.0
      %4023 = vmatpush1.msra.mxu0 0.0
      %4024 = vmatprep.subr.mxu0 0.0
      %4025 = vmatpush1.msra.mxu0 0.0
      %4026 = vmatprep.subr.mxu0 0.0
      %4027 = vmatpush1.msra.mxu0 0.0
      %4028 = vmatprep.subr.mxu0 0.0
      %4029 = vmatpush1.msra.mxu0 0.0
      %4030 = vmatprep.subr.mxu0 0.0
      %4031 = vmatpush1.msra.mxu0 0.0
      %4032 = vmatprep.subr.mxu0 0.0
      %4033 = vmatpush1.msra.mxu0 0.0
      %4034 = vmatprep.subr.mxu0 0.0
      %4035 = vmatpush1.msra.mxu0 0.0
      %4036 = vmatprep.subr.mxu0 0.0
      %4037 = vmatpush1.msra.mxu0 0.0
      %4038 = vmatprep.subr.mxu0 0.0
      %4039 = vmatpush1.msra.mxu0 0.0
      %4040 = vmatprep.subr.mxu0 0.0
      %4041 = vmatpush1.msra.mxu0 0.0
      %4042 = vmatprep.subr.mxu0 0.0
      %4043 = vmatpush1.msra.mxu0 0.0
      %4044 = vmatprep.subr.mxu0 0.0
      %4045 = vmatpush1.msra.mxu0 0.0
      %4046 = vmatprep.mubr.f32.mxu0 0.0
      %4047 = vmatmul.mubr.f32.gmra.mrb[0].mxu0 %v3954
      %v4048 = vpop.f32.mrb[0].mxu0
      %v4049 = vadd.f32 %v3980, %v4048
      %v4050 = vpop.f32.mrb[0].mxu0
      %4051 = vdwg.mxu0
      %4052 = vst [vmem:[#allocation9] sm:$0xff] %v4049
    $region45: #{tpu_custom_call.1} parent=1 // pred_fallthru
      _
    // Predicated region
    $region46: #{tpu_custom_call.1} parent=1 // pred_check
      _
    $region47: #{tpu_custom_call.1} parent=1 // pred_check_branch
      %4054 = sbr.rel (0) target = $region49
    $region48: #{tpu_custom_call.1} parent=1 // pred_region
      %s4056 = ssub.s32 128, 128
      %4057 = vsyncadd [#allocation6], %s4056
      %s4059 = sshll.u32 [#allocation9], 4
      %s4060 = int_to_ptr.vmem [resolvable:$true] %s4059
      %4062 = dma.vmem_to_hbm [thread:$0]  %s4060, 128, %s7, [#allocation6]
    $region49: #{tpu_custom_call.1} parent=1 // pred_fallthru
      _
    // Predicated region
    $region50: #{tpu_custom_call.1} parent=1 // pred_check
      _
    $region51: #{tpu_custom_call.1} parent=1 // pred_check_branch
      %4064 = sbr.rel (0) target = $region53
    $region52: #{tpu_custom_call.1} parent=1 // pred_region
      %4065 = dma.done [#allocation6], 128
    $region53: #{tpu_custom_call.1} parent=1 // pred_fallthru
      _
    %4066 = vsyncpa [#allocation5], 1
    %4067 = vsyncpa [#allocation8], 1
    %4068 = vsyncpa [#allocation6], 1

</llo_original>
